<compile_context>
chip_gen: v7x
topology: tpu7x:2x2x1
jax: 0.10.0
libtpu: 0.0.40
codegen_flags: <defaults>
</compile_context>

<pallas_src>
import math
import jax
import jax.numpy as jnp
from jax.experimental import pallas as pl
from jax.experimental.pallas import tpu as pltpu

HIDDEN = 32
NUM_HEADS = 4
D_FF = 4 * HIDDEN
LN_EPS = 1e-12
HEAD_DIM = HIDDEN // NUM_HEADS


# ----------------------- shared math helpers (pure jnp) -----------------------
def _layer_norm(x, g, b, eps):
    mu = jnp.mean(x, axis=-1, keepdims=True)
    var = jnp.mean(jnp.square(x - mu), axis=-1, keepdims=True)
    return (x - mu) * jax.lax.rsqrt(var + eps) * g + b


def _gelu(x):
    # exact (erf) GELU to match torch.nn.GELU() default
    return 0.5 * x * (1.0 + jax.lax.erf(x * (1.0 / math.sqrt(2.0))))


# --------------------------------- kernel -------------------------------------
def _attn_core(q, k, v, wo, bo, num_heads):
    """MHA core on already-projected q:(bb,T,C), k/v:(bb,S,C).

    Heads: unrolled loop over lane slices; each head's (bb*T, dh) context is
    contracted against wo[h*dh:(h+1)*dh, :] and accumulated (no lane concat).
    Returns flattened (bb*T, C).
    """
    bb, T, C = q.shape
    dh = C // num_heads
    scale = 1.0 / math.sqrt(dh)
    out = jnp.zeros((bb * T, C), jnp.float32)
    for h in range(num_heads):
        sl = slice(h * dh, (h + 1) * dh)
        qh = q[:, :, sl]                       # (bb, T, dh)
        kh = k[:, :, sl]                       # (bb, S, dh)
        vh = v[:, :, sl]                       # (bb, S, dh)
        sc = jnp.einsum('btd,bsd->bts', qh, kh,
                        preferred_element_type=jnp.float32) * scale
        sc = sc - jnp.max(sc, axis=-1, keepdims=True)
        p = jnp.exp(sc)
        p = p * pl.reciprocal(jnp.sum(p, axis=-1, keepdims=True), approx=True)
        ctx = jnp.einsum('bts,bsd->btd', p, vh,
                         preferred_element_type=jnp.float32)      # (bb, T, dh)
        out = out + jnp.dot(ctx.reshape(bb * T, dh), wo[sl, :],
                            preferred_element_type=jnp.float32)
    return out + bo


def decoder_layer_kernel(dst_ref, src_ref,
                         wqkv_s_ref, bqkv_s_ref, wo_s_ref, bo_s_ref,
                         wq_x_ref, bq_x_ref, wkv_x_ref, bkv_x_ref,
                         wo_x_ref, bo_x_ref,
                         lnp_ref, w1_ref, b1_ref, w2_ref, b2_ref,
                         out_ref):
    bb, T, C = dst_ref.shape
    S = src_ref.shape[1]

    x = dst_ref[...].astype(jnp.float32).reshape(bb * T, C)   # decoder stream
    s = src_ref[...].astype(jnp.float32).reshape(bb * S, C)   # encoder memory

    def L(i):   # (1, C) layer-norm param row
        return lnp_ref[pl.ds(i, 1), :]

    # --- self-attention sub-block (post-LN); fused (C, 3C) QKV projection ---
    qkv = jnp.dot(x, wqkv_s_ref[...],
                  preferred_element_type=jnp.float32) + bqkv_s_ref[...]
    q = qkv[:, 0 * C:1 * C].reshape(bb, T, C)
    k = qkv[:, 1 * C:2 * C].reshape(bb, T, C)
    v = qkv[:, 2 * C:3 * C].reshape(bb, T, C)
    sa = _attn_core(q, k, v, wo_s_ref[...], bo_s_ref[...], NUM_HEADS)
    y = _layer_norm(x + sa, L(0), L(1), LN_EPS)

    # --- encoder-decoder cross-attention: Q from y, fused (C, 2C) K/V of src ---
    qx = (jnp.dot(y, wq_x_ref[...], preferred_element_type=jnp.float32)
          + bq_x_ref[...]).reshape(bb, T, C)
    kv = jnp.dot(s, wkv_x_ref[...],
                 preferred_element_type=jnp.float32) + bkv_x_ref[...]
    kx = kv[:, 0 * C:1 * C].reshape(bb, S, C)
    vx = kv[:, 1 * C:2 * C].reshape(bb, S, C)
    ca = _attn_core(qx, kx, vx, wo_x_ref[...], bo_x_ref[...], NUM_HEADS)
    y = _layer_norm(y + ca, L(2), L(3), LN_EPS)

    # --- position-wise feed-forward ---
    h = _gelu(jnp.dot(y, w1_ref[...],
                      preferred_element_type=jnp.float32) + b1_ref[...])
    ff = jnp.dot(h, w2_ref[...],
                 preferred_element_type=jnp.float32) + b2_ref[...]
    y = _layer_norm(y + ff, L(4), L(5), LN_EPS)

    out_ref[...] = y.reshape(bb, T, C).astype(out_ref.dtype)


# --------------------------------- wrapper ------------------------------------
def _default_num_batch_blocks(B):
    """1 grid step on single-TC chips (v5e/v6e); 2 parallel blocks on v7x."""
    try:
        kind = jax.devices()[0].device_kind.lower()
    except Exception:
        kind = ""
    two_tc = ("v7" in kind) or ("7x" in kind)
    return 2 if (two_tc and B >= 2 and B % 2 == 0) else 1


def transformer_decoder_layer(src, dst, packed, *, num_batch_blocks=None):
    """src: [B, S, C] encoder output; dst: [B, T, C] decoder input."""
    (wqkv_s, bqkv_s, wo_s, bo_s, wq_x, bq_x, wkv_x, bkv_x, wo_x, bo_x,
     lnp, w1, b1, w2, b2) = packed
    B, T, C = dst.shape
    S = src.shape[1]

    nb = num_batch_blocks if num_batch_blocks is not None else _default_num_batch_blocks(B)
    assert B % nb == 0
    bb = B // nb

    def const2d(a):   # whole small weight resident every grid step
        return pl.BlockSpec(a.shape, lambda i: (0, 0))

    weights = [wqkv_s, bqkv_s, wo_s, bo_s, wq_x, bq_x, wkv_x, bkv_x,
               wo_x, bo_x, lnp, w1, b1, w2, b2]

    return pl.pallas_call(
        decoder_layer_kernel,
        out_shape=jax.ShapeDtypeStruct((B, T, C), jnp.float32),
        grid=(nb,),
        in_specs=[pl.BlockSpec((bb, T, C), lambda i: (i, 0, 0)),   # dst block
                  pl.BlockSpec((bb, S, C), lambda i: (i, 0, 0))]   # src block
                 + [const2d(w) for w in weights],
        out_specs=pl.BlockSpec((bb, T, C), lambda i: (i, 0, 0)),
        compiler_params=pltpu.CompilerParams(
            dimension_semantics=("parallel",)),
    )(dst, src, *weights)


# ------------------------ params (raw + kernel packing) ------------------------
def make_params(key, hidden, d_ff):
    ks = jax.random.split(key, 23)

    def nrm(k, shape, scale=0.02):
        return scale * jax.random.normal(k, shape, jnp.float32)

    p = {}
    # self-attention projections
    p['wq_s'], p['wk_s'], p['wv_s'], p['wo_s'] = (
        nrm(ks[i], (hidden, hidden)) for i in range(4))
    p['bq_s'], p['bk_s'], p['bv_s'], p['bo_s'] = (
        nrm(ks[4 + i], (hidden,)) for i in range(4))
    # cross-attention projections
    p['wq_x'], p['wk_x'], p['wv_x'], p['wo_x'] = (
        nrm(ks[8 + i], (hidden, hidden)) for i in range(4))
    p['bq_x'], p['bk_x'], p['bv_x'], p['bo_x'] = (
        nrm(ks[12 + i], (hidden,)) for i in range(4))
    # layer norms (gamma, beta) x 3
    p['g1'] = 1.0 + 0.1 * jax.random.normal(ks[16], (hidden,), jnp.float32)
    p['bn1'] = 0.1 * jax.random.normal(ks[17], (hidden,), jnp.float32)
    p['g2'] = 1.0 + 0.1 * jax.random.normal(ks[18], (hidden,), jnp.float32)
    p['bn2'] = 0.1 * jax.random.normal(ks[19], (hidden,), jnp.float32)
    p['g3'] = 1.0 + 0.1 * jax.random.normal(ks[20], (hidden,), jnp.float32)
    p['bn3'] = 0.1 * jax.random.normal(ks[21], (hidden,), jnp.float32)
    # FFN
    k1, k2, k3, k4 = jax.random.split(ks[22], 4)
    p['w1'] = nrm(k1, (hidden, d_ff))
    p['b1'] = nrm(k2, (d_ff,))
    p['w2'] = nrm(k3, (d_ff, hidden))
    p['b2'] = nrm(k4, (hidden,))
    return p


def pack_params(p):
    """Fuse QKV / KV weights and 2-D-ify biases for the kernel."""
    wqkv_s = jnp.concatenate([p['wq_s'], p['wk_s'], p['wv_s']], axis=1)   # (C, 3C)
    bqkv_s = jnp.concatenate([p['bq_s'], p['bk_s'], p['bv_s']])[None, :]  # (1, 3C)
    wkv_x = jnp.concatenate([p['wk_x'], p['wv_x']], axis=1)               # (C, 2C)
    bkv_x = jnp.concatenate([p['bk_x'], p['bv_x']])[None, :]              # (1, 2C)
    lnp = jnp.stack([p['g1'], p['bn1'], p['g2'], p['bn2'], p['g3'], p['bn3']])
    return (wqkv_s, bqkv_s,
            p['wo_s'], p['bo_s'][None, :],
            p['wq_x'], p['bq_x'][None, :],
            wkv_x, bkv_x,
            p['wo_x'], p['bo_x'][None, :],
            lnp,
            p['w1'], p['b1'][None, :],
            p['w2'], p['b2'][None, :])


# ------------------------- pure-JAX reference (check) --------------------------
def reference(src, dst, p):
    def mha(q_in, kv_in, wq, bq, wk, bk, wv, bv, wo, bo):
        C = q_in.shape[-1]
        dh = C // NUM_HEADS
        scale = 1.0 / math.sqrt(dh)
        q = q_in @ wq + bq
        k = kv_in @ wk + bk
        v = kv_in @ wv + bv
        outs = []
        for h in range(NUM_HEADS):
            sl = slice(h * dh, (h + 1) * dh)
            sc = (q[:, sl] @ k[:, sl].T) * scale
            sc = sc - sc.max(-1, keepdims=True)
            pr = jnp.exp(sc)
            pr = pr / pr.sum(-1, keepdims=True)
            outs.append(pr @ v[:, sl])
        return jnp.concatenate(outs, -1) @ wo + bo

    def one(x, s):
        sa = mha(x, x, p['wq_s'], p['bq_s'], p['wk_s'], p['bk_s'],
                 p['wv_s'], p['bv_s'], p['wo_s'], p['bo_s'])
        y = _layer_norm(x + sa, p['g1'], p['bn1'], LN_EPS)
        ca = mha(y, s, p['wq_x'], p['bq_x'], p['wk_x'], p['bk_x'],
                 p['wv_x'], p['bv_x'], p['wo_x'], p['bo_x'])
        y = _layer_norm(y + ca, p['g2'], p['bn2'], LN_EPS)
        h = _gelu(y @ p['w1'] + p['b1'])
        ff = h @ p['w2'] + p['b2']
        return _layer_norm(y + ff, p['g3'], p['bn3'], LN_EPS)

    return jax.vmap(one)(dst, src)


# --------------------------------- main ---------------------------------------
if __name__ == "__main__":
    key = jax.random.PRNGKey(0)
    kd, ks_, kp = jax.random.split(key, 3)
    B, T, S, C = 2, 8, 8, HIDDEN
    dst = jax.random.normal(kd, (B, T, C), jnp.float32)   # decoder stream
    src = jax.random.normal(ks_, (B, S, C), jnp.float32)  # encoder memory
    raw = make_params(kp, HIDDEN, D_FF)
    packed = pack_params(raw)

    out = transformer_decoder_layer(src, dst, packed)
    out = jax.block_until_ready(out)

    ref = jax.block_until_ready(reference(src, dst, raw))
    assert out.shape == (B, T, C)
    # tolerance covers the EUP approx-reciprocal used in the in-kernel softmax
    assert jnp.allclose(out, ref, atol=2e-3, rtol=2e-3), "mismatch vs reference"

    # TODO(synk): dropout is a no-op here (eval mode); optional src/dst masks and
    # the surrounding encoder stack / embeddings / causal futures-mask of the full
    # TransformerEncoderDecoder are not implemented in-kernel.
    print("KERNEL_OK")
</pallas_src>

<mosaic_0001>
module attributes {stable_mosaic.version = 11 : i64} {
  func.func @decoder_layer_kernel(%arg0: i32, %arg1: memref<2x8x32xf32, #tpu.memory_space<vmem>>, %arg2: memref<2x8x32xf32, #tpu.memory_space<vmem>>, %arg3: memref<32x96xf32, #tpu.memory_space<vmem>>, %arg4: memref<1x96xf32, #tpu.memory_space<vmem>>, %arg5: memref<32x32xf32, #tpu.memory_space<vmem>>, %arg6: memref<1x32xf32, #tpu.memory_space<vmem>>, %arg7: memref<32x32xf32, #tpu.memory_space<vmem>>, %arg8: memref<1x32xf32, #tpu.memory_space<vmem>>, %arg9: memref<32x64xf32, #tpu.memory_space<vmem>>, %arg10: memref<1x64xf32, #tpu.memory_space<vmem>>, %arg11: memref<32x32xf32, #tpu.memory_space<vmem>>, %arg12: memref<1x32xf32, #tpu.memory_space<vmem>>, %arg13: memref<6x32xf32, #tpu.memory_space<vmem>>, %arg14: memref<32x128xf32, #tpu.memory_space<vmem>>, %arg15: memref<1x128xf32, #tpu.memory_space<vmem>>, %arg16: memref<128x32xf32, #tpu.memory_space<vmem>>, %arg17: memref<1x32xf32, #tpu.memory_space<vmem>>, %arg18: memref<2x8x32xf32, #tpu.memory_space<vmem>>) attributes {dimension_semantics = [#tpu.dimension_semantics<parallel>], iteration_bounds = array<i64: 1>, scalar_prefetch = 0 : i64, scratch_operands = 0 : i64, tpu.core_type = #tpu.core_type<tc>, window_params = [{transform_indices = @transform_0, window_bounds = array<i64: 2, 8, 32>}, {transform_indices = @transform_1, window_bounds = array<i64: 2, 8, 32>}, {pipeline_mode = #tpu.pipeline_mode<synchronous>, transform_indices = @transform_2, window_bounds = array<i64: 32, 96>}, {pipeline_mode = #tpu.pipeline_mode<synchronous>, transform_indices = @transform_3, window_bounds = array<i64: 1, 96>}, {pipeline_mode = #tpu.pipeline_mode<synchronous>, transform_indices = @transform_4, window_bounds = array<i64: 32, 32>}, {pipeline_mode = #tpu.pipeline_mode<synchronous>, transform_indices = @transform_5, window_bounds = array<i64: 1, 32>}, {pipeline_mode = #tpu.pipeline_mode<synchronous>, transform_indices = @transform_6, window_bounds = array<i64: 32, 32>}, {pipeline_mode = #tpu.pipeline_mode<synchronous>, transform_indices = @transform_7, window_bounds = array<i64: 1, 32>}, {pipeline_mode = #tpu.pipeline_mode<synchronous>, transform_indices = @transform_8, window_bounds = array<i64: 32, 64>}, {pipeline_mode = #tpu.pipeline_mode<synchronous>, transform_indices = @transform_9, window_bounds = array<i64: 1, 64>}, {pipeline_mode = #tpu.pipeline_mode<synchronous>, transform_indices = @transform_10, window_bounds = array<i64: 32, 32>}, {pipeline_mode = #tpu.pipeline_mode<synchronous>, transform_indices = @transform_11, window_bounds = array<i64: 1, 32>}, {pipeline_mode = #tpu.pipeline_mode<synchronous>, transform_indices = @transform_12, window_bounds = array<i64: 6, 32>}, {pipeline_mode = #tpu.pipeline_mode<synchronous>, transform_indices = @transform_13, window_bounds = array<i64: 32, 128>}, {pipeline_mode = #tpu.pipeline_mode<synchronous>, transform_indices = @transform_14, window_bounds = array<i64: 1, 128>}, {pipeline_mode = #tpu.pipeline_mode<synchronous>, transform_indices = @transform_15, window_bounds = array<i64: 128, 32>}, {pipeline_mode = #tpu.pipeline_mode<synchronous>, transform_indices = @transform_16, window_bounds = array<i64: 1, 32>}, {transform_indices = @transform_17, window_bounds = array<i64: 2, 8, 32>}]} {
    %c0 = arith.constant 0 : index
    %c0_0 = arith.constant 0 : index
    %c0_1 = arith.constant 0 : index
    %0 = vector.load %arg1[%c0, %c0_0, %c0_1] : memref<2x8x32xf32, #tpu.memory_space<vmem>>, vector<2x8x32xf32>
    %1 = vector.shape_cast %0 : vector<2x8x32xf32> to vector<16x32xf32>
    %c0_2 = arith.constant 0 : index
    %c0_3 = arith.constant 0 : index
    %c0_4 = arith.constant 0 : index
    %2 = vector.load %arg2[%c0_2, %c0_3, %c0_4] : memref<2x8x32xf32, #tpu.memory_space<vmem>>, vector<2x8x32xf32>
    %3 = vector.shape_cast %2 : vector<2x8x32xf32> to vector<16x32xf32>
    %c0_5 = arith.constant 0 : index
    %c0_6 = arith.constant 0 : index
    %4 = vector.load %arg3[%c0_5, %c0_6] : memref<32x96xf32, #tpu.memory_space<vmem>>, vector<32x96xf32>
    %cst = arith.constant dense<0.000000e+00> : vector<16x96xf32>
    %5 = tpu.matmul %1, %4, %cst {dimension_numbers = #tpu.dot_dimension_numbers<[1], [0], [0], [1], [0, 0, 1, 1], [], []>} : vector<16x32xf32>, vector<32x96xf32>, vector<16x96xf32> -> vector<16x96xf32>
    %c0_7 = arith.constant 0 : index
    %c0_8 = arith.constant 0 : index
    %6 = vector.load %arg4[%c0_7, %c0_8] : memref<1x96xf32, #tpu.memory_space<vmem>>, vector<1x96xf32>
    %7 = vector.broadcast %6 : vector<1x96xf32> to vector<16x96xf32>
    %8 = arith.addf %5, %7 : vector<16x96xf32>
    %9 = vector.extract_strided_slice %8 {offsets = [0, 0], sizes = [16, 32], strides = [1, 1]} : vector<16x96xf32> to vector<16x32xf32>
    %10 = vector.shape_cast %9 : vector<16x32xf32> to vector<2x8x32xf32>
    %11 = vector.extract_strided_slice %8 {offsets = [0, 32], sizes = [16, 32], strides = [1, 1]} : vector<16x96xf32> to vector<16x32xf32>
    %12 = vector.shape_cast %11 : vector<16x32xf32> to vector<2x8x32xf32>
    %13 = vector.extract_strided_slice %8 {offsets = [0, 64], sizes = [16, 32], strides = [1, 1]} : vector<16x96xf32> to vector<16x32xf32>
    %14 = vector.shape_cast %13 : vector<16x32xf32> to vector<2x8x32xf32>
    %c0_9 = arith.constant 0 : index
    %c0_10 = arith.constant 0 : index
    %15 = vector.load %arg5[%c0_9, %c0_10] : memref<32x32xf32, #tpu.memory_space<vmem>>, vector<32x32xf32>
    %c0_11 = arith.constant 0 : index
    %c0_12 = arith.constant 0 : index
    %16 = vector.load %arg6[%c0_11, %c0_12] : memref<1x32xf32, #tpu.memory_space<vmem>>, vector<1x32xf32>
    %cst_13 = arith.constant 0.000000e+00 : f32
    %17 = vector.broadcast %cst_13 : f32 to vector<16x32xf32>
    %18 = vector.extract_strided_slice %10 {offsets = [0, 0, 0], sizes = [2, 8, 8], strides = [1, 1, 1]} : vector<2x8x32xf32> to vector<2x8x8xf32>
    %19 = vector.extract_strided_slice %12 {offsets = [0, 0, 0], sizes = [2, 8, 8], strides = [1, 1, 1]} : vector<2x8x32xf32> to vector<2x8x8xf32>
    %20 = vector.extract_strided_slice %14 {offsets = [0, 0, 0], sizes = [2, 8, 8], strides = [1, 1, 1]} : vector<2x8x32xf32> to vector<2x8x8xf32>
    "tpu.trace_start"() <{level = 10 : i32, message = "btd,bsd->bts"}> : () -> ()
    %cst_14 = arith.constant dense<0.000000e+00> : vector<2x8x8xf32>
    %21 = tpu.matmul %18, %19, %cst_14 {dimension_numbers = #tpu.dot_dimension_numbers<[2], [2], [1], [1], [0, 0, 0, 1, 1, 1], [0], [0]>} : vector<2x8x8xf32>, vector<2x8x8xf32>, vector<2x8x8xf32> -> vector<2x8x8xf32>
    "tpu.trace_stop"() : () -> ()
    %cst_15 = arith.constant 0.353553385 : f32
    %22 = vector.broadcast %cst_15 : f32 to vector<2x8x8xf32>
    %23 = arith.mulf %21, %22 : vector<2x8x8xf32>
    %cst_16 = arith.constant dense<0xFF800000> : vector<2x8xf32>
    %24 = vector.multi_reduction <maximumf>, %23, %cst_16 [2] : vector<2x8x8xf32> to vector<2x8xf32>
    %25 = vector.shape_cast %24 : vector<2x8xf32> to vector<2x8x1xf32>
    %26 = vector.broadcast %25 : vector<2x8x1xf32> to vector<2x8x8xf32>
    %27 = arith.subf %23, %26 : vector<2x8x8xf32>
    %28 = math.exp %27 : vector<2x8x8xf32>
    %cst_17 = arith.constant dense<0.000000e+00> : vector<2x8xf32>
    %29 = vector.multi_reduction <add>, %28, %cst_17 [2] : vector<2x8x8xf32> to vector<2x8xf32>
    %30 = vector.shape_cast %29 : vector<2x8xf32> to vector<2x8x1xf32>
    %31 = tpu.reciprocal %30 {approx = true} : vector<2x8x1xf32> -> vector<2x8x1xf32>
    %32 = vector.broadcast %31 : vector<2x8x1xf32> to vector<2x8x8xf32>
    %33 = arith.mulf %28, %32 : vector<2x8x8xf32>
    "tpu.trace_start"() <{level = 10 : i32, message = "bts,bsd->btd"}> : () -> ()
    %cst_18 = arith.constant dense<0.000000e+00> : vector<2x8x8xf32>
    %34 = tpu.matmul %33, %20, %cst_18 {dimension_numbers = #tpu.dot_dimension_numbers<[2], [1], [1], [2], [0, 0, 0, 1, 1, 2], [0], [0]>} : vector<2x8x8xf32>, vector<2x8x8xf32>, vector<2x8x8xf32> -> vector<2x8x8xf32>
    "tpu.trace_stop"() : () -> ()
    %35 = vector.shape_cast %34 : vector<2x8x8xf32> to vector<16x8xf32>
    %36 = vector.extract_strided_slice %15 {offsets = [0, 0], sizes = [8, 32], strides = [1, 1]} : vector<32x32xf32> to vector<8x32xf32>
    %cst_19 = arith.constant dense<0.000000e+00> : vector<16x32xf32>
    %37 = tpu.matmul %35, %36, %cst_19 {dimension_numbers = #tpu.dot_dimension_numbers<[1], [0], [0], [1], [0, 0, 1, 1], [], []>} : vector<16x8xf32>, vector<8x32xf32>, vector<16x32xf32> -> vector<16x32xf32>
    %38 = arith.addf %17, %37 : vector<16x32xf32>
    %39 = vector.extract_strided_slice %10 {offsets = [0, 0, 8], sizes = [2, 8, 8], strides = [1, 1, 1]} : vector<2x8x32xf32> to vector<2x8x8xf32>
    %40 = vector.extract_strided_slice %12 {offsets = [0, 0, 8], sizes = [2, 8, 8], strides = [1, 1, 1]} : vector<2x8x32xf32> to vector<2x8x8xf32>
    %41 = vector.extract_strided_slice %14 {offsets = [0, 0, 8], sizes = [2, 8, 8], strides = [1, 1, 1]} : vector<2x8x32xf32> to vector<2x8x8xf32>
    "tpu.trace_start"() <{level = 10 : i32, message = "btd,bsd->bts"}> : () -> ()
    %cst_20 = arith.constant dense<0.000000e+00> : vector<2x8x8xf32>
    %42 = tpu.matmul %39, %40, %cst_20 {dimension_numbers = #tpu.dot_dimension_numbers<[2], [2], [1], [1], [0, 0, 0, 1, 1, 1], [0], [0]>} : vector<2x8x8xf32>, vector<2x8x8xf32>, vector<2x8x8xf32> -> vector<2x8x8xf32>
    "tpu.trace_stop"() : () -> ()
    %cst_21 = arith.constant 0.353553385 : f32
    %43 = vector.broadcast %cst_21 : f32 to vector<2x8x8xf32>
    %44 = arith.mulf %42, %43 : vector<2x8x8xf32>
    %cst_22 = arith.constant dense<0xFF800000> : vector<2x8xf32>
    %45 = vector.multi_reduction <maximumf>, %44, %cst_22 [2] : vector<2x8x8xf32> to vector<2x8xf32>
    %46 = vector.shape_cast %45 : vector<2x8xf32> to vector<2x8x1xf32>
    %47 = vector.broadcast %46 : vector<2x8x1xf32> to vector<2x8x8xf32>
    %48 = arith.subf %44, %47 : vector<2x8x8xf32>
    %49 = math.exp %48 : vector<2x8x8xf32>
    %cst_23 = arith.constant dense<0.000000e+00> : vector<2x8xf32>
    %50 = vector.multi_reduction <add>, %49, %cst_23 [2] : vector<2x8x8xf32> to vector<2x8xf32>
    %51 = vector.shape_cast %50 : vector<2x8xf32> to vector<2x8x1xf32>
    %52 = tpu.reciprocal %51 {approx = true} : vector<2x8x1xf32> -> vector<2x8x1xf32>
    %53 = vector.broadcast %52 : vector<2x8x1xf32> to vector<2x8x8xf32>
    %54 = arith.mulf %49, %53 : vector<2x8x8xf32>
    "tpu.trace_start"() <{level = 10 : i32, message = "bts,bsd->btd"}> : () -> ()
    %cst_24 = arith.constant dense<0.000000e+00> : vector<2x8x8xf32>
    %55 = tpu.matmul %54, %41, %cst_24 {dimension_numbers = #tpu.dot_dimension_numbers<[2], [1], [1], [2], [0, 0, 0, 1, 1, 2], [0], [0]>} : vector<2x8x8xf32>, vector<2x8x8xf32>, vector<2x8x8xf32> -> vector<2x8x8xf32>
    "tpu.trace_stop"() : () -> ()
    %56 = vector.shape_cast %55 : vector<2x8x8xf32> to vector<16x8xf32>
    %57 = vector.extract_strided_slice %15 {offsets = [8, 0], sizes = [8, 32], strides = [1, 1]} : vector<32x32xf32> to vector<8x32xf32>
    %cst_25 = arith.constant dense<0.000000e+00> : vector<16x32xf32>
    %58 = tpu.matmul %56, %57, %cst_25 {dimension_numbers = #tpu.dot_dimension_numbers<[1], [0], [0], [1], [0, 0, 1, 1], [], []>} : vector<16x8xf32>, vector<8x32xf32>, vector<16x32xf32> -> vector<16x32xf32>
    %59 = arith.addf %38, %58 : vector<16x32xf32>
    %60 = vector.extract_strided_slice %10 {offsets = [0, 0, 16], sizes = [2, 8, 8], strides = [1, 1, 1]} : vector<2x8x32xf32> to vector<2x8x8xf32>
    %61 = vector.extract_strided_slice %12 {offsets = [0, 0, 16], sizes = [2, 8, 8], strides = [1, 1, 1]} : vector<2x8x32xf32> to vector<2x8x8xf32>
    %62 = vector.extract_strided_slice %14 {offsets = [0, 0, 16], sizes = [2, 8, 8], strides = [1, 1, 1]} : vector<2x8x32xf32> to vector<2x8x8xf32>
    "tpu.trace_start"() <{level = 10 : i32, message = "btd,bsd->bts"}> : () -> ()
    %cst_26 = arith.constant dense<0.000000e+00> : vector<2x8x8xf32>
    %63 = tpu.matmul %60, %61, %cst_26 {dimension_numbers = #tpu.dot_dimension_numbers<[2], [2], [1], [1], [0, 0, 0, 1, 1, 1], [0], [0]>} : vector<2x8x8xf32>, vector<2x8x8xf32>, vector<2x8x8xf32> -> vector<2x8x8xf32>
    "tpu.trace_stop"() : () -> ()
    %cst_27 = arith.constant 0.353553385 : f32
    %64 = vector.broadcast %cst_27 : f32 to vector<2x8x8xf32>
    %65 = arith.mulf %63, %64 : vector<2x8x8xf32>
    %cst_28 = arith.constant dense<0xFF800000> : vector<2x8xf32>
    %66 = vector.multi_reduction <maximumf>, %65, %cst_28 [2] : vector<2x8x8xf32> to vector<2x8xf32>
    %67 = vector.shape_cast %66 : vector<2x8xf32> to vector<2x8x1xf32>
    %68 = vector.broadcast %67 : vector<2x8x1xf32> to vector<2x8x8xf32>
    %69 = arith.subf %65, %68 : vector<2x8x8xf32>
    %70 = math.exp %69 : vector<2x8x8xf32>
    %cst_29 = arith.constant dense<0.000000e+00> : vector<2x8xf32>
    %71 = vector.multi_reduction <add>, %70, %cst_29 [2] : vector<2x8x8xf32> to vector<2x8xf32>
    %72 = vector.shape_cast %71 : vector<2x8xf32> to vector<2x8x1xf32>
    %73 = tpu.reciprocal %72 {approx = true} : vector<2x8x1xf32> -> vector<2x8x1xf32>
    %74 = vector.broadcast %73 : vector<2x8x1xf32> to vector<2x8x8xf32>
    %75 = arith.mulf %70, %74 : vector<2x8x8xf32>
    "tpu.trace_start"() <{level = 10 : i32, message = "bts,bsd->btd"}> : () -> ()
    %cst_30 = arith.constant dense<0.000000e+00> : vector<2x8x8xf32>
    %76 = tpu.matmul %75, %62, %cst_30 {dimension_numbers = #tpu.dot_dimension_numbers<[2], [1], [1], [2], [0, 0, 0, 1, 1, 2], [0], [0]>} : vector<2x8x8xf32>, vector<2x8x8xf32>, vector<2x8x8xf32> -> vector<2x8x8xf32>
    "tpu.trace_stop"() : () -> ()
    %77 = vector.shape_cast %76 : vector<2x8x8xf32> to vector<16x8xf32>
    %78 = vector.extract_strided_slice %15 {offsets = [16, 0], sizes = [8, 32], strides = [1, 1]} : vector<32x32xf32> to vector<8x32xf32>
    %cst_31 = arith.constant dense<0.000000e+00> : vector<16x32xf32>
    %79 = tpu.matmul %77, %78, %cst_31 {dimension_numbers = #tpu.dot_dimension_numbers<[1], [0], [0], [1], [0, 0, 1, 1], [], []>} : vector<16x8xf32>, vector<8x32xf32>, vector<16x32xf32> -> vector<16x32xf32>
    %80 = arith.addf %59, %79 : vector<16x32xf32>
    %81 = vector.extract_strided_slice %10 {offsets = [0, 0, 24], sizes = [2, 8, 8], strides = [1, 1, 1]} : vector<2x8x32xf32> to vector<2x8x8xf32>
    %82 = vector.extract_strided_slice %12 {offsets = [0, 0, 24], sizes = [2, 8, 8], strides = [1, 1, 1]} : vector<2x8x32xf32> to vector<2x8x8xf32>
    %83 = vector.extract_strided_slice %14 {offsets = [0, 0, 24], sizes = [2, 8, 8], strides = [1, 1, 1]} : vector<2x8x32xf32> to vector<2x8x8xf32>
    "tpu.trace_start"() <{level = 10 : i32, message = "btd,bsd->bts"}> : () -> ()
    %cst_32 = arith.constant dense<0.000000e+00> : vector<2x8x8xf32>
    %84 = tpu.matmul %81, %82, %cst_32 {dimension_numbers = #tpu.dot_dimension_numbers<[2], [2], [1], [1], [0, 0, 0, 1, 1, 1], [0], [0]>} : vector<2x8x8xf32>, vector<2x8x8xf32>, vector<2x8x8xf32> -> vector<2x8x8xf32>
    "tpu.trace_stop"() : () -> ()
    %cst_33 = arith.constant 0.353553385 : f32
    %85 = vector.broadcast %cst_33 : f32 to vector<2x8x8xf32>
    %86 = arith.mulf %84, %85 : vector<2x8x8xf32>
    %cst_34 = arith.constant dense<0xFF800000> : vector<2x8xf32>
    %87 = vector.multi_reduction <maximumf>, %86, %cst_34 [2] : vector<2x8x8xf32> to vector<2x8xf32>
    %88 = vector.shape_cast %87 : vector<2x8xf32> to vector<2x8x1xf32>
    %89 = vector.broadcast %88 : vector<2x8x1xf32> to vector<2x8x8xf32>
    %90 = arith.subf %86, %89 : vector<2x8x8xf32>
    %91 = math.exp %90 : vector<2x8x8xf32>
    %cst_35 = arith.constant dense<0.000000e+00> : vector<2x8xf32>
    %92 = vector.multi_reduction <add>, %91, %cst_35 [2] : vector<2x8x8xf32> to vector<2x8xf32>
    %93 = vector.shape_cast %92 : vector<2x8xf32> to vector<2x8x1xf32>
    %94 = tpu.reciprocal %93 {approx = true} : vector<2x8x1xf32> -> vector<2x8x1xf32>
    %95 = vector.broadcast %94 : vector<2x8x1xf32> to vector<2x8x8xf32>
    %96 = arith.mulf %91, %95 : vector<2x8x8xf32>
    "tpu.trace_start"() <{level = 10 : i32, message = "bts,bsd->btd"}> : () -> ()
    %cst_36 = arith.constant dense<0.000000e+00> : vector<2x8x8xf32>
    %97 = tpu.matmul %96, %83, %cst_36 {dimension_numbers = #tpu.dot_dimension_numbers<[2], [1], [1], [2], [0, 0, 0, 1, 1, 2], [0], [0]>} : vector<2x8x8xf32>, vector<2x8x8xf32>, vector<2x8x8xf32> -> vector<2x8x8xf32>
    "tpu.trace_stop"() : () -> ()
    %98 = vector.shape_cast %97 : vector<2x8x8xf32> to vector<16x8xf32>
    %99 = vector.extract_strided_slice %15 {offsets = [24, 0], sizes = [8, 32], strides = [1, 1]} : vector<32x32xf32> to vector<8x32xf32>
    %cst_37 = arith.constant dense<0.000000e+00> : vector<16x32xf32>
    %100 = tpu.matmul %98, %99, %cst_37 {dimension_numbers = #tpu.dot_dimension_numbers<[1], [0], [0], [1], [0, 0, 1, 1], [], []>} : vector<16x8xf32>, vector<8x32xf32>, vector<16x32xf32> -> vector<16x32xf32>
    %101 = arith.addf %80, %100 : vector<16x32xf32>
    %102 = vector.broadcast %16 : vector<1x32xf32> to vector<16x32xf32>
    %103 = arith.addf %101, %102 : vector<16x32xf32>
    %104 = arith.addf %1, %103 : vector<16x32xf32>
    %c0_38 = arith.constant 0 : index
    %c0_39 = arith.constant 0 : index
    %105 = vector.load %arg13[%c0_38, %c0_39] : memref<6x32xf32, #tpu.memory_space<vmem>>, vector<1x32xf32>
    %c1 = arith.constant 1 : index
    %c0_40 = arith.constant 0 : index
    %106 = vector.load %arg13[%c1, %c0_40] : memref<6x32xf32, #tpu.memory_space<vmem>>, vector<1x32xf32>
    %cst_41 = arith.constant dense<0.000000e+00> : vector<16xf32>
    %107 = vector.multi_reduction <add>, %104, %cst_41 [1] : vector<16x32xf32> to vector<16xf32>
    %108 = vector.shape_cast %107 : vector<16xf32> to vector<16x1xf32>
    %cst_42 = arith.constant 3.200000e+01 : f32
    %109 = vector.broadcast %cst_42 : f32 to vector<16x1xf32>
    %110 = arith.divf %108, %109 : vector<16x1xf32>
    %111 = vector.broadcast %110 : vector<16x1xf32> to vector<16x32xf32>
    %112 = arith.subf %104, %111 : vector<16x32xf32>
    %113 = arith.mulf %112, %112 : vector<16x32xf32>
    %cst_43 = arith.constant dense<0.000000e+00> : vector<16xf32>
    %114 = vector.multi_reduction <add>, %113, %cst_43 [1] : vector<16x32xf32> to vector<16xf32>
    %115 = vector.shape_cast %114 : vector<16xf32> to vector<16x1xf32>
    %cst_44 = arith.constant 3.200000e+01 : f32
    %116 = vector.broadcast %cst_44 : f32 to vector<16x1xf32>
    %117 = arith.divf %115, %116 : vector<16x1xf32>
    %118 = vector.broadcast %110 : vector<16x1xf32> to vector<16x32xf32>
    %119 = arith.subf %104, %118 : vector<16x32xf32>
    %cst_45 = arith.constant 9.99999996E-13 : f32
    %120 = vector.broadcast %cst_45 : f32 to vector<16x1xf32>
    %121 = arith.addf %117, %120 : vector<16x1xf32>
    %122 = math.rsqrt %121 : vector<16x1xf32>
    %123 = vector.broadcast %122 : vector<16x1xf32> to vector<16x32xf32>
    %124 = arith.mulf %119, %123 : vector<16x32xf32>
    %125 = vector.broadcast %105 : vector<1x32xf32> to vector<16x32xf32>
    %126 = arith.mulf %124, %125 : vector<16x32xf32>
    %127 = vector.broadcast %106 : vector<1x32xf32> to vector<16x32xf32>
    %128 = arith.addf %126, %127 : vector<16x32xf32>
    %c0_46 = arith.constant 0 : index
    %c0_47 = arith.constant 0 : index
    %129 = vector.load %arg7[%c0_46, %c0_47] : memref<32x32xf32, #tpu.memory_space<vmem>>, vector<32x32xf32>
    %cst_48 = arith.constant dense<0.000000e+00> : vector<16x32xf32>
    %130 = tpu.matmul %128, %129, %cst_48 {dimension_numbers = #tpu.dot_dimension_numbers<[1], [0], [0], [1], [0, 0, 1, 1], [], []>} : vector<16x32xf32>, vector<32x32xf32>, vector<16x32xf32> -> vector<16x32xf32>
    %c0_49 = arith.constant 0 : index
    %c0_50 = arith.constant 0 : index
    %131 = vector.load %arg8[%c0_49, %c0_50] : memref<1x32xf32, #tpu.memory_space<vmem>>, vector<1x32xf32>
    %132 = vector.broadcast %131 : vector<1x32xf32> to vector<16x32xf32>
    %133 = arith.addf %130, %132 : vector<16x32xf32>
    %134 = vector.shape_cast %133 : vector<16x32xf32> to vector<2x8x32xf32>
    %c0_51 = arith.constant 0 : index
    %c0_52 = arith.constant 0 : index
    %135 = vector.load %arg9[%c0_51, %c0_52] : memref<32x64xf32, #tpu.memory_space<vmem>>, vector<32x64xf32>
    %cst_53 = arith.constant dense<0.000000e+00> : vector<16x64xf32>
    %136 = tpu.matmul %3, %135, %cst_53 {dimension_numbers = #tpu.dot_dimension_numbers<[1], [0], [0], [1], [0, 0, 1, 1], [], []>} : vector<16x32xf32>, vector<32x64xf32>, vector<16x64xf32> -> vector<16x64xf32>
    %c0_54 = arith.constant 0 : index
    %c0_55 = arith.constant 0 : index
    %137 = vector.load %arg10[%c0_54, %c0_55] : memref<1x64xf32, #tpu.memory_space<vmem>>, vector<1x64xf32>
    %138 = vector.broadcast %137 : vector<1x64xf32> to vector<16x64xf32>
    %139 = arith.addf %136, %138 : vector<16x64xf32>
    %140 = vector.extract_strided_slice %139 {offsets = [0, 0], sizes = [16, 32], strides = [1, 1]} : vector<16x64xf32> to vector<16x32xf32>
    %141 = vector.shape_cast %140 : vector<16x32xf32> to vector<2x8x32xf32>
    %142 = vector.extract_strided_slice %139 {offsets = [0, 32], sizes = [16, 32], strides = [1, 1]} : vector<16x64xf32> to vector<16x32xf32>
    %143 = vector.shape_cast %142 : vector<16x32xf32> to vector<2x8x32xf32>
    %c0_56 = arith.constant 0 : index
    %c0_57 = arith.constant 0 : index
    %144 = vector.load %arg11[%c0_56, %c0_57] : memref<32x32xf32, #tpu.memory_space<vmem>>, vector<32x32xf32>
    %c0_58 = arith.constant 0 : index
    %c0_59 = arith.constant 0 : index
    %145 = vector.load %arg12[%c0_58, %c0_59] : memref<1x32xf32, #tpu.memory_space<vmem>>, vector<1x32xf32>
    %cst_60 = arith.constant 0.000000e+00 : f32
    %146 = vector.broadcast %cst_60 : f32 to vector<16x32xf32>
    %147 = vector.extract_strided_slice %134 {offsets = [0, 0, 0], sizes = [2, 8, 8], strides = [1, 1, 1]} : vector<2x8x32xf32> to vector<2x8x8xf32>
    %148 = vector.extract_strided_slice %141 {offsets = [0, 0, 0], sizes = [2, 8, 8], strides = [1, 1, 1]} : vector<2x8x32xf32> to vector<2x8x8xf32>
    %149 = vector.extract_strided_slice %143 {offsets = [0, 0, 0], sizes = [2, 8, 8], strides = [1, 1, 1]} : vector<2x8x32xf32> to vector<2x8x8xf32>
    "tpu.trace_start"() <{level = 10 : i32, message = "btd,bsd->bts"}> : () -> ()
    %cst_61 = arith.constant dense<0.000000e+00> : vector<2x8x8xf32>
    %150 = tpu.matmul %147, %148, %cst_61 {dimension_numbers = #tpu.dot_dimension_numbers<[2], [2], [1], [1], [0, 0, 0, 1, 1, 1], [0], [0]>} : vector<2x8x8xf32>, vector<2x8x8xf32>, vector<2x8x8xf32> -> vector<2x8x8xf32>
    "tpu.trace_stop"() : () -> ()
    %cst_62 = arith.constant 0.353553385 : f32
    %151 = vector.broadcast %cst_62 : f32 to vector<2x8x8xf32>
    %152 = arith.mulf %150, %151 : vector<2x8x8xf32>
    %cst_63 = arith.constant dense<0xFF800000> : vector<2x8xf32>
    %153 = vector.multi_reduction <maximumf>, %152, %cst_63 [2] : vector<2x8x8xf32> to vector<2x8xf32>
    %154 = vector.shape_cast %153 : vector<2x8xf32> to vector<2x8x1xf32>
    %155 = vector.broadcast %154 : vector<2x8x1xf32> to vector<2x8x8xf32>
    %156 = arith.subf %152, %155 : vector<2x8x8xf32>
    %157 = math.exp %156 : vector<2x8x8xf32>
    %cst_64 = arith.constant dense<0.000000e+00> : vector<2x8xf32>
    %158 = vector.multi_reduction <add>, %157, %cst_64 [2] : vector<2x8x8xf32> to vector<2x8xf32>
    %159 = vector.shape_cast %158 : vector<2x8xf32> to vector<2x8x1xf32>
    %160 = tpu.reciprocal %159 {approx = true} : vector<2x8x1xf32> -> vector<2x8x1xf32>
    %161 = vector.broadcast %160 : vector<2x8x1xf32> to vector<2x8x8xf32>
    %162 = arith.mulf %157, %161 : vector<2x8x8xf32>
    "tpu.trace_start"() <{level = 10 : i32, message = "bts,bsd->btd"}> : () -> ()
    %cst_65 = arith.constant dense<0.000000e+00> : vector<2x8x8xf32>
    %163 = tpu.matmul %162, %149, %cst_65 {dimension_numbers = #tpu.dot_dimension_numbers<[2], [1], [1], [2], [0, 0, 0, 1, 1, 2], [0], [0]>} : vector<2x8x8xf32>, vector<2x8x8xf32>, vector<2x8x8xf32> -> vector<2x8x8xf32>
    "tpu.trace_stop"() : () -> ()
    %164 = vector.shape_cast %163 : vector<2x8x8xf32> to vector<16x8xf32>
    %165 = vector.extract_strided_slice %144 {offsets = [0, 0], sizes = [8, 32], strides = [1, 1]} : vector<32x32xf32> to vector<8x32xf32>
    %cst_66 = arith.constant dense<0.000000e+00> : vector<16x32xf32>
    %166 = tpu.matmul %164, %165, %cst_66 {dimension_numbers = #tpu.dot_dimension_numbers<[1], [0], [0], [1], [0, 0, 1, 1], [], []>} : vector<16x8xf32>, vector<8x32xf32>, vector<16x32xf32> -> vector<16x32xf32>
    %167 = arith.addf %146, %166 : vector<16x32xf32>
    %168 = vector.extract_strided_slice %134 {offsets = [0, 0, 8], sizes = [2, 8, 8], strides = [1, 1, 1]} : vector<2x8x32xf32> to vector<2x8x8xf32>
    %169 = vector.extract_strided_slice %141 {offsets = [0, 0, 8], sizes = [2, 8, 8], strides = [1, 1, 1]} : vector<2x8x32xf32> to vector<2x8x8xf32>
    %170 = vector.extract_strided_slice %143 {offsets = [0, 0, 8], sizes = [2, 8, 8], strides = [1, 1, 1]} : vector<2x8x32xf32> to vector<2x8x8xf32>
    "tpu.trace_start"() <{level = 10 : i32, message = "btd,bsd->bts"}> : () -> ()
    %cst_67 = arith.constant dense<0.000000e+00> : vector<2x8x8xf32>
    %171 = tpu.matmul %168, %169, %cst_67 {dimension_numbers = #tpu.dot_dimension_numbers<[2], [2], [1], [1], [0, 0, 0, 1, 1, 1], [0], [0]>} : vector<2x8x8xf32>, vector<2x8x8xf32>, vector<2x8x8xf32> -> vector<2x8x8xf32>
    "tpu.trace_stop"() : () -> ()
    %cst_68 = arith.constant 0.353553385 : f32
    %172 = vector.broadcast %cst_68 : f32 to vector<2x8x8xf32>
    %173 = arith.mulf %171, %172 : vector<2x8x8xf32>
    %cst_69 = arith.constant dense<0xFF800000> : vector<2x8xf32>
    %174 = vector.multi_reduction <maximumf>, %173, %cst_69 [2] : vector<2x8x8xf32> to vector<2x8xf32>
    %175 = vector.shape_cast %174 : vector<2x8xf32> to vector<2x8x1xf32>
    %176 = vector.broadcast %175 : vector<2x8x1xf32> to vector<2x8x8xf32>
    %177 = arith.subf %173, %176 : vector<2x8x8xf32>
    %178 = math.exp %177 : vector<2x8x8xf32>
    %cst_70 = arith.constant dense<0.000000e+00> : vector<2x8xf32>
    %179 = vector.multi_reduction <add>, %178, %cst_70 [2] : vector<2x8x8xf32> to vector<2x8xf32>
    %180 = vector.shape_cast %179 : vector<2x8xf32> to vector<2x8x1xf32>
    %181 = tpu.reciprocal %180 {approx = true} : vector<2x8x1xf32> -> vector<2x8x1xf32>
    %182 = vector.broadcast %181 : vector<2x8x1xf32> to vector<2x8x8xf32>
    %183 = arith.mulf %178, %182 : vector<2x8x8xf32>
    "tpu.trace_start"() <{level = 10 : i32, message = "bts,bsd->btd"}> : () -> ()
    %cst_71 = arith.constant dense<0.000000e+00> : vector<2x8x8xf32>
    %184 = tpu.matmul %183, %170, %cst_71 {dimension_numbers = #tpu.dot_dimension_numbers<[2], [1], [1], [2], [0, 0, 0, 1, 1, 2], [0], [0]>} : vector<2x8x8xf32>, vector<2x8x8xf32>, vector<2x8x8xf32> -> vector<2x8x8xf32>
    "tpu.trace_stop"() : () -> ()
    %185 = vector.shape_cast %184 : vector<2x8x8xf32> to vector<16x8xf32>
    %186 = vector.extract_strided_slice %144 {offsets = [8, 0], sizes = [8, 32], strides = [1, 1]} : vector<32x32xf32> to vector<8x32xf32>
    %cst_72 = arith.constant dense<0.000000e+00> : vector<16x32xf32>
    %187 = tpu.matmul %185, %186, %cst_72 {dimension_numbers = #tpu.dot_dimension_numbers<[1], [0], [0], [1], [0, 0, 1, 1], [], []>} : vector<16x8xf32>, vector<8x32xf32>, vector<16x32xf32> -> vector<16x32xf32>
    %188 = arith.addf %167, %187 : vector<16x32xf32>
    %189 = vector.extract_strided_slice %134 {offsets = [0, 0, 16], sizes = [2, 8, 8], strides = [1, 1, 1]} : vector<2x8x32xf32> to vector<2x8x8xf32>
    %190 = vector.extract_strided_slice %141 {offsets = [0, 0, 16], sizes = [2, 8, 8], strides = [1, 1, 1]} : vector<2x8x32xf32> to vector<2x8x8xf32>
    %191 = vector.extract_strided_slice %143 {offsets = [0, 0, 16], sizes = [2, 8, 8], strides = [1, 1, 1]} : vector<2x8x32xf32> to vector<2x8x8xf32>
    "tpu.trace_start"() <{level = 10 : i32, message = "btd,bsd->bts"}> : () -> ()
    %cst_73 = arith.constant dense<0.000000e+00> : vector<2x8x8xf32>
    %192 = tpu.matmul %189, %190, %cst_73 {dimension_numbers = #tpu.dot_dimension_numbers<[2], [2], [1], [1], [0, 0, 0, 1, 1, 1], [0], [0]>} : vector<2x8x8xf32>, vector<2x8x8xf32>, vector<2x8x8xf32> -> vector<2x8x8xf32>
    "tpu.trace_stop"() : () -> ()
    %cst_74 = arith.constant 0.353553385 : f32
    %193 = vector.broadcast %cst_74 : f32 to vector<2x8x8xf32>
    %194 = arith.mulf %192, %193 : vector<2x8x8xf32>
    %cst_75 = arith.constant dense<0xFF800000> : vector<2x8xf32>
    %195 = vector.multi_reduction <maximumf>, %194, %cst_75 [2] : vector<2x8x8xf32> to vector<2x8xf32>
    %196 = vector.shape_cast %195 : vector<2x8xf32> to vector<2x8x1xf32>
    %197 = vector.broadcast %196 : vector<2x8x1xf32> to vector<2x8x8xf32>
    %198 = arith.subf %194, %197 : vector<2x8x8xf32>
    %199 = math.exp %198 : vector<2x8x8xf32>
    %cst_76 = arith.constant dense<0.000000e+00> : vector<2x8xf32>
    %200 = vector.multi_reduction <add>, %199, %cst_76 [2] : vector<2x8x8xf32> to vector<2x8xf32>
    %201 = vector.shape_cast %200 : vector<2x8xf32> to vector<2x8x1xf32>
    %202 = tpu.reciprocal %201 {approx = true} : vector<2x8x1xf32> -> vector<2x8x1xf32>
    %203 = vector.broadcast %202 : vector<2x8x1xf32> to vector<2x8x8xf32>
    %204 = arith.mulf %199, %203 : vector<2x8x8xf32>
    "tpu.trace_start"() <{level = 10 : i32, message = "bts,bsd->btd"}> : () -> ()
    %cst_77 = arith.constant dense<0.000000e+00> : vector<2x8x8xf32>
    %205 = tpu.matmul %204, %191, %cst_77 {dimension_numbers = #tpu.dot_dimension_numbers<[2], [1], [1], [2], [0, 0, 0, 1, 1, 2], [0], [0]>} : vector<2x8x8xf32>, vector<2x8x8xf32>, vector<2x8x8xf32> -> vector<2x8x8xf32>
    "tpu.trace_stop"() : () -> ()
    %206 = vector.shape_cast %205 : vector<2x8x8xf32> to vector<16x8xf32>
    %207 = vector.extract_strided_slice %144 {offsets = [16, 0], sizes = [8, 32], strides = [1, 1]} : vector<32x32xf32> to vector<8x32xf32>
    %cst_78 = arith.constant dense<0.000000e+00> : vector<16x32xf32>
    %208 = tpu.matmul %206, %207, %cst_78 {dimension_numbers = #tpu.dot_dimension_numbers<[1], [0], [0], [1], [0, 0, 1, 1], [], []>} : vector<16x8xf32>, vector<8x32xf32>, vector<16x32xf32> -> vector<16x32xf32>
    %209 = arith.addf %188, %208 : vector<16x32xf32>
    %210 = vector.extract_strided_slice %134 {offsets = [0, 0, 24], sizes = [2, 8, 8], strides = [1, 1, 1]} : vector<2x8x32xf32> to vector<2x8x8xf32>
    %211 = vector.extract_strided_slice %141 {offsets = [0, 0, 24], sizes = [2, 8, 8], strides = [1, 1, 1]} : vector<2x8x32xf32> to vector<2x8x8xf32>
    %212 = vector.extract_strided_slice %143 {offsets = [0, 0, 24], sizes = [2, 8, 8], strides = [1, 1, 1]} : vector<2x8x32xf32> to vector<2x8x8xf32>
    "tpu.trace_start"() <{level = 10 : i32, message = "btd,bsd->bts"}> : () -> ()
    %cst_79 = arith.constant dense<0.000000e+00> : vector<2x8x8xf32>
    %213 = tpu.matmul %210, %211, %cst_79 {dimension_numbers = #tpu.dot_dimension_numbers<[2], [2], [1], [1], [0, 0, 0, 1, 1, 1], [0], [0]>} : vector<2x8x8xf32>, vector<2x8x8xf32>, vector<2x8x8xf32> -> vector<2x8x8xf32>
    "tpu.trace_stop"() : () -> ()
    %cst_80 = arith.constant 0.353553385 : f32
    %214 = vector.broadcast %cst_80 : f32 to vector<2x8x8xf32>
    %215 = arith.mulf %213, %214 : vector<2x8x8xf32>
    %cst_81 = arith.constant dense<0xFF800000> : vector<2x8xf32>
    %216 = vector.multi_reduction <maximumf>, %215, %cst_81 [2] : vector<2x8x8xf32> to vector<2x8xf32>
    %217 = vector.shape_cast %216 : vector<2x8xf32> to vector<2x8x1xf32>
    %218 = vector.broadcast %217 : vector<2x8x1xf32> to vector<2x8x8xf32>
    %219 = arith.subf %215, %218 : vector<2x8x8xf32>
    %220 = math.exp %219 : vector<2x8x8xf32>
    %cst_82 = arith.constant dense<0.000000e+00> : vector<2x8xf32>
    %221 = vector.multi_reduction <add>, %220, %cst_82 [2] : vector<2x8x8xf32> to vector<2x8xf32>
    %222 = vector.shape_cast %221 : vector<2x8xf32> to vector<2x8x1xf32>
    %223 = tpu.reciprocal %222 {approx = true} : vector<2x8x1xf32> -> vector<2x8x1xf32>
    %224 = vector.broadcast %223 : vector<2x8x1xf32> to vector<2x8x8xf32>
    %225 = arith.mulf %220, %224 : vector<2x8x8xf32>
    "tpu.trace_start"() <{level = 10 : i32, message = "bts,bsd->btd"}> : () -> ()
    %cst_83 = arith.constant dense<0.000000e+00> : vector<2x8x8xf32>
    %226 = tpu.matmul %225, %212, %cst_83 {dimension_numbers = #tpu.dot_dimension_numbers<[2], [1], [1], [2], [0, 0, 0, 1, 1, 2], [0], [0]>} : vector<2x8x8xf32>, vector<2x8x8xf32>, vector<2x8x8xf32> -> vector<2x8x8xf32>
    "tpu.trace_stop"() : () -> ()
    %227 = vector.shape_cast %226 : vector<2x8x8xf32> to vector<16x8xf32>
    %228 = vector.extract_strided_slice %144 {offsets = [24, 0], sizes = [8, 32], strides = [1, 1]} : vector<32x32xf32> to vector<8x32xf32>
    %cst_84 = arith.constant dense<0.000000e+00> : vector<16x32xf32>
    %229 = tpu.matmul %227, %228, %cst_84 {dimension_numbers = #tpu.dot_dimension_numbers<[1], [0], [0], [1], [0, 0, 1, 1], [], []>} : vector<16x8xf32>, vector<8x32xf32>, vector<16x32xf32> -> vector<16x32xf32>
    %230 = arith.addf %209, %229 : vector<16x32xf32>
    %231 = vector.broadcast %145 : vector<1x32xf32> to vector<16x32xf32>
    %232 = arith.addf %230, %231 : vector<16x32xf32>
    %233 = arith.addf %128, %232 : vector<16x32xf32>
    %c2 = arith.constant 2 : index
    %c0_85 = arith.constant 0 : index
    %234 = vector.load %arg13[%c2, %c0_85] : memref<6x32xf32, #tpu.memory_space<vmem>>, vector<1x32xf32>
    %c3 = arith.constant 3 : index
    %c0_86 = arith.constant 0 : index
    %235 = vector.load %arg13[%c3, %c0_86] : memref<6x32xf32, #tpu.memory_space<vmem>>, vector<1x32xf32>
    %cst_87 = arith.constant dense<0.000000e+00> : vector<16xf32>
    %236 = vector.multi_reduction <add>, %233, %cst_87 [1] : vector<16x32xf32> to vector<16xf32>
    %237 = vector.shape_cast %236 : vector<16xf32> to vector<16x1xf32>
    %cst_88 = arith.constant 3.200000e+01 : f32
    %238 = vector.broadcast %cst_88 : f32 to vector<16x1xf32>
    %239 = arith.divf %237, %238 : vector<16x1xf32>
    %240 = vector.broadcast %239 : vector<16x1xf32> to vector<16x32xf32>
    %241 = arith.subf %233, %240 : vector<16x32xf32>
    %242 = arith.mulf %241, %241 : vector<16x32xf32>
    %cst_89 = arith.constant dense<0.000000e+00> : vector<16xf32>
    %243 = vector.multi_reduction <add>, %242, %cst_89 [1] : vector<16x32xf32> to vector<16xf32>
    %244 = vector.shape_cast %243 : vector<16xf32> to vector<16x1xf32>
    %cst_90 = arith.constant 3.200000e+01 : f32
    %245 = vector.broadcast %cst_90 : f32 to vector<16x1xf32>
    %246 = arith.divf %244, %245 : vector<16x1xf32>
    %247 = vector.broadcast %239 : vector<16x1xf32> to vector<16x32xf32>
    %248 = arith.subf %233, %247 : vector<16x32xf32>
    %cst_91 = arith.constant 9.99999996E-13 : f32
    %249 = vector.broadcast %cst_91 : f32 to vector<16x1xf32>
    %250 = arith.addf %246, %249 : vector<16x1xf32>
    %251 = math.rsqrt %250 : vector<16x1xf32>
    %252 = vector.broadcast %251 : vector<16x1xf32> to vector<16x32xf32>
    %253 = arith.mulf %248, %252 : vector<16x32xf32>
    %254 = vector.broadcast %234 : vector<1x32xf32> to vector<16x32xf32>
    %255 = arith.mulf %253, %254 : vector<16x32xf32>
    %256 = vector.broadcast %235 : vector<1x32xf32> to vector<16x32xf32>
    %257 = arith.addf %255, %256 : vector<16x32xf32>
    %c0_92 = arith.constant 0 : index
    %c0_93 = arith.constant 0 : index
    %258 = vector.load %arg14[%c0_92, %c0_93] : memref<32x128xf32, #tpu.memory_space<vmem>>, vector<32x128xf32>
    %cst_94 = arith.constant dense<0.000000e+00> : vector<16x128xf32>
    %259 = tpu.matmul %257, %258, %cst_94 {dimension_numbers = #tpu.dot_dimension_numbers<[1], [0], [0], [1], [0, 0, 1, 1], [], []>} : vector<16x32xf32>, vector<32x128xf32>, vector<16x128xf32> -> vector<16x128xf32>
    %c0_95 = arith.constant 0 : index
    %c0_96 = arith.constant 0 : index
    %260 = vector.load %arg15[%c0_95, %c0_96] : memref<1x128xf32, #tpu.memory_space<vmem>>, vector<1x128xf32>
    %261 = vector.broadcast %260 : vector<1x128xf32> to vector<16x128xf32>
    %262 = arith.addf %259, %261 : vector<16x128xf32>
    %cst_97 = arith.constant 5.000000e-01 : f32
    %263 = vector.broadcast %cst_97 : f32 to vector<16x128xf32>
    %264 = arith.mulf %263, %262 : vector<16x128xf32>
    %cst_98 = arith.constant 0.707106769 : f32
    %265 = vector.broadcast %cst_98 : f32 to vector<16x128xf32>
    %266 = arith.mulf %262, %265 : vector<16x128xf32>
    %267 = math.erf %266 : vector<16x128xf32>
    %cst_99 = arith.constant 1.000000e+00 : f32
    %268 = vector.broadcast %cst_99 : f32 to vector<16x128xf32>
    %269 = arith.addf %268, %267 : vector<16x128xf32>
    %270 = arith.mulf %264, %269 : vector<16x128xf32>
    %c0_100 = arith.constant 0 : index
    %c0_101 = arith.constant 0 : index
    %271 = vector.load %arg16[%c0_100, %c0_101] : memref<128x32xf32, #tpu.memory_space<vmem>>, vector<128x32xf32>
    %cst_102 = arith.constant dense<0.000000e+00> : vector<16x32xf32>
    %272 = tpu.matmul %270, %271, %cst_102 {dimension_numbers = #tpu.dot_dimension_numbers<[1], [0], [0], [1], [0, 0, 1, 1], [], []>} : vector<16x128xf32>, vector<128x32xf32>, vector<16x32xf32> -> vector<16x32xf32>
    %c0_103 = arith.constant 0 : index
    %c0_104 = arith.constant 0 : index
    %273 = vector.load %arg17[%c0_103, %c0_104] : memref<1x32xf32, #tpu.memory_space<vmem>>, vector<1x32xf32>
    %274 = vector.broadcast %273 : vector<1x32xf32> to vector<16x32xf32>
    %275 = arith.addf %272, %274 : vector<16x32xf32>
    %276 = arith.addf %257, %275 : vector<16x32xf32>
    %c4 = arith.constant 4 : index
    %c0_105 = arith.constant 0 : index
    %277 = vector.load %arg13[%c4, %c0_105] : memref<6x32xf32, #tpu.memory_space<vmem>>, vector<1x32xf32>
    %c5 = arith.constant 5 : index
    %c0_106 = arith.constant 0 : index
    %278 = vector.load %arg13[%c5, %c0_106] : memref<6x32xf32, #tpu.memory_space<vmem>>, vector<1x32xf32>
    %cst_107 = arith.constant dense<0.000000e+00> : vector<16xf32>
    %279 = vector.multi_reduction <add>, %276, %cst_107 [1] : vector<16x32xf32> to vector<16xf32>
    %280 = vector.shape_cast %279 : vector<16xf32> to vector<16x1xf32>
    %cst_108 = arith.constant 3.200000e+01 : f32
    %281 = vector.broadcast %cst_108 : f32 to vector<16x1xf32>
    %282 = arith.divf %280, %281 : vector<16x1xf32>
    %283 = vector.broadcast %282 : vector<16x1xf32> to vector<16x32xf32>
    %284 = arith.subf %276, %283 : vector<16x32xf32>
    %285 = arith.mulf %284, %284 : vector<16x32xf32>
    %cst_109 = arith.constant dense<0.000000e+00> : vector<16xf32>
    %286 = vector.multi_reduction <add>, %285, %cst_109 [1] : vector<16x32xf32> to vector<16xf32>
    %287 = vector.shape_cast %286 : vector<16xf32> to vector<16x1xf32>
    %cst_110 = arith.constant 3.200000e+01 : f32
    %288 = vector.broadcast %cst_110 : f32 to vector<16x1xf32>
    %289 = arith.divf %287, %288 : vector<16x1xf32>
    %290 = vector.broadcast %282 : vector<16x1xf32> to vector<16x32xf32>
    %291 = arith.subf %276, %290 : vector<16x32xf32>
    %cst_111 = arith.constant 9.99999996E-13 : f32
    %292 = vector.broadcast %cst_111 : f32 to vector<16x1xf32>
    %293 = arith.addf %289, %292 : vector<16x1xf32>
    %294 = math.rsqrt %293 : vector<16x1xf32>
    %295 = vector.broadcast %294 : vector<16x1xf32> to vector<16x32xf32>
    %296 = arith.mulf %291, %295 : vector<16x32xf32>
    %297 = vector.broadcast %277 : vector<1x32xf32> to vector<16x32xf32>
    %298 = arith.mulf %296, %297 : vector<16x32xf32>
    %299 = vector.broadcast %278 : vector<1x32xf32> to vector<16x32xf32>
    %300 = arith.addf %298, %299 : vector<16x32xf32>
    %301 = vector.shape_cast %300 : vector<16x32xf32> to vector<2x8x32xf32>
    %c0_112 = arith.constant 0 : index
    %c0_113 = arith.constant 0 : index
    %c0_114 = arith.constant 0 : index
    %302 = vector.load %arg18[%c0_112, %c0_113, %c0_114] : memref<2x8x32xf32, #tpu.memory_space<vmem>>, vector<2x8x32xf32>
    tpu.vector_store %arg18[%c0_112, %c0_113, %c0_114], %301 {strides = array<i32>} : memref<2x8x32xf32, #tpu.memory_space<vmem>>, vector<2x8x32xf32>,
    return
  }
  func.func @transform_0(%arg0: i32) -> (i32, i32, i32) {
    %c0_i32 = arith.constant 0 : i32
    %c0_i32_0 = arith.constant 0 : i32
    %c0_i32_1 = arith.constant 0 : i32
    return %arg0, %c0_i32, %c0_i32_0 : i32, i32, i32
  }
  func.func @transform_1(%arg0: i32) -> (i32, i32, i32) {
    %c0_i32 = arith.constant 0 : i32
    %c0_i32_0 = arith.constant 0 : i32
    %c0_i32_1 = arith.constant 0 : i32
    return %arg0, %c0_i32, %c0_i32_0 : i32, i32, i32
  }
  func.func @transform_2(%arg0: i32) -> (i32, i32) {
    %c0_i32 = arith.constant 0 : i32
    %c0_i32_0 = arith.constant 0 : i32
    %c0_i32_1 = arith.constant 0 : i32
    return %c0_i32, %c0_i32_0 : i32, i32
  }
  func.func @transform_3(%arg0: i32) -> (i32, i32) {
    %c0_i32 = arith.constant 0 : i32
    %c0_i32_0 = arith.constant 0 : i32
    %c0_i32_1 = arith.constant 0 : i32
    return %c0_i32, %c0_i32_0 : i32, i32
  }
  func.func @transform_4(%arg0: i32) -> (i32, i32) {
    %c0_i32 = arith.constant 0 : i32
    %c0_i32_0 = arith.constant 0 : i32
    %c0_i32_1 = arith.constant 0 : i32
    return %c0_i32, %c0_i32_0 : i32, i32
  }
  func.func @transform_5(%arg0: i32) -> (i32, i32) {
    %c0_i32 = arith.constant 0 : i32
    %c0_i32_0 = arith.constant 0 : i32
    %c0_i32_1 = arith.constant 0 : i32
    return %c0_i32, %c0_i32_0 : i32, i32
  }
  func.func @transform_6(%arg0: i32) -> (i32, i32) {
    %c0_i32 = arith.constant 0 : i32
    %c0_i32_0 = arith.constant 0 : i32
    %c0_i32_1 = arith.constant 0 : i32
    return %c0_i32, %c0_i32_0 : i32, i32
  }
  func.func @transform_7(%arg0: i32) -> (i32, i32) {
    %c0_i32 = arith.constant 0 : i32
    %c0_i32_0 = arith.constant 0 : i32
    %c0_i32_1 = arith.constant 0 : i32
    return %c0_i32, %c0_i32_0 : i32, i32
  }
  func.func @transform_8(%arg0: i32) -> (i32, i32) {
    %c0_i32 = arith.constant 0 : i32
    %c0_i32_0 = arith.constant 0 : i32
    %c0_i32_1 = arith.constant 0 : i32
    return %c0_i32, %c0_i32_0 : i32, i32
  }
  func.func @transform_9(%arg0: i32) -> (i32, i32) {
    %c0_i32 = arith.constant 0 : i32
    %c0_i32_0 = arith.constant 0 : i32
    %c0_i32_1 = arith.constant 0 : i32
    return %c0_i32, %c0_i32_0 : i32, i32
  }
  func.func @transform_10(%arg0: i32) -> (i32, i32) {
    %c0_i32 = arith.constant 0 : i32
    %c0_i32_0 = arith.constant 0 : i32
    %c0_i32_1 = arith.constant 0 : i32
    return %c0_i32, %c0_i32_0 : i32, i32
  }
  func.func @transform_11(%arg0: i32) -> (i32, i32) {
    %c0_i32 = arith.constant 0 : i32
    %c0_i32_0 = arith.constant 0 : i32
    %c0_i32_1 = arith.constant 0 : i32
    return %c0_i32, %c0_i32_0 : i32, i32
  }
  func.func @transform_12(%arg0: i32) -> (i32, i32) {
    %c0_i32 = arith.constant 0 : i32
    %c0_i32_0 = arith.constant 0 : i32
    %c0_i32_1 = arith.constant 0 : i32
    return %c0_i32, %c0_i32_0 : i32, i32
  }
  func.func @transform_13(%arg0: i32) -> (i32, i32) {
    %c0_i32 = arith.constant 0 : i32
    %c0_i32_0 = arith.constant 0 : i32
    %c0_i32_1 = arith.constant 0 : i32
    return %c0_i32, %c0_i32_0 : i32, i32
  }
  func.func @transform_14(%arg0: i32) -> (i32, i32) {
    %c0_i32 = arith.constant 0 : i32
    %c0_i32_0 = arith.constant 0 : i32
    %c0_i32_1 = arith.constant 0 : i32
    return %c0_i32, %c0_i32_0 : i32, i32
  }
  func.func @transform_15(%arg0: i32) -> (i32, i32) {
    %c0_i32 = arith.constant 0 : i32
    %c0_i32_0 = arith.constant 0 : i32
    %c0_i32_1 = arith.constant 0 : i32
    return %c0_i32, %c0_i32_0 : i32, i32
  }
  func.func @transform_16(%arg0: i32) -> (i32, i32) {
    %c0_i32 = arith.constant 0 : i32
    %c0_i32_0 = arith.constant 0 : i32
    %c0_i32_1 = arith.constant 0 : i32
    return %c0_i32, %c0_i32_0 : i32, i32
  }
  func.func @transform_17(%arg0: i32) -> (i32, i32, i32) {
    %c0_i32 = arith.constant 0 : i32
    %c0_i32_0 = arith.constant 0 : i32
    %c0_i32_1 = arith.constant 0 : i32
    return %arg0, %c0_i32, %c0_i32_0 : i32, i32, i32
  }
}

</mosaic_0001>

<llo_original>
// kernel: tpu_custom_call.1
$region0: #{tpu_custom_call.1}
  #allocation0 [shape = 'u32[]', space=smem, size = 0x4, offset = 0x4, fixed_abs, tag = 'smem constant byte address 0x4 - core index']
  #allocation1 [shape = 'u32[144,128]{1,0:T(1,128)}', space=vmem, size = 0x12000, scoped, tag = 'internal scratch']
  %s0 = inlined_call_operand.hbm [shape: f32[2,8,32], index: 0, kind: input, shape index: {}]
  %s1 = inlined_call_operand.hbm [shape: f32[2,8,32], index: 1, kind: input, shape index: {}]
  %s2 = inlined_call_operand.vmem [shape: f32[32,96], index: 2, kind: input, shape index: {}]
  %s3 = inlined_call_operand.vmem [shape: f32[1,96], index: 3, kind: input, shape index: {}]
  %s4 = inlined_call_operand.vmem [shape: f32[32,32], index: 4, kind: input, shape index: {}]
  %s5 = inlined_call_operand.vmem [shape: f32[1,32], index: 5, kind: input, shape index: {}]
  %s6 = inlined_call_operand.vmem [shape: f32[32,32], index: 6, kind: input, shape index: {}]
  %s7 = inlined_call_operand.vmem [shape: f32[1,32], index: 7, kind: input, shape index: {}]
  %s8 = inlined_call_operand.vmem [shape: f32[32,64], index: 8, kind: input, shape index: {}]
  %s9 = inlined_call_operand.vmem [shape: f32[1,64], index: 9, kind: input, shape index: {}]
  %s10 = inlined_call_operand.vmem [shape: f32[32,32], index: 10, kind: input, shape index: {}]
  %s11 = inlined_call_operand.vmem [shape: f32[1,32], index: 11, kind: input, shape index: {}]
  %s12 = inlined_call_operand.vmem [shape: f32[6,32], index: 12, kind: input, shape index: {}]
  %s13 = inlined_call_operand.hbm [shape: f32[32,128], index: 13, kind: input, shape index: {}]
  %s14 = inlined_call_operand.vmem [shape: f32[1,128], index: 14, kind: input, shape index: {}]
  %s15 = inlined_call_operand.vmem [shape: f32[128,32], index: 15, kind: input, shape index: {}]
  %s16 = inlined_call_operand.vmem [shape: f32[1,32], index: 16, kind: input, shape index: {}]
  %s17 = inlined_call_operand.hbm [shape: f32[2,8,32], index: 17, kind: output, shape index: {}]
  %s18 = sld [smem:[#allocation0]]
  $region90: #{tpu_custom_call.1} parent=0
    _
  %s20 = ssub.s32 1, %s18
  %s21 = scalar_select 0, %s20, %s18
  $region1: #{tpu_custom_call.1} parent=0
    #allocation2 [shape = 'u8[8192]{0}', space=vmem, size = 0x2000, scoped, tag = 'input window, operand 0, single buffered']
    #allocation3 [shape = 's32[1]{0}', space=sflag, size = 0x4, scoped, tag = 'scoped memory for tpu_custom_call.1']
    #allocation4 [shape = 's32[1]{0}', space=sflag, size = 0x4, scoped, tag = 'scoped memory for tpu_custom_call.1']
    #allocation5 [shape = 'u8[8192]{0}', space=vmem, size = 0x2000, scoped, tag = 'input window, operand 1, single buffered']
    #allocation6 [shape = 's32[1]{0}', space=sflag, size = 0x4, scoped, tag = 'scoped memory for tpu_custom_call.1']
    #allocation7 [shape = 'u8[16384]{0}', space=vmem, size = 0x4000, scoped, tag = 'input window, operand 13, single buffered']
    #allocation8 [shape = 'u8[8192]{0}', space=vmem, size = 0x2000, scoped, tag = 'output window, operand 0, single buffered']
    %22 = vsyncpa [#allocation3], 0
    %23 = vsyncpa [#allocation6], 0
    %24 = vsyncpa [#allocation4], 0
    // Predicated region
    $region2: #{tpu_custom_call.1} parent=1 // pred_check
      _
    $region3: #{tpu_custom_call.1} parent=1 // pred_check_branch
      %26 = sbr.rel (0) target = $region5
    $region4: #{tpu_custom_call.1} parent=1 // pred_region
      %s28 = ssub.s32 256, 256
      %29 = vsyncadd [#allocation3], %s28
      %s30 = sshll.u32 [#allocation2], 4
      %s31 = int_to_ptr.vmem [resolvable:$true] %s30
      %36 = dma.hbm_to_vmem [thread:$0]  %s0, 256, %s31, [#allocation3], 128, 128, 8
    $region5: #{tpu_custom_call.1} parent=1 // pred_fallthru
      _
    // Predicated region
    $region6: #{tpu_custom_call.1} parent=1 // pred_check
      _
    $region7: #{tpu_custom_call.1} parent=1 // pred_check_branch
      %38 = sbr.rel (0) target = $region9
    $region8: #{tpu_custom_call.1} parent=1 // pred_region
      %s40 = ssub.s32 256, 256
      %41 = vsyncadd [#allocation6], %s40
      %s42 = sshll.u32 [#allocation5], 4
      %s43 = int_to_ptr.vmem [resolvable:$true] %s42
      %48 = dma.hbm_to_vmem [thread:$0]  %s1, 256, %s43, [#allocation6], 128, 128, 8
    $region9: #{tpu_custom_call.1} parent=1 // pred_fallthru
      _
    // Predicated region
    $region10: #{tpu_custom_call.1} parent=1 // pred_check
      _
    $region11: #{tpu_custom_call.1} parent=1 // pred_check_branch
      %50 = sbr.rel (0) target = $region13
    $region12: #{tpu_custom_call.1} parent=1 // pred_region
      _
    $region13: #{tpu_custom_call.1} parent=1 // pred_fallthru
      _
    // Predicated region
    $region14: #{tpu_custom_call.1} parent=1 // pred_check
      _
    $region15: #{tpu_custom_call.1} parent=1 // pred_check_branch
      %52 = sbr.rel (0) target = $region17
    $region16: #{tpu_custom_call.1} parent=1 // pred_region
      _
    $region17: #{tpu_custom_call.1} parent=1 // pred_fallthru
      _
    // Predicated region
    $region18: #{tpu_custom_call.1} parent=1 // pred_check
      _
    $region19: #{tpu_custom_call.1} parent=1 // pred_check_branch
      %54 = sbr.rel (0) target = $region21
    $region20: #{tpu_custom_call.1} parent=1 // pred_region
      _
    $region21: #{tpu_custom_call.1} parent=1 // pred_fallthru
      _
    // Predicated region
    $region22: #{tpu_custom_call.1} parent=1 // pred_check
      _
    $region23: #{tpu_custom_call.1} parent=1 // pred_check_branch
      %56 = sbr.rel (0) target = $region25
    $region24: #{tpu_custom_call.1} parent=1 // pred_region
      _
    $region25: #{tpu_custom_call.1} parent=1 // pred_fallthru
      _
    // Predicated region
    $region26: #{tpu_custom_call.1} parent=1 // pred_check
      _
    $region27: #{tpu_custom_call.1} parent=1 // pred_check_branch
      %58 = sbr.rel (0) target = $region29
    $region28: #{tpu_custom_call.1} parent=1 // pred_region
      _
    $region29: #{tpu_custom_call.1} parent=1 // pred_fallthru
      _
    // Predicated region
    $region30: #{tpu_custom_call.1} parent=1 // pred_check
      _
    $region31: #{tpu_custom_call.1} parent=1 // pred_check_branch
      %60 = sbr.rel (0) target = $region33
    $region32: #{tpu_custom_call.1} parent=1 // pred_region
      _
    $region33: #{tpu_custom_call.1} parent=1 // pred_fallthru
      _
    // Predicated region
    $region34: #{tpu_custom_call.1} parent=1 // pred_check
      _
    $region35: #{tpu_custom_call.1} parent=1 // pred_check_branch
      %62 = sbr.rel (0) target = $region37
    $region36: #{tpu_custom_call.1} parent=1 // pred_region
      _
    $region37: #{tpu_custom_call.1} parent=1 // pred_fallthru
      _
    // Predicated region
    $region38: #{tpu_custom_call.1} parent=1 // pred_check
      _
    $region39: #{tpu_custom_call.1} parent=1 // pred_check_branch
      %64 = sbr.rel (0) target = $region41
    $region40: #{tpu_custom_call.1} parent=1 // pred_region
      _
    $region41: #{tpu_custom_call.1} parent=1 // pred_fallthru
      _
    // Predicated region
    $region42: #{tpu_custom_call.1} parent=1 // pred_check
      _
    $region43: #{tpu_custom_call.1} parent=1 // pred_check_branch
      %66 = sbr.rel (0) target = $region45
    $region44: #{tpu_custom_call.1} parent=1 // pred_region
      _
    $region45: #{tpu_custom_call.1} parent=1 // pred_fallthru
      _
    // Predicated region
    $region46: #{tpu_custom_call.1} parent=1 // pred_check
      _
    $region47: #{tpu_custom_call.1} parent=1 // pred_check_branch
      %68 = sbr.rel (0) target = $region49
    $region48: #{tpu_custom_call.1} parent=1 // pred_region
      _
    $region49: #{tpu_custom_call.1} parent=1 // pred_fallthru
      _
    // Predicated region
    $region50: #{tpu_custom_call.1} parent=1 // pred_check
      _
    $region51: #{tpu_custom_call.1} parent=1 // pred_check_branch
      %70 = sbr.rel (0) target = $region53
    $region52: #{tpu_custom_call.1} parent=1 // pred_region
      _
    $region53: #{tpu_custom_call.1} parent=1 // pred_fallthru
      _
    // Predicated region
    $region54: #{tpu_custom_call.1} parent=1 // pred_check
      _
    $region55: #{tpu_custom_call.1} parent=1 // pred_check_branch
      %72 = sbr.rel (0) target = $region57
    $region56: #{tpu_custom_call.1} parent=1 // pred_region
      %s74 = ssub.s32 512, 512
      %75 = vsyncadd [#allocation6], %s74
      %s76 = sshll.u32 [#allocation7], 4
      %s77 = int_to_ptr.vmem [resolvable:$true] %s76
      %82 = dma.hbm_to_vmem [thread:$0]  %s13, 512, %s77, [#allocation6], 128, 128, 8
    $region57: #{tpu_custom_call.1} parent=1 // pred_fallthru
      _
    // Predicated region
    $region58: #{tpu_custom_call.1} parent=1 // pred_check
      _
    $region59: #{tpu_custom_call.1} parent=1 // pred_check_branch
      %84 = sbr.rel (0) target = $region61
    $region60: #{tpu_custom_call.1} parent=1 // pred_region
      _
    $region61: #{tpu_custom_call.1} parent=1 // pred_fallthru
      _
    // Predicated region
    $region62: #{tpu_custom_call.1} parent=1 // pred_check
      _
    $region63: #{tpu_custom_call.1} parent=1 // pred_check_branch
      %86 = sbr.rel (0) target = $region65
    $region64: #{tpu_custom_call.1} parent=1 // pred_region
      _
    $region65: #{tpu_custom_call.1} parent=1 // pred_fallthru
      _
    // Predicated region
    $region66: #{tpu_custom_call.1} parent=1 // pred_check
      _
    $region67: #{tpu_custom_call.1} parent=1 // pred_check_branch
      %88 = sbr.rel (0) target = $region69
    $region68: #{tpu_custom_call.1} parent=1 // pred_region
      _
    $region69: #{tpu_custom_call.1} parent=1 // pred_fallthru
      _
    // Predicated region
    $region70: #{tpu_custom_call.1} parent=1 // pred_check
      _
    $region71: #{tpu_custom_call.1} parent=1 // pred_check_branch
      %90 = sbr.rel (0) target = $region73
    $region72: #{tpu_custom_call.1} parent=1 // pred_region
      %91 = dma.done [#allocation3], 256
    $region73: #{tpu_custom_call.1} parent=1 // pred_fallthru
      _
    // Predicated region
    $region74: #{tpu_custom_call.1} parent=1 // pred_check
      _
    $region75: #{tpu_custom_call.1} parent=1 // pred_check_branch
      %93 = sbr.rel (0) target = $region77
    $region76: #{tpu_custom_call.1} parent=1 // pred_region
      %94 = dma.done [#allocation6], 256
    $region77: #{tpu_custom_call.1} parent=1 // pred_fallthru
      _
    // Predicated region
    $region78: #{tpu_custom_call.1} parent=1 // pred_check
      _
    $region79: #{tpu_custom_call.1} parent=1 // pred_check_branch
      %96 = sbr.rel (0) target = $region81
    $region80: #{tpu_custom_call.1} parent=1 // pred_region
      %97 = dma.done [#allocation6], 512
    $region81: #{tpu_custom_call.1} parent=1 // pred_fallthru
      _
    %v98 = vld [vmem:[#allocation2] sm:$0xff]
    %v99 = vld [vmem:[#allocation2 + $0x8] sm:$0xff]
    %v100 = vld [vmem:[#allocation5] sm:$0xff]
    %v101 = vld [vmem:[#allocation5 + $0x8] sm:$0xff]
    %v102 = vld [vmem:[%s2] sm:$0xff]
    %v103 = vld [vmem:[%s2 + $0x8] sm:$0xff]
    %v104 = vld [vmem:[%s2 + $0x10] sm:$0xff]
    %v105 = vld [vmem:[%s2 + $0x18] sm:$0xff]
    %v106 = vld [vmem:[%s3] sm:$0x1]
    %v108 = vlaneseq
    %v109 = vshrl.u32 %v108, 7
    %v110 = vsub.s32 0, %v109
    %v111 = vrot.slane %v106, %v110
    %vm113 = vcmask 261120
    %v115 = vsel %vm113, %v98, 0
    %v118 = vsel %vm113, %v99, 0
    %120 = vmatprep.subr.mxu0 0.0
    %121 = vmatpush1.msra.mxu0 %v102
    %122 = vmatprep.subr.mxu0 0.0
    %123 = vmatpush1.msra.mxu0 %v103
    %124 = vmatprep.subr.mxu0 0.0
    %125 = vmatpush1.msra.mxu0 %v104
    %126 = vmatprep.subr.mxu0 0.0
    %127 = vmatpush1.msra.mxu0 %v105
    %128 = vmatprep.subr.mxu0 0.0
    %129 = vmatpush1.msra.mxu0 0.0
    %130 = vmatprep.subr.mxu0 0.0
    %131 = vmatpush1.msra.mxu0 0.0
    %132 = vmatprep.subr.mxu0 0.0
    %133 = vmatpush1.msra.mxu0 0.0
    %134 = vmatprep.subr.mxu0 0.0
    %135 = vmatpush1.msra.mxu0 0.0
    %136 = vmatprep.subr.mxu0 0.0
    %137 = vmatpush1.msra.mxu0 0.0
    %138 = vmatprep.subr.mxu0 0.0
    %139 = vmatpush1.msra.mxu0 0.0
    %140 = vmatprep.subr.mxu0 0.0
    %141 = vmatpush1.msra.mxu0 0.0
    %142 = vmatprep.subr.mxu0 0.0
    %143 = vmatpush1.msra.mxu0 0.0
    %144 = vmatprep.subr.mxu0 0.0
    %145 = vmatpush1.msra.mxu0 0.0
    %146 = vmatprep.subr.mxu0 0.0
    %147 = vmatpush1.msra.mxu0 0.0
    %148 = vmatprep.subr.mxu0 0.0
    %149 = vmatpush1.msra.mxu0 0.0
    %150 = vmatprep.subr.mxu0 0.0
    %151 = vmatpush1.msra.mxu0 0.0
    %152 = vmatprep.subr.mxu0 0.0
    %153 = vmatpush1.msra.mxu0 0.0
    %154 = vmatprep.subr.mxu0 0.0
    %155 = vmatpush1.msra.mxu0 0.0
    %156 = vmatprep.subr.mxu0 0.0
    %157 = vmatpush1.msra.mxu0 0.0
    %158 = vmatprep.subr.mxu0 0.0
    %159 = vmatpush1.msra.mxu0 0.0
    %160 = vmatprep.subr.mxu0 0.0
    %161 = vmatpush1.msra.mxu0 0.0
    %162 = vmatprep.subr.mxu0 0.0
    %163 = vmatpush1.msra.mxu0 0.0
    %164 = vmatprep.subr.mxu0 0.0
    %165 = vmatpush1.msra.mxu0 0.0
    %166 = vmatprep.subr.mxu0 0.0
    %167 = vmatpush1.msra.mxu0 0.0
    %168 = vmatprep.subr.mxu0 0.0
    %169 = vmatpush1.msra.mxu0 0.0
    %170 = vmatprep.subr.mxu0 0.0
    %171 = vmatpush1.msra.mxu0 0.0
    %172 = vmatprep.subr.mxu0 0.0
    %173 = vmatpush1.msra.mxu0 0.0
    %174 = vmatprep.subr.mxu0 0.0
    %175 = vmatpush1.msra.mxu0 0.0
    %176 = vmatprep.subr.mxu0 0.0
    %177 = vmatpush1.msra.mxu0 0.0
    %178 = vmatprep.subr.mxu0 0.0
    %179 = vmatpush1.msra.mxu0 0.0
    %180 = vmatprep.subr.mxu0 0.0
    %181 = vmatpush1.msra.mxu0 0.0
    %182 = vmatprep.subr.mxu0 0.0
    %183 = vmatpush1.msra.mxu0 0.0
    %184 = vmatprep.mubr.f32.mxu0 0.0
    %185 = vmatmul.mubr.f32.gmra.mrb[0].mxu0 %v115
    %v186 = vpop.f32.mrb[0].mxu0
    %v187 = vadd.f32 %v111, %v186
    %v188 = vpop.f32.mrb[0].mxu0
    %189 = vmatprep.mubr.f32.mxu0 0.0
    %190 = vmatmul.mubr.f32.gmra.mrb[0].mxu0 %v118
    %v191 = vpop.f32.mrb[0].mxu0
    %v192 = vadd.f32 %v111, %v191
    %v193 = vpop.f32.mrb[0].mxu0
    %194 = vdwg.mxu0
    %v195 = vld [vmem:[%s4] sm:$0xff]
    %v196 = vld [vmem:[%s4 + $0x8] sm:$0xff]
    %v197 = vld [vmem:[%s4 + $0x10] sm:$0xff]
    %v198 = vld [vmem:[%s4 + $0x18] sm:$0xff]
    %v199 = vld [vmem:[%s5] sm:$0x1]
    %201 = vrot.lane.b32.xlu0 %v187, 96
    %v202 = vpop.permute.xlu0 %201
    %vm203 = vcmask 64512
    %v204 = vsel %vm203, %v187, 0
    %v206 = vsel %vm203, %v202, 0
    %208 = vmatprep.subr.mxu0 0.0
    %209 = vmatpush1.xpose.msra.mxu0 %v206
    %210 = vmatprep.subr.mxu0 0.0
    %211 = vmatpush1.xpose.msra.mxu0 0.0
    %212 = vmatprep.subr.mxu0 0.0
    %213 = vmatpush1.xpose.msra.mxu0 0.0
    %214 = vmatprep.subr.mxu0 0.0
    %215 = vmatpush1.xpose.msra.mxu0 0.0
    %216 = vmatprep.subr.mxu0 0.0
    %217 = vmatpush1.xpose.msra.mxu0 0.0
    %218 = vmatprep.subr.mxu0 0.0
    %219 = vmatpush1.xpose.msra.mxu0 0.0
    %220 = vmatprep.subr.mxu0 0.0
    %221 = vmatpush1.xpose.msra.mxu0 0.0
    %222 = vmatprep.subr.mxu0 0.0
    %223 = vmatpush1.xpose.msra.mxu0 0.0
    %224 = vmatprep.subr.mxu0 0.0
    %225 = vmatpush1.xpose.msra.mxu0 0.0
    %226 = vmatprep.subr.mxu0 0.0
    %227 = vmatpush1.xpose.msra.mxu0 0.0
    %228 = vmatprep.subr.mxu0 0.0
    %229 = vmatpush1.xpose.msra.mxu0 0.0
    %230 = vmatprep.subr.mxu0 0.0
    %231 = vmatpush1.xpose.msra.mxu0 0.0
    %232 = vmatprep.subr.mxu0 0.0
    %233 = vmatpush1.xpose.msra.mxu0 0.0
    %234 = vmatprep.subr.mxu0 0.0
    %235 = vmatpush1.xpose.msra.mxu0 0.0
    %236 = vmatprep.subr.mxu0 0.0
    %237 = vmatpush1.xpose.msra.mxu0 0.0
    %238 = vmatprep.subr.mxu0 0.0
    %239 = vmatpush1.xpose.msra.mxu0 0.0
    %240 = vmatprep.subr.mxu0 0.0
    %241 = vmatpush1.xpose.msra.mxu0 0.0
    %242 = vmatprep.subr.mxu0 0.0
    %243 = vmatpush1.xpose.msra.mxu0 0.0
    %244 = vmatprep.subr.mxu0 0.0
    %245 = vmatpush1.xpose.msra.mxu0 0.0
    %246 = vmatprep.subr.mxu0 0.0
    %247 = vmatpush1.xpose.msra.mxu0 0.0
    %248 = vmatprep.subr.mxu0 0.0
    %249 = vmatpush1.xpose.msra.mxu0 0.0
    %250 = vmatprep.subr.mxu0 0.0
    %251 = vmatpush1.xpose.msra.mxu0 0.0
    %252 = vmatprep.subr.mxu0 0.0
    %253 = vmatpush1.xpose.msra.mxu0 0.0
    %254 = vmatprep.subr.mxu0 0.0
    %255 = vmatpush1.xpose.msra.mxu0 0.0
    %256 = vmatprep.subr.mxu0 0.0
    %257 = vmatpush1.xpose.msra.mxu0 0.0
    %258 = vmatprep.subr.mxu0 0.0
    %259 = vmatpush1.xpose.msra.mxu0 0.0
    %260 = vmatprep.subr.mxu0 0.0
    %261 = vmatpush1.xpose.msra.mxu0 0.0
    %262 = vmatprep.subr.mxu0 0.0
    %263 = vmatpush1.xpose.msra.mxu0 0.0
    %264 = vmatprep.subr.mxu0 0.0
    %265 = vmatpush1.xpose.msra.mxu0 0.0
    %266 = vmatprep.subr.mxu0 0.0
    %267 = vmatpush1.xpose.msra.mxu0 0.0
    %268 = vmatprep.subr.mxu0 0.0
    %269 = vmatpush1.xpose.msra.mxu0 0.0
    %270 = vmatprep.subr.mxu0 0.0
    %271 = vmatpush1.xpose.msra.mxu0 0.0
    %272 = vmatprep.mubr.f32.mxu0 0.0
    %273 = vmatmul.mubr.f32.gmra.mrb[0].mxu0 %v204
    %v274 = vpop.f32.mrb[0].mxu0
    %v275 = vadd.f32 0.0, %v274
    %v276 = vpop.f32.mrb[0].mxu0
    %277 = vdwg.mxu0
    %279 = vrot.lane.b32.xlu0 %v192, 96
    %v280 = vpop.permute.xlu0 %279
    %v281 = vsel %vm203, %v192, 0
    %v283 = vsel %vm203, %v280, 0
    %285 = vmatprep.subr.mxu0 0.0
    %286 = vmatpush1.xpose.msra.mxu0 %v283
    %287 = vmatprep.subr.mxu0 0.0
    %288 = vmatpush1.xpose.msra.mxu0 0.0
    %289 = vmatprep.subr.mxu0 0.0
    %290 = vmatpush1.xpose.msra.mxu0 0.0
    %291 = vmatprep.subr.mxu0 0.0
    %292 = vmatpush1.xpose.msra.mxu0 0.0
    %293 = vmatprep.subr.mxu0 0.0
    %294 = vmatpush1.xpose.msra.mxu0 0.0
    %295 = vmatprep.subr.mxu0 0.0
    %296 = vmatpush1.xpose.msra.mxu0 0.0
    %297 = vmatprep.subr.mxu0 0.0
    %298 = vmatpush1.xpose.msra.mxu0 0.0
    %299 = vmatprep.subr.mxu0 0.0
    %300 = vmatpush1.xpose.msra.mxu0 0.0
    %301 = vmatprep.subr.mxu0 0.0
    %302 = vmatpush1.xpose.msra.mxu0 0.0
    %303 = vmatprep.subr.mxu0 0.0
    %304 = vmatpush1.xpose.msra.mxu0 0.0
    %305 = vmatprep.subr.mxu0 0.0
    %306 = vmatpush1.xpose.msra.mxu0 0.0
    %307 = vmatprep.subr.mxu0 0.0
    %308 = vmatpush1.xpose.msra.mxu0 0.0
    %309 = vmatprep.subr.mxu0 0.0
    %310 = vmatpush1.xpose.msra.mxu0 0.0
    %311 = vmatprep.subr.mxu0 0.0
    %312 = vmatpush1.xpose.msra.mxu0 0.0
    %313 = vmatprep.subr.mxu0 0.0
    %314 = vmatpush1.xpose.msra.mxu0 0.0
    %315 = vmatprep.subr.mxu0 0.0
    %316 = vmatpush1.xpose.msra.mxu0 0.0
    %317 = vmatprep.subr.mxu0 0.0
    %318 = vmatpush1.xpose.msra.mxu0 0.0
    %319 = vmatprep.subr.mxu0 0.0
    %320 = vmatpush1.xpose.msra.mxu0 0.0
    %321 = vmatprep.subr.mxu0 0.0
    %322 = vmatpush1.xpose.msra.mxu0 0.0
    %323 = vmatprep.subr.mxu0 0.0
    %324 = vmatpush1.xpose.msra.mxu0 0.0
    %325 = vmatprep.subr.mxu0 0.0
    %326 = vmatpush1.xpose.msra.mxu0 0.0
    %327 = vmatprep.subr.mxu0 0.0
    %328 = vmatpush1.xpose.msra.mxu0 0.0
    %329 = vmatprep.subr.mxu0 0.0
    %330 = vmatpush1.xpose.msra.mxu0 0.0
    %331 = vmatprep.subr.mxu0 0.0
    %332 = vmatpush1.xpose.msra.mxu0 0.0
    %333 = vmatprep.subr.mxu0 0.0
    %334 = vmatpush1.xpose.msra.mxu0 0.0
    %335 = vmatprep.subr.mxu0 0.0
    %336 = vmatpush1.xpose.msra.mxu0 0.0
    %337 = vmatprep.subr.mxu0 0.0
    %338 = vmatpush1.xpose.msra.mxu0 0.0
    %339 = vmatprep.subr.mxu0 0.0
    %340 = vmatpush1.xpose.msra.mxu0 0.0
    %341 = vmatprep.subr.mxu0 0.0
    %342 = vmatpush1.xpose.msra.mxu0 0.0
    %343 = vmatprep.subr.mxu0 0.0
    %344 = vmatpush1.xpose.msra.mxu0 0.0
    %345 = vmatprep.subr.mxu0 0.0
    %346 = vmatpush1.xpose.msra.mxu0 0.0
    %347 = vmatprep.subr.mxu0 0.0
    %348 = vmatpush1.xpose.msra.mxu0 0.0
    %349 = vmatprep.mubr.f32.mxu0 0.0
    %350 = vmatmul.mubr.f32.gmra.mrb[0].mxu0 %v281
    %v351 = vpop.f32.mrb[0].mxu0
    %v352 = vadd.f32 0.0, %v351
    %v353 = vpop.f32.mrb[0].mxu0
    %354 = vdwg.mxu0
    %v355 = vmul.f32 %v275, 0.35355338
    %v356 = vmul.f32 %v352, 0.35355338
    %v357 = vsel %vm203, %v355, -inf
    %358 = vmax.xlane.f32.xlu0 %v357
    %v359 = vpop.xlane.xlu0 %358
    %v360 = vsel %vm203, %v356, -inf
    %361 = vmax.xlane.f32.xlu0 %v360
    %v362 = vpop.xlane.xlu0 %361
    %v363 = vsub.f32 %v355, %v359
    %v364 = vsub.f32 %v356, %v362
    %v365 = vmul.f32 %v363, 1.442695
    %v366 = vpow.pop %v365
    %v367 = vmul.f32 %v364, 1.442695
    %v368 = vpow.pop %v367
    %v369 = vsel %vm203, %v366, 0.0
    %370 = vadd.xlane.f32.xlu0 %v369
    %v371 = vpop.xlane.xlu0 %370
    %v372 = vsel %vm203, %v368, 0.0
    %373 = vadd.xlane.f32.xlu0 %v372
    %v374 = vpop.xlane.xlu0 %373
    %v375 = vrcp.pop %v371
    %v376 = vrcp.pop %v374
    %v377 = vmul.f32 %v366, %v375
    %v378 = vmul.f32 %v368, %v376
    %379 = vrot.lane.b32.xlu0 %v187, 64
    %v380 = vpop.permute.xlu0 %379
    %v383 = vsel %vm203, %v377, 0
    %385 = vmatprep.subr.mxu0 0.0
    %386 = vmatpush1.msra.mxu0 %v380
    %387 = vmatprep.subr.mxu0 0.0
    %388 = vmatpush1.msra.mxu0 0.0
    %389 = vmatprep.subr.mxu0 0.0
    %390 = vmatpush1.msra.mxu0 0.0
    %391 = vmatprep.subr.mxu0 0.0
    %392 = vmatpush1.msra.mxu0 0.0
    %393 = vmatprep.subr.mxu0 0.0
    %394 = vmatpush1.msra.mxu0 0.0
    %395 = vmatprep.subr.mxu0 0.0
    %396 = vmatpush1.msra.mxu0 0.0
    %397 = vmatprep.subr.mxu0 0.0
    %398 = vmatpush1.msra.mxu0 0.0
    %399 = vmatprep.subr.mxu0 0.0
    %400 = vmatpush1.msra.mxu0 0.0
    %401 = vmatprep.subr.mxu0 0.0
    %402 = vmatpush1.msra.mxu0 0.0
    %403 = vmatprep.subr.mxu0 0.0
    %404 = vmatpush1.msra.mxu0 0.0
    %405 = vmatprep.subr.mxu0 0.0
    %406 = vmatpush1.msra.mxu0 0.0
    %407 = vmatprep.subr.mxu0 0.0
    %408 = vmatpush1.msra.mxu0 0.0
    %409 = vmatprep.subr.mxu0 0.0
    %410 = vmatpush1.msra.mxu0 0.0
    %411 = vmatprep.subr.mxu0 0.0
    %412 = vmatpush1.msra.mxu0 0.0
    %413 = vmatprep.subr.mxu0 0.0
    %414 = vmatpush1.msra.mxu0 0.0
    %415 = vmatprep.subr.mxu0 0.0
    %416 = vmatpush1.msra.mxu0 0.0
    %417 = vmatprep.subr.mxu0 0.0
    %418 = vmatpush1.msra.mxu0 0.0
    %419 = vmatprep.subr.mxu0 0.0
    %420 = vmatpush1.msra.mxu0 0.0
    %421 = vmatprep.subr.mxu0 0.0
    %422 = vmatpush1.msra.mxu0 0.0
    %423 = vmatprep.subr.mxu0 0.0
    %424 = vmatpush1.msra.mxu0 0.0
    %425 = vmatprep.subr.mxu0 0.0
    %426 = vmatpush1.msra.mxu0 0.0
    %427 = vmatprep.subr.mxu0 0.0
    %428 = vmatpush1.msra.mxu0 0.0
    %429 = vmatprep.subr.mxu0 0.0
    %430 = vmatpush1.msra.mxu0 0.0
    %431 = vmatprep.subr.mxu0 0.0
    %432 = vmatpush1.msra.mxu0 0.0
    %433 = vmatprep.subr.mxu0 0.0
    %434 = vmatpush1.msra.mxu0 0.0
    %435 = vmatprep.subr.mxu0 0.0
    %436 = vmatpush1.msra.mxu0 0.0
    %437 = vmatprep.subr.mxu0 0.0
    %438 = vmatpush1.msra.mxu0 0.0
    %439 = vmatprep.subr.mxu0 0.0
    %440 = vmatpush1.msra.mxu0 0.0
    %441 = vmatprep.subr.mxu0 0.0
    %442 = vmatpush1.msra.mxu0 0.0
    %443 = vmatprep.subr.mxu0 0.0
    %444 = vmatpush1.msra.mxu0 0.0
    %445 = vmatprep.subr.mxu0 0.0
    %446 = vmatpush1.msra.mxu0 0.0
    %447 = vmatprep.subr.mxu0 0.0
    %448 = vmatpush1.msra.mxu0 0.0
    %449 = vmatprep.mubr.f32.mxu0 0.0
    %450 = vmatmul.mubr.f32.gmra.mrb[0].mxu0 %v383
    %v451 = vpop.f32.mrb[0].mxu0
    %v452 = vadd.f32 0.0, %v451
    %v453 = vpop.f32.mrb[0].mxu0
    %454 = vdwg.mxu0
    %455 = vrot.lane.b32.xlu0 %v192, 64
    %v456 = vpop.permute.xlu0 %455
    %v459 = vsel %vm203, %v378, 0
    %461 = vmatprep.subr.mxu0 0.0
    %462 = vmatpush1.msra.mxu0 %v456
    %463 = vmatprep.subr.mxu0 0.0
    %464 = vmatpush1.msra.mxu0 0.0
    %465 = vmatprep.subr.mxu0 0.0
    %466 = vmatpush1.msra.mxu0 0.0
    %467 = vmatprep.subr.mxu0 0.0
    %468 = vmatpush1.msra.mxu0 0.0
    %469 = vmatprep.subr.mxu0 0.0
    %470 = vmatpush1.msra.mxu0 0.0
    %471 = vmatprep.subr.mxu0 0.0
    %472 = vmatpush1.msra.mxu0 0.0
    %473 = vmatprep.subr.mxu0 0.0
    %474 = vmatpush1.msra.mxu0 0.0
    %475 = vmatprep.subr.mxu0 0.0
    %476 = vmatpush1.msra.mxu0 0.0
    %477 = vmatprep.subr.mxu0 0.0
    %478 = vmatpush1.msra.mxu0 0.0
    %479 = vmatprep.subr.mxu0 0.0
    %480 = vmatpush1.msra.mxu0 0.0
    %481 = vmatprep.subr.mxu0 0.0
    %482 = vmatpush1.msra.mxu0 0.0
    %483 = vmatprep.subr.mxu0 0.0
    %484 = vmatpush1.msra.mxu0 0.0
    %485 = vmatprep.subr.mxu0 0.0
    %486 = vmatpush1.msra.mxu0 0.0
    %487 = vmatprep.subr.mxu0 0.0
    %488 = vmatpush1.msra.mxu0 0.0
    %489 = vmatprep.subr.mxu0 0.0
    %490 = vmatpush1.msra.mxu0 0.0
    %491 = vmatprep.subr.mxu0 0.0
    %492 = vmatpush1.msra.mxu0 0.0
    %493 = vmatprep.subr.mxu0 0.0
    %494 = vmatpush1.msra.mxu0 0.0
    %495 = vmatprep.subr.mxu0 0.0
    %496 = vmatpush1.msra.mxu0 0.0
    %497 = vmatprep.subr.mxu0 0.0
    %498 = vmatpush1.msra.mxu0 0.0
    %499 = vmatprep.subr.mxu0 0.0
    %500 = vmatpush1.msra.mxu0 0.0
    %501 = vmatprep.subr.mxu0 0.0
    %502 = vmatpush1.msra.mxu0 0.0
    %503 = vmatprep.subr.mxu0 0.0
    %504 = vmatpush1.msra.mxu0 0.0
    %505 = vmatprep.subr.mxu0 0.0
    %506 = vmatpush1.msra.mxu0 0.0
    %507 = vmatprep.subr.mxu0 0.0
    %508 = vmatpush1.msra.mxu0 0.0
    %509 = vmatprep.subr.mxu0 0.0
    %510 = vmatpush1.msra.mxu0 0.0
    %511 = vmatprep.subr.mxu0 0.0
    %512 = vmatpush1.msra.mxu0 0.0
    %513 = vmatprep.subr.mxu0 0.0
    %514 = vmatpush1.msra.mxu0 0.0
    %515 = vmatprep.subr.mxu0 0.0
    %516 = vmatpush1.msra.mxu0 0.0
    %517 = vmatprep.subr.mxu0 0.0
    %518 = vmatpush1.msra.mxu0 0.0
    %519 = vmatprep.subr.mxu0 0.0
    %520 = vmatpush1.msra.mxu0 0.0
    %521 = vmatprep.subr.mxu0 0.0
    %522 = vmatpush1.msra.mxu0 0.0
    %523 = vmatprep.subr.mxu0 0.0
    %524 = vmatpush1.msra.mxu0 0.0
    %525 = vmatprep.mubr.f32.mxu0 0.0
    %526 = vmatmul.mubr.f32.gmra.mrb[0].mxu0 %v459
    %v527 = vpop.f32.mrb[0].mxu0
    %v528 = vadd.f32 0.0, %v527
    %v529 = vpop.f32.mrb[0].mxu0
    %530 = vdwg.mxu0
    %531 = vrot.lane.b32.xlu0 %v187, 120
    %v532 = vpop.permute.xlu0 %531
    %533 = vrot.lane.b32.xlu0 %v187, 88
    %v534 = vpop.permute.xlu0 %533
    %v535 = vsel %vm203, %v532, 0
    %v537 = vsel %vm203, %v534, 0
    %539 = vmatprep.subr.mxu0 0.0
    %540 = vmatpush1.xpose.msra.mxu0 %v537
    %541 = vmatprep.subr.mxu0 0.0
    %542 = vmatpush1.xpose.msra.mxu0 0.0
    %543 = vmatprep.subr.mxu0 0.0
    %544 = vmatpush1.xpose.msra.mxu0 0.0
    %545 = vmatprep.subr.mxu0 0.0
    %546 = vmatpush1.xpose.msra.mxu0 0.0
    %547 = vmatprep.subr.mxu0 0.0
    %548 = vmatpush1.xpose.msra.mxu0 0.0
    %549 = vmatprep.subr.mxu0 0.0
    %550 = vmatpush1.xpose.msra.mxu0 0.0
    %551 = vmatprep.subr.mxu0 0.0
    %552 = vmatpush1.xpose.msra.mxu0 0.0
    %553 = vmatprep.subr.mxu0 0.0
    %554 = vmatpush1.xpose.msra.mxu0 0.0
    %555 = vmatprep.subr.mxu0 0.0
    %556 = vmatpush1.xpose.msra.mxu0 0.0
    %557 = vmatprep.subr.mxu0 0.0
    %558 = vmatpush1.xpose.msra.mxu0 0.0
    %559 = vmatprep.subr.mxu0 0.0
    %560 = vmatpush1.xpose.msra.mxu0 0.0
    %561 = vmatprep.subr.mxu0 0.0
    %562 = vmatpush1.xpose.msra.mxu0 0.0
    %563 = vmatprep.subr.mxu0 0.0
    %564 = vmatpush1.xpose.msra.mxu0 0.0
    %565 = vmatprep.subr.mxu0 0.0
    %566 = vmatpush1.xpose.msra.mxu0 0.0
    %567 = vmatprep.subr.mxu0 0.0
    %568 = vmatpush1.xpose.msra.mxu0 0.0
    %569 = vmatprep.subr.mxu0 0.0
    %570 = vmatpush1.xpose.msra.mxu0 0.0
    %571 = vmatprep.subr.mxu0 0.0
    %572 = vmatpush1.xpose.msra.mxu0 0.0
    %573 = vmatprep.subr.mxu0 0.0
    %574 = vmatpush1.xpose.msra.mxu0 0.0
    %575 = vmatprep.subr.mxu0 0.0
    %576 = vmatpush1.xpose.msra.mxu0 0.0
    %577 = vmatprep.subr.mxu0 0.0
    %578 = vmatpush1.xpose.msra.mxu0 0.0
    %579 = vmatprep.subr.mxu0 0.0
    %580 = vmatpush1.xpose.msra.mxu0 0.0
    %581 = vmatprep.subr.mxu0 0.0
    %582 = vmatpush1.xpose.msra.mxu0 0.0
    %583 = vmatprep.subr.mxu0 0.0
    %584 = vmatpush1.xpose.msra.mxu0 0.0
    %585 = vmatprep.subr.mxu0 0.0
    %586 = vmatpush1.xpose.msra.mxu0 0.0
    %587 = vmatprep.subr.mxu0 0.0
    %588 = vmatpush1.xpose.msra.mxu0 0.0
    %589 = vmatprep.subr.mxu0 0.0
    %590 = vmatpush1.xpose.msra.mxu0 0.0
    %591 = vmatprep.subr.mxu0 0.0
    %592 = vmatpush1.xpose.msra.mxu0 0.0
    %593 = vmatprep.subr.mxu0 0.0
    %594 = vmatpush1.xpose.msra.mxu0 0.0
    %595 = vmatprep.subr.mxu0 0.0
    %596 = vmatpush1.xpose.msra.mxu0 0.0
    %597 = vmatprep.subr.mxu0 0.0
    %598 = vmatpush1.xpose.msra.mxu0 0.0
    %599 = vmatprep.subr.mxu0 0.0
    %600 = vmatpush1.xpose.msra.mxu0 0.0
    %601 = vmatprep.subr.mxu0 0.0
    %602 = vmatpush1.xpose.msra.mxu0 0.0
    %603 = vmatprep.mubr.f32.mxu0 0.0
    %604 = vmatmul.mubr.f32.gmra.mrb[0].mxu0 %v535
    %v605 = vpop.f32.mrb[0].mxu0
    %v606 = vadd.f32 0.0, %v605
    %v607 = vpop.f32.mrb[0].mxu0
    %608 = vdwg.mxu0
    %609 = vrot.lane.b32.xlu0 %v192, 120
    %v610 = vpop.permute.xlu0 %609
    %611 = vrot.lane.b32.xlu0 %v192, 88
    %v612 = vpop.permute.xlu0 %611
    %v613 = vsel %vm203, %v610, 0
    %v615 = vsel %vm203, %v612, 0
    %617 = vmatprep.subr.mxu0 0.0
    %618 = vmatpush1.xpose.msra.mxu0 %v615
    %619 = vmatprep.subr.mxu0 0.0
    %620 = vmatpush1.xpose.msra.mxu0 0.0
    %621 = vmatprep.subr.mxu0 0.0
    %622 = vmatpush1.xpose.msra.mxu0 0.0
    %623 = vmatprep.subr.mxu0 0.0
    %624 = vmatpush1.xpose.msra.mxu0 0.0
    %625 = vmatprep.subr.mxu0 0.0
    %626 = vmatpush1.xpose.msra.mxu0 0.0
    %627 = vmatprep.subr.mxu0 0.0
    %628 = vmatpush1.xpose.msra.mxu0 0.0
    %629 = vmatprep.subr.mxu0 0.0
    %630 = vmatpush1.xpose.msra.mxu0 0.0
    %631 = vmatprep.subr.mxu0 0.0
    %632 = vmatpush1.xpose.msra.mxu0 0.0
    %633 = vmatprep.subr.mxu0 0.0
    %634 = vmatpush1.xpose.msra.mxu0 0.0
    %635 = vmatprep.subr.mxu0 0.0
    %636 = vmatpush1.xpose.msra.mxu0 0.0
    %637 = vmatprep.subr.mxu0 0.0
    %638 = vmatpush1.xpose.msra.mxu0 0.0
    %639 = vmatprep.subr.mxu0 0.0
    %640 = vmatpush1.xpose.msra.mxu0 0.0
    %641 = vmatprep.subr.mxu0 0.0
    %642 = vmatpush1.xpose.msra.mxu0 0.0
    %643 = vmatprep.subr.mxu0 0.0
    %644 = vmatpush1.xpose.msra.mxu0 0.0
    %645 = vmatprep.subr.mxu0 0.0
    %646 = vmatpush1.xpose.msra.mxu0 0.0
    %647 = vmatprep.subr.mxu0 0.0
    %648 = vmatpush1.xpose.msra.mxu0 0.0
    %649 = vmatprep.subr.mxu0 0.0
    %650 = vmatpush1.xpose.msra.mxu0 0.0
    %651 = vmatprep.subr.mxu0 0.0
    %652 = vmatpush1.xpose.msra.mxu0 0.0
    %653 = vmatprep.subr.mxu0 0.0
    %654 = vmatpush1.xpose.msra.mxu0 0.0
    %655 = vmatprep.subr.mxu0 0.0
    %656 = vmatpush1.xpose.msra.mxu0 0.0
    %657 = vmatprep.subr.mxu0 0.0
    %658 = vmatpush1.xpose.msra.mxu0 0.0
    %659 = vmatprep.subr.mxu0 0.0
    %660 = vmatpush1.xpose.msra.mxu0 0.0
    %661 = vmatprep.subr.mxu0 0.0
    %662 = vmatpush1.xpose.msra.mxu0 0.0
    %663 = vmatprep.subr.mxu0 0.0
    %664 = vmatpush1.xpose.msra.mxu0 0.0
    %665 = vmatprep.subr.mxu0 0.0
    %666 = vmatpush1.xpose.msra.mxu0 0.0
    %667 = vmatprep.subr.mxu0 0.0
    %668 = vmatpush1.xpose.msra.mxu0 0.0
    %669 = vmatprep.subr.mxu0 0.0
    %670 = vmatpush1.xpose.msra.mxu0 0.0
    %671 = vmatprep.subr.mxu0 0.0
    %672 = vmatpush1.xpose.msra.mxu0 0.0
    %673 = vmatprep.subr.mxu0 0.0
    %674 = vmatpush1.xpose.msra.mxu0 0.0
    %675 = vmatprep.subr.mxu0 0.0
    %676 = vmatpush1.xpose.msra.mxu0 0.0
    %677 = vmatprep.subr.mxu0 0.0
    %678 = vmatpush1.xpose.msra.mxu0 0.0
    %679 = vmatprep.subr.mxu0 0.0
    %680 = vmatpush1.xpose.msra.mxu0 0.0
    %681 = vmatprep.mubr.f32.mxu0 0.0
    %682 = vmatmul.mubr.f32.gmra.mrb[0].mxu0 %v613
    %v683 = vpop.f32.mrb[0].mxu0
    %v684 = vadd.f32 0.0, %v683
    %v685 = vpop.f32.mrb[0].mxu0
    %686 = vdwg.mxu0
    %v687 = vmul.f32 %v606, 0.35355338
    %v688 = vmul.f32 %v684, 0.35355338
    %v689 = vsel %vm203, %v687, -inf
    %690 = vmax.xlane.f32.xlu0 %v689
    %v691 = vpop.xlane.xlu0 %690
    %v692 = vsel %vm203, %v688, -inf
    %693 = vmax.xlane.f32.xlu0 %v692
    %v694 = vpop.xlane.xlu0 %693
    %v695 = vsub.f32 %v687, %v691
    %v696 = vsub.f32 %v688, %v694
    %v697 = vmul.f32 %v695, 1.442695
    %v698 = vpow.pop %v697
    %v699 = vmul.f32 %v696, 1.442695
    %v700 = vpow.pop %v699
    %v701 = vsel %vm203, %v698, 0.0
    %702 = vadd.xlane.f32.xlu0 %v701
    %v703 = vpop.xlane.xlu0 %702
    %v704 = vsel %vm203, %v700, 0.0
    %705 = vadd.xlane.f32.xlu0 %v704
    %v706 = vpop.xlane.xlu0 %705
    %v707 = vrcp.pop %v703
    %v708 = vrcp.pop %v706
    %v709 = vmul.f32 %v698, %v707
    %v710 = vmul.f32 %v700, %v708
    %711 = vrot.lane.b32.xlu0 %v187, 56
    %v712 = vpop.permute.xlu0 %711
    %v715 = vsel %vm203, %v709, 0
    %717 = vmatprep.subr.mxu0 0.0
    %718 = vmatpush1.msra.mxu0 %v712
    %719 = vmatprep.subr.mxu0 0.0
    %720 = vmatpush1.msra.mxu0 0.0
    %721 = vmatprep.subr.mxu0 0.0
    %722 = vmatpush1.msra.mxu0 0.0
    %723 = vmatprep.subr.mxu0 0.0
    %724 = vmatpush1.msra.mxu0 0.0
    %725 = vmatprep.subr.mxu0 0.0
    %726 = vmatpush1.msra.mxu0 0.0
    %727 = vmatprep.subr.mxu0 0.0
    %728 = vmatpush1.msra.mxu0 0.0
    %729 = vmatprep.subr.mxu0 0.0
    %730 = vmatpush1.msra.mxu0 0.0
    %731 = vmatprep.subr.mxu0 0.0
    %732 = vmatpush1.msra.mxu0 0.0
    %733 = vmatprep.subr.mxu0 0.0
    %734 = vmatpush1.msra.mxu0 0.0
    %735 = vmatprep.subr.mxu0 0.0
    %736 = vmatpush1.msra.mxu0 0.0
    %737 = vmatprep.subr.mxu0 0.0
    %738 = vmatpush1.msra.mxu0 0.0
    %739 = vmatprep.subr.mxu0 0.0
    %740 = vmatpush1.msra.mxu0 0.0
    %741 = vmatprep.subr.mxu0 0.0
    %742 = vmatpush1.msra.mxu0 0.0
    %743 = vmatprep.subr.mxu0 0.0
    %744 = vmatpush1.msra.mxu0 0.0
    %745 = vmatprep.subr.mxu0 0.0
    %746 = vmatpush1.msra.mxu0 0.0
    %747 = vmatprep.subr.mxu0 0.0
    %748 = vmatpush1.msra.mxu0 0.0
    %749 = vmatprep.subr.mxu0 0.0
    %750 = vmatpush1.msra.mxu0 0.0
    %751 = vmatprep.subr.mxu0 0.0
    %752 = vmatpush1.msra.mxu0 0.0
    %753 = vmatprep.subr.mxu0 0.0
    %754 = vmatpush1.msra.mxu0 0.0
    %755 = vmatprep.subr.mxu0 0.0
    %756 = vmatpush1.msra.mxu0 0.0
    %757 = vmatprep.subr.mxu0 0.0
    %758 = vmatpush1.msra.mxu0 0.0
    %759 = vmatprep.subr.mxu0 0.0
    %760 = vmatpush1.msra.mxu0 0.0
    %761 = vmatprep.subr.mxu0 0.0
    %762 = vmatpush1.msra.mxu0 0.0
    %763 = vmatprep.subr.mxu0 0.0
    %764 = vmatpush1.msra.mxu0 0.0
    %765 = vmatprep.subr.mxu0 0.0
    %766 = vmatpush1.msra.mxu0 0.0
    %767 = vmatprep.subr.mxu0 0.0
    %768 = vmatpush1.msra.mxu0 0.0
    %769 = vmatprep.subr.mxu0 0.0
    %770 = vmatpush1.msra.mxu0 0.0
    %771 = vmatprep.subr.mxu0 0.0
    %772 = vmatpush1.msra.mxu0 0.0
    %773 = vmatprep.subr.mxu0 0.0
    %774 = vmatpush1.msra.mxu0 0.0
    %775 = vmatprep.subr.mxu0 0.0
    %776 = vmatpush1.msra.mxu0 0.0
    %777 = vmatprep.subr.mxu0 0.0
    %778 = vmatpush1.msra.mxu0 0.0
    %779 = vmatprep.subr.mxu0 0.0
    %780 = vmatpush1.msra.mxu0 0.0
    %781 = vmatprep.mubr.f32.mxu0 0.0
    %782 = vmatmul.mubr.f32.gmra.mrb[0].mxu0 %v715
    %v783 = vpop.f32.mrb[0].mxu0
    %v784 = vadd.f32 0.0, %v783
    %v785 = vpop.f32.mrb[0].mxu0
    %786 = vdwg.mxu0
    %787 = vrot.lane.b32.xlu0 %v192, 56
    %v788 = vpop.permute.xlu0 %787
    %v791 = vsel %vm203, %v710, 0
    %793 = vmatprep.subr.mxu0 0.0
    %794 = vmatpush1.msra.mxu0 %v788
    %795 = vmatprep.subr.mxu0 0.0
    %796 = vmatpush1.msra.mxu0 0.0
    %797 = vmatprep.subr.mxu0 0.0
    %798 = vmatpush1.msra.mxu0 0.0
    %799 = vmatprep.subr.mxu0 0.0
    %800 = vmatpush1.msra.mxu0 0.0
    %801 = vmatprep.subr.mxu0 0.0
    %802 = vmatpush1.msra.mxu0 0.0
    %803 = vmatprep.subr.mxu0 0.0
    %804 = vmatpush1.msra.mxu0 0.0
    %805 = vmatprep.subr.mxu0 0.0
    %806 = vmatpush1.msra.mxu0 0.0
    %807 = vmatprep.subr.mxu0 0.0
    %808 = vmatpush1.msra.mxu0 0.0
    %809 = vmatprep.subr.mxu0 0.0
    %810 = vmatpush1.msra.mxu0 0.0
    %811 = vmatprep.subr.mxu0 0.0
    %812 = vmatpush1.msra.mxu0 0.0
    %813 = vmatprep.subr.mxu0 0.0
    %814 = vmatpush1.msra.mxu0 0.0
    %815 = vmatprep.subr.mxu0 0.0
    %816 = vmatpush1.msra.mxu0 0.0
    %817 = vmatprep.subr.mxu0 0.0
    %818 = vmatpush1.msra.mxu0 0.0
    %819 = vmatprep.subr.mxu0 0.0
    %820 = vmatpush1.msra.mxu0 0.0
    %821 = vmatprep.subr.mxu0 0.0
    %822 = vmatpush1.msra.mxu0 0.0
    %823 = vmatprep.subr.mxu0 0.0
    %824 = vmatpush1.msra.mxu0 0.0
    %825 = vmatprep.subr.mxu0 0.0
    %826 = vmatpush1.msra.mxu0 0.0
    %827 = vmatprep.subr.mxu0 0.0
    %828 = vmatpush1.msra.mxu0 0.0
    %829 = vmatprep.subr.mxu0 0.0
    %830 = vmatpush1.msra.mxu0 0.0
    %831 = vmatprep.subr.mxu0 0.0
    %832 = vmatpush1.msra.mxu0 0.0
    %833 = vmatprep.subr.mxu0 0.0
    %834 = vmatpush1.msra.mxu0 0.0
    %835 = vmatprep.subr.mxu0 0.0
    %836 = vmatpush1.msra.mxu0 0.0
    %837 = vmatprep.subr.mxu0 0.0
    %838 = vmatpush1.msra.mxu0 0.0
    %839 = vmatprep.subr.mxu0 0.0
    %840 = vmatpush1.msra.mxu0 0.0
    %841 = vmatprep.subr.mxu0 0.0
    %842 = vmatpush1.msra.mxu0 0.0
    %843 = vmatprep.subr.mxu0 0.0
    %844 = vmatpush1.msra.mxu0 0.0
    %845 = vmatprep.subr.mxu0 0.0
    %846 = vmatpush1.msra.mxu0 0.0
    %847 = vmatprep.subr.mxu0 0.0
    %848 = vmatpush1.msra.mxu0 0.0
    %849 = vmatprep.subr.mxu0 0.0
    %850 = vmatpush1.msra.mxu0 0.0
    %851 = vmatprep.subr.mxu0 0.0
    %852 = vmatpush1.msra.mxu0 0.0
    %853 = vmatprep.subr.mxu0 0.0
    %854 = vmatpush1.msra.mxu0 0.0
    %855 = vmatprep.subr.mxu0 0.0
    %856 = vmatpush1.msra.mxu0 0.0
    %857 = vmatprep.mubr.f32.mxu0 0.0
    %858 = vmatmul.mubr.f32.gmra.mrb[0].mxu0 %v791
    %v859 = vpop.f32.mrb[0].mxu0
    %v860 = vadd.f32 0.0, %v859
    %v861 = vpop.f32.mrb[0].mxu0
    %862 = vdwg.mxu0
    %v864 = vsel %vm203, %v784, 0
    %v867 = vsel %vm203, %v860, 0
    %869 = vmatprep.subr.mxu0 0.0
    %870 = vmatpush1.msra.mxu0 %v196
    %871 = vmatprep.subr.mxu0 0.0
    %872 = vmatpush1.msra.mxu0 0.0
    %873 = vmatprep.subr.mxu0 0.0
    %874 = vmatpush1.msra.mxu0 0.0
    %875 = vmatprep.subr.mxu0 0.0
    %876 = vmatpush1.msra.mxu0 0.0
    %877 = vmatprep.subr.mxu0 0.0
    %878 = vmatpush1.msra.mxu0 0.0
    %879 = vmatprep.subr.mxu0 0.0
    %880 = vmatpush1.msra.mxu0 0.0
    %881 = vmatprep.subr.mxu0 0.0
    %882 = vmatpush1.msra.mxu0 0.0
    %883 = vmatprep.subr.mxu0 0.0
    %884 = vmatpush1.msra.mxu0 0.0
    %885 = vmatprep.subr.mxu0 0.0
    %886 = vmatpush1.msra.mxu0 0.0
    %887 = vmatprep.subr.mxu0 0.0
    %888 = vmatpush1.msra.mxu0 0.0
    %889 = vmatprep.subr.mxu0 0.0
    %890 = vmatpush1.msra.mxu0 0.0
    %891 = vmatprep.subr.mxu0 0.0
    %892 = vmatpush1.msra.mxu0 0.0
    %893 = vmatprep.subr.mxu0 0.0
    %894 = vmatpush1.msra.mxu0 0.0
    %895 = vmatprep.subr.mxu0 0.0
    %896 = vmatpush1.msra.mxu0 0.0
    %897 = vmatprep.subr.mxu0 0.0
    %898 = vmatpush1.msra.mxu0 0.0
    %899 = vmatprep.subr.mxu0 0.0
    %900 = vmatpush1.msra.mxu0 0.0
    %901 = vmatprep.subr.mxu0 0.0
    %902 = vmatpush1.msra.mxu0 0.0
    %903 = vmatprep.subr.mxu0 0.0
    %904 = vmatpush1.msra.mxu0 0.0
    %905 = vmatprep.subr.mxu0 0.0
    %906 = vmatpush1.msra.mxu0 0.0
    %907 = vmatprep.subr.mxu0 0.0
    %908 = vmatpush1.msra.mxu0 0.0
    %909 = vmatprep.subr.mxu0 0.0
    %910 = vmatpush1.msra.mxu0 0.0
    %911 = vmatprep.subr.mxu0 0.0
    %912 = vmatpush1.msra.mxu0 0.0
    %913 = vmatprep.subr.mxu0 0.0
    %914 = vmatpush1.msra.mxu0 0.0
    %915 = vmatprep.subr.mxu0 0.0
    %916 = vmatpush1.msra.mxu0 0.0
    %917 = vmatprep.subr.mxu0 0.0
    %918 = vmatpush1.msra.mxu0 0.0
    %919 = vmatprep.subr.mxu0 0.0
    %920 = vmatpush1.msra.mxu0 0.0
    %921 = vmatprep.subr.mxu0 0.0
    %922 = vmatpush1.msra.mxu0 0.0
    %923 = vmatprep.subr.mxu0 0.0
    %924 = vmatpush1.msra.mxu0 0.0
    %925 = vmatprep.subr.mxu0 0.0
    %926 = vmatpush1.msra.mxu0 0.0
    %927 = vmatprep.subr.mxu0 0.0
    %928 = vmatpush1.msra.mxu0 0.0
    %929 = vmatprep.subr.mxu0 0.0
    %930 = vmatpush1.msra.mxu0 0.0
    %931 = vmatprep.subr.mxu0 0.0
    %932 = vmatpush1.msra.mxu0 0.0
    %933 = vmatprep.mubr.f32.mxu0 0.0
    %934 = vmatmul.mubr.f32.gmra.mrb[0].mxu0 %v864
    %v935 = vpop.f32.mrb[0].mxu0
    %v936 = vadd.f32 0.0, %v935
    %v937 = vpop.f32.mrb[0].mxu0
    %938 = vmatprep.mubr.f32.mxu0 0.0
    %939 = vmatmul.mubr.f32.gmra.mrb[0].mxu0 %v867
    %v940 = vpop.f32.mrb[0].mxu0
    %v941 = vadd.f32 0.0, %v940
    %v942 = vpop.f32.mrb[0].mxu0
    %943 = vdwg.mxu0
    %v945 = vsel %vm203, %v452, 0
    %v948 = vsel %vm203, %v528, 0
    %950 = vmatprep.subr.mxu0 0.0
    %951 = vmatpush1.msra.mxu0 %v195
    %952 = vmatprep.subr.mxu0 0.0
    %953 = vmatpush1.msra.mxu0 0.0
    %954 = vmatprep.subr.mxu0 0.0
    %955 = vmatpush1.msra.mxu0 0.0
    %956 = vmatprep.subr.mxu0 0.0
    %957 = vmatpush1.msra.mxu0 0.0
    %958 = vmatprep.subr.mxu0 0.0
    %959 = vmatpush1.msra.mxu0 0.0
    %960 = vmatprep.subr.mxu0 0.0
    %961 = vmatpush1.msra.mxu0 0.0
    %962 = vmatprep.subr.mxu0 0.0
    %963 = vmatpush1.msra.mxu0 0.0
    %964 = vmatprep.subr.mxu0 0.0
    %965 = vmatpush1.msra.mxu0 0.0
    %966 = vmatprep.subr.mxu0 0.0
    %967 = vmatpush1.msra.mxu0 0.0
    %968 = vmatprep.subr.mxu0 0.0
    %969 = vmatpush1.msra.mxu0 0.0
    %970 = vmatprep.subr.mxu0 0.0
    %971 = vmatpush1.msra.mxu0 0.0
    %972 = vmatprep.subr.mxu0 0.0
    %973 = vmatpush1.msra.mxu0 0.0
    %974 = vmatprep.subr.mxu0 0.0
    %975 = vmatpush1.msra.mxu0 0.0
    %976 = vmatprep.subr.mxu0 0.0
    %977 = vmatpush1.msra.mxu0 0.0
    %978 = vmatprep.subr.mxu0 0.0
    %979 = vmatpush1.msra.mxu0 0.0
    %980 = vmatprep.subr.mxu0 0.0
    %981 = vmatpush1.msra.mxu0 0.0
    %982 = vmatprep.subr.mxu0 0.0
    %983 = vmatpush1.msra.mxu0 0.0
    %984 = vmatprep.subr.mxu0 0.0
    %985 = vmatpush1.msra.mxu0 0.0
    %986 = vmatprep.subr.mxu0 0.0
    %987 = vmatpush1.msra.mxu0 0.0
    %988 = vmatprep.subr.mxu0 0.0
    %989 = vmatpush1.msra.mxu0 0.0
    %990 = vmatprep.subr.mxu0 0.0
    %991 = vmatpush1.msra.mxu0 0.0
    %992 = vmatprep.subr.mxu0 0.0
    %993 = vmatpush1.msra.mxu0 0.0
    %994 = vmatprep.subr.mxu0 0.0
    %995 = vmatpush1.msra.mxu0 0.0
    %996 = vmatprep.subr.mxu0 0.0
    %997 = vmatpush1.msra.mxu0 0.0
    %998 = vmatprep.subr.mxu0 0.0
    %999 = vmatpush1.msra.mxu0 0.0
    %1000 = vmatprep.subr.mxu0 0.0
    %1001 = vmatpush1.msra.mxu0 0.0
    %1002 = vmatprep.subr.mxu0 0.0
    %1003 = vmatpush1.msra.mxu0 0.0
    %1004 = vmatprep.subr.mxu0 0.0
    %1005 = vmatpush1.msra.mxu0 0.0
    %1006 = vmatprep.subr.mxu0 0.0
    %1007 = vmatpush1.msra.mxu0 0.0
    %1008 = vmatprep.subr.mxu0 0.0
    %1009 = vmatpush1.msra.mxu0 0.0
    %1010 = vmatprep.subr.mxu0 0.0
    %1011 = vmatpush1.msra.mxu0 0.0
    %1012 = vmatprep.subr.mxu0 0.0
    %1013 = vmatpush1.msra.mxu0 0.0
    %1014 = vmatprep.mubr.f32.mxu0 0.0
    %1015 = vmatmul.mubr.f32.gmra.mrb[0].mxu0 %v945
    %v1016 = vpop.f32.mrb[0].mxu0
    %v1017 = vadd.f32 %v936, %v1016
    %v1018 = vpop.f32.mrb[0].mxu0
    %1019 = vmatprep.mubr.f32.mxu0 0.0
    %1020 = vmatmul.mubr.f32.gmra.mrb[0].mxu0 %v948
    %v1021 = vpop.f32.mrb[0].mxu0
    %v1022 = vadd.f32 %v941, %v1021
    %v1023 = vpop.f32.mrb[0].mxu0
    %1024 = vdwg.mxu0
    %1025 = vrot.lane.b32.xlu0 %v187, 112
    %v1026 = vpop.permute.xlu0 %1025
    %1027 = vrot.lane.b32.xlu0 %v187, 80
    %v1028 = vpop.permute.xlu0 %1027
    %v1029 = vsel %vm203, %v1026, 0
    %v1031 = vsel %vm203, %v1028, 0
    %1033 = vmatprep.subr.mxu0 0.0
    %1034 = vmatpush1.xpose.msra.mxu0 %v1031
    %1035 = vmatprep.subr.mxu0 0.0
    %1036 = vmatpush1.xpose.msra.mxu0 0.0
    %1037 = vmatprep.subr.mxu0 0.0
    %1038 = vmatpush1.xpose.msra.mxu0 0.0
    %1039 = vmatprep.subr.mxu0 0.0
    %1040 = vmatpush1.xpose.msra.mxu0 0.0
    %1041 = vmatprep.subr.mxu0 0.0
    %1042 = vmatpush1.xpose.msra.mxu0 0.0
    %1043 = vmatprep.subr.mxu0 0.0
    %1044 = vmatpush1.xpose.msra.mxu0 0.0
    %1045 = vmatprep.subr.mxu0 0.0
    %1046 = vmatpush1.xpose.msra.mxu0 0.0
    %1047 = vmatprep.subr.mxu0 0.0
    %1048 = vmatpush1.xpose.msra.mxu0 0.0
    %1049 = vmatprep.subr.mxu0 0.0
    %1050 = vmatpush1.xpose.msra.mxu0 0.0
    %1051 = vmatprep.subr.mxu0 0.0
    %1052 = vmatpush1.xpose.msra.mxu0 0.0
    %1053 = vmatprep.subr.mxu0 0.0
    %1054 = vmatpush1.xpose.msra.mxu0 0.0
    %1055 = vmatprep.subr.mxu0 0.0
    %1056 = vmatpush1.xpose.msra.mxu0 0.0
    %1057 = vmatprep.subr.mxu0 0.0
    %1058 = vmatpush1.xpose.msra.mxu0 0.0
    %1059 = vmatprep.subr.mxu0 0.0
    %1060 = vmatpush1.xpose.msra.mxu0 0.0
    %1061 = vmatprep.subr.mxu0 0.0
    %1062 = vmatpush1.xpose.msra.mxu0 0.0
    %1063 = vmatprep.subr.mxu0 0.0
    %1064 = vmatpush1.xpose.msra.mxu0 0.0
    %1065 = vmatprep.subr.mxu0 0.0
    %1066 = vmatpush1.xpose.msra.mxu0 0.0
    %1067 = vmatprep.subr.mxu0 0.0
    %1068 = vmatpush1.xpose.msra.mxu0 0.0
    %1069 = vmatprep.subr.mxu0 0.0
    %1070 = vmatpush1.xpose.msra.mxu0 0.0
    %1071 = vmatprep.subr.mxu0 0.0
    %1072 = vmatpush1.xpose.msra.mxu0 0.0
    %1073 = vmatprep.subr.mxu0 0.0
    %1074 = vmatpush1.xpose.msra.mxu0 0.0
    %1075 = vmatprep.subr.mxu0 0.0
    %1076 = vmatpush1.xpose.msra.mxu0 0.0
    %1077 = vmatprep.subr.mxu0 0.0
    %1078 = vmatpush1.xpose.msra.mxu0 0.0
    %1079 = vmatprep.subr.mxu0 0.0
    %1080 = vmatpush1.xpose.msra.mxu0 0.0
    %1081 = vmatprep.subr.mxu0 0.0
    %1082 = vmatpush1.xpose.msra.mxu0 0.0
    %1083 = vmatprep.subr.mxu0 0.0
    %1084 = vmatpush1.xpose.msra.mxu0 0.0
    %1085 = vmatprep.subr.mxu0 0.0
    %1086 = vmatpush1.xpose.msra.mxu0 0.0
    %1087 = vmatprep.subr.mxu0 0.0
    %1088 = vmatpush1.xpose.msra.mxu0 0.0
    %1089 = vmatprep.subr.mxu0 0.0
    %1090 = vmatpush1.xpose.msra.mxu0 0.0
    %1091 = vmatprep.subr.mxu0 0.0
    %1092 = vmatpush1.xpose.msra.mxu0 0.0
    %1093 = vmatprep.subr.mxu0 0.0
    %1094 = vmatpush1.xpose.msra.mxu0 0.0
    %1095 = vmatprep.subr.mxu0 0.0
    %1096 = vmatpush1.xpose.msra.mxu0 0.0
    %1097 = vmatprep.mubr.f32.mxu0 0.0
    %1098 = vmatmul.mubr.f32.gmra.mrb[0].mxu0 %v1029
    %v1099 = vpop.f32.mrb[0].mxu0
    %v1100 = vadd.f32 0.0, %v1099
    %v1101 = vpop.f32.mrb[0].mxu0
    %1102 = vdwg.mxu0
    %1103 = vrot.lane.b32.xlu0 %v192, 112
    %v1104 = vpop.permute.xlu0 %1103
    %1105 = vrot.lane.b32.xlu0 %v192, 80
    %v1106 = vpop.permute.xlu0 %1105
    %v1107 = vsel %vm203, %v1104, 0
    %v1109 = vsel %vm203, %v1106, 0
    %1111 = vmatprep.subr.mxu0 0.0
    %1112 = vmatpush1.xpose.msra.mxu0 %v1109
    %1113 = vmatprep.subr.mxu0 0.0
    %1114 = vmatpush1.xpose.msra.mxu0 0.0
    %1115 = vmatprep.subr.mxu0 0.0
    %1116 = vmatpush1.xpose.msra.mxu0 0.0
    %1117 = vmatprep.subr.mxu0 0.0
    %1118 = vmatpush1.xpose.msra.mxu0 0.0
    %1119 = vmatprep.subr.mxu0 0.0
    %1120 = vmatpush1.xpose.msra.mxu0 0.0
    %1121 = vmatprep.subr.mxu0 0.0
    %1122 = vmatpush1.xpose.msra.mxu0 0.0
    %1123 = vmatprep.subr.mxu0 0.0
    %1124 = vmatpush1.xpose.msra.mxu0 0.0
    %1125 = vmatprep.subr.mxu0 0.0
    %1126 = vmatpush1.xpose.msra.mxu0 0.0
    %1127 = vmatprep.subr.mxu0 0.0
    %1128 = vmatpush1.xpose.msra.mxu0 0.0
    %1129 = vmatprep.subr.mxu0 0.0
    %1130 = vmatpush1.xpose.msra.mxu0 0.0
    %1131 = vmatprep.subr.mxu0 0.0
    %1132 = vmatpush1.xpose.msra.mxu0 0.0
    %1133 = vmatprep.subr.mxu0 0.0
    %1134 = vmatpush1.xpose.msra.mxu0 0.0
    %1135 = vmatprep.subr.mxu0 0.0
    %1136 = vmatpush1.xpose.msra.mxu0 0.0
    %1137 = vmatprep.subr.mxu0 0.0
    %1138 = vmatpush1.xpose.msra.mxu0 0.0
    %1139 = vmatprep.subr.mxu0 0.0
    %1140 = vmatpush1.xpose.msra.mxu0 0.0
    %1141 = vmatprep.subr.mxu0 0.0
    %1142 = vmatpush1.xpose.msra.mxu0 0.0
    %1143 = vmatprep.subr.mxu0 0.0
    %1144 = vmatpush1.xpose.msra.mxu0 0.0
    %1145 = vmatprep.subr.mxu0 0.0
    %1146 = vmatpush1.xpose.msra.mxu0 0.0
    %1147 = vmatprep.subr.mxu0 0.0
    %1148 = vmatpush1.xpose.msra.mxu0 0.0
    %1149 = vmatprep.subr.mxu0 0.0
    %1150 = vmatpush1.xpose.msra.mxu0 0.0
    %1151 = vmatprep.subr.mxu0 0.0
    %1152 = vmatpush1.xpose.msra.mxu0 0.0
    %1153 = vmatprep.subr.mxu0 0.0
    %1154 = vmatpush1.xpose.msra.mxu0 0.0
    %1155 = vmatprep.subr.mxu0 0.0
    %1156 = vmatpush1.xpose.msra.mxu0 0.0
    %1157 = vmatprep.subr.mxu0 0.0
    %1158 = vmatpush1.xpose.msra.mxu0 0.0
    %1159 = vmatprep.subr.mxu0 0.0
    %1160 = vmatpush1.xpose.msra.mxu0 0.0
    %1161 = vmatprep.subr.mxu0 0.0
    %1162 = vmatpush1.xpose.msra.mxu0 0.0
    %1163 = vmatprep.subr.mxu0 0.0
    %1164 = vmatpush1.xpose.msra.mxu0 0.0
    %1165 = vmatprep.subr.mxu0 0.0
    %1166 = vmatpush1.xpose.msra.mxu0 0.0
    %1167 = vmatprep.subr.mxu0 0.0
    %1168 = vmatpush1.xpose.msra.mxu0 0.0
    %1169 = vmatprep.subr.mxu0 0.0
    %1170 = vmatpush1.xpose.msra.mxu0 0.0
    %1171 = vmatprep.subr.mxu0 0.0
    %1172 = vmatpush1.xpose.msra.mxu0 0.0
    %1173 = vmatprep.subr.mxu0 0.0
    %1174 = vmatpush1.xpose.msra.mxu0 0.0
    %1175 = vmatprep.mubr.f32.mxu0 0.0
    %1176 = vmatmul.mubr.f32.gmra.mrb[0].mxu0 %v1107
    %v1177 = vpop.f32.mrb[0].mxu0
    %v1178 = vadd.f32 0.0, %v1177
    %v1179 = vpop.f32.mrb[0].mxu0
    %1180 = vdwg.mxu0
    %v1181 = vmul.f32 %v1100, 0.35355338
    %v1182 = vmul.f32 %v1178, 0.35355338
    %v1183 = vsel %vm203, %v1181, -inf
    %1184 = vmax.xlane.f32.xlu0 %v1183
    %v1185 = vpop.xlane.xlu0 %1184
    %v1186 = vsel %vm203, %v1182, -inf
    %1187 = vmax.xlane.f32.xlu0 %v1186
    %v1188 = vpop.xlane.xlu0 %1187
    %v1189 = vsub.f32 %v1181, %v1185
    %v1190 = vsub.f32 %v1182, %v1188
    %v1191 = vmul.f32 %v1189, 1.442695
    %v1192 = vpow.pop %v1191
    %v1193 = vmul.f32 %v1190, 1.442695
    %v1194 = vpow.pop %v1193
    %v1195 = vsel %vm203, %v1192, 0.0
    %1196 = vadd.xlane.f32.xlu0 %v1195
    %v1197 = vpop.xlane.xlu0 %1196
    %v1198 = vsel %vm203, %v1194, 0.0
    %1199 = vadd.xlane.f32.xlu0 %v1198
    %v1200 = vpop.xlane.xlu0 %1199
    %v1201 = vrcp.pop %v1197
    %v1202 = vrcp.pop %v1200
    %v1203 = vmul.f32 %v1192, %v1201
    %v1204 = vmul.f32 %v1194, %v1202
    %1205 = vrot.lane.b32.xlu0 %v187, 48
    %v1206 = vpop.permute.xlu0 %1205
    %v1209 = vsel %vm203, %v1203, 0
    %1211 = vmatprep.subr.mxu0 0.0
    %1212 = vmatpush1.msra.mxu0 %v1206
    %1213 = vmatprep.subr.mxu0 0.0
    %1214 = vmatpush1.msra.mxu0 0.0
    %1215 = vmatprep.subr.mxu0 0.0
    %1216 = vmatpush1.msra.mxu0 0.0
    %1217 = vmatprep.subr.mxu0 0.0
    %1218 = vmatpush1.msra.mxu0 0.0
    %1219 = vmatprep.subr.mxu0 0.0
    %1220 = vmatpush1.msra.mxu0 0.0
    %1221 = vmatprep.subr.mxu0 0.0
    %1222 = vmatpush1.msra.mxu0 0.0
    %1223 = vmatprep.subr.mxu0 0.0
    %1224 = vmatpush1.msra.mxu0 0.0
    %1225 = vmatprep.subr.mxu0 0.0
    %1226 = vmatpush1.msra.mxu0 0.0
    %1227 = vmatprep.subr.mxu0 0.0
    %1228 = vmatpush1.msra.mxu0 0.0
    %1229 = vmatprep.subr.mxu0 0.0
    %1230 = vmatpush1.msra.mxu0 0.0
    %1231 = vmatprep.subr.mxu0 0.0
    %1232 = vmatpush1.msra.mxu0 0.0
    %1233 = vmatprep.subr.mxu0 0.0
    %1234 = vmatpush1.msra.mxu0 0.0
    %1235 = vmatprep.subr.mxu0 0.0
    %1236 = vmatpush1.msra.mxu0 0.0
    %1237 = vmatprep.subr.mxu0 0.0
    %1238 = vmatpush1.msra.mxu0 0.0
    %1239 = vmatprep.subr.mxu0 0.0
    %1240 = vmatpush1.msra.mxu0 0.0
    %1241 = vmatprep.subr.mxu0 0.0
    %1242 = vmatpush1.msra.mxu0 0.0
    %1243 = vmatprep.subr.mxu0 0.0
    %1244 = vmatpush1.msra.mxu0 0.0
    %1245 = vmatprep.subr.mxu0 0.0
    %1246 = vmatpush1.msra.mxu0 0.0
    %1247 = vmatprep.subr.mxu0 0.0
    %1248 = vmatpush1.msra.mxu0 0.0
    %1249 = vmatprep.subr.mxu0 0.0
    %1250 = vmatpush1.msra.mxu0 0.0
    %1251 = vmatprep.subr.mxu0 0.0
    %1252 = vmatpush1.msra.mxu0 0.0
    %1253 = vmatprep.subr.mxu0 0.0
    %1254 = vmatpush1.msra.mxu0 0.0
    %1255 = vmatprep.subr.mxu0 0.0
    %1256 = vmatpush1.msra.mxu0 0.0
    %1257 = vmatprep.subr.mxu0 0.0
    %1258 = vmatpush1.msra.mxu0 0.0
    %1259 = vmatprep.subr.mxu0 0.0
    %1260 = vmatpush1.msra.mxu0 0.0
    %1261 = vmatprep.subr.mxu0 0.0
    %1262 = vmatpush1.msra.mxu0 0.0
    %1263 = vmatprep.subr.mxu0 0.0
    %1264 = vmatpush1.msra.mxu0 0.0
    %1265 = vmatprep.subr.mxu0 0.0
    %1266 = vmatpush1.msra.mxu0 0.0
    %1267 = vmatprep.subr.mxu0 0.0
    %1268 = vmatpush1.msra.mxu0 0.0
    %1269 = vmatprep.subr.mxu0 0.0
    %1270 = vmatpush1.msra.mxu0 0.0
    %1271 = vmatprep.subr.mxu0 0.0
    %1272 = vmatpush1.msra.mxu0 0.0
    %1273 = vmatprep.subr.mxu0 0.0
    %1274 = vmatpush1.msra.mxu0 0.0
    %1275 = vmatprep.mubr.f32.mxu0 0.0
    %1276 = vmatmul.mubr.f32.gmra.mrb[0].mxu0 %v1209
    %v1277 = vpop.f32.mrb[0].mxu0
    %v1278 = vadd.f32 0.0, %v1277
    %v1279 = vpop.f32.mrb[0].mxu0
    %1280 = vdwg.mxu0
    %1281 = vrot.lane.b32.xlu0 %v192, 48
    %v1282 = vpop.permute.xlu0 %1281
    %v1285 = vsel %vm203, %v1204, 0
    %1287 = vmatprep.subr.mxu0 0.0
    %1288 = vmatpush1.msra.mxu0 %v1282
    %1289 = vmatprep.subr.mxu0 0.0
    %1290 = vmatpush1.msra.mxu0 0.0
    %1291 = vmatprep.subr.mxu0 0.0
    %1292 = vmatpush1.msra.mxu0 0.0
    %1293 = vmatprep.subr.mxu0 0.0
    %1294 = vmatpush1.msra.mxu0 0.0
    %1295 = vmatprep.subr.mxu0 0.0
    %1296 = vmatpush1.msra.mxu0 0.0
    %1297 = vmatprep.subr.mxu0 0.0
    %1298 = vmatpush1.msra.mxu0 0.0
    %1299 = vmatprep.subr.mxu0 0.0
    %1300 = vmatpush1.msra.mxu0 0.0
    %1301 = vmatprep.subr.mxu0 0.0
    %1302 = vmatpush1.msra.mxu0 0.0
    %1303 = vmatprep.subr.mxu0 0.0
    %1304 = vmatpush1.msra.mxu0 0.0
    %1305 = vmatprep.subr.mxu0 0.0
    %1306 = vmatpush1.msra.mxu0 0.0
    %1307 = vmatprep.subr.mxu0 0.0
    %1308 = vmatpush1.msra.mxu0 0.0
    %1309 = vmatprep.subr.mxu0 0.0
    %1310 = vmatpush1.msra.mxu0 0.0
    %1311 = vmatprep.subr.mxu0 0.0
    %1312 = vmatpush1.msra.mxu0 0.0
    %1313 = vmatprep.subr.mxu0 0.0
    %1314 = vmatpush1.msra.mxu0 0.0
    %1315 = vmatprep.subr.mxu0 0.0
    %1316 = vmatpush1.msra.mxu0 0.0
    %1317 = vmatprep.subr.mxu0 0.0
    %1318 = vmatpush1.msra.mxu0 0.0
    %1319 = vmatprep.subr.mxu0 0.0
    %1320 = vmatpush1.msra.mxu0 0.0
    %1321 = vmatprep.subr.mxu0 0.0
    %1322 = vmatpush1.msra.mxu0 0.0
    %1323 = vmatprep.subr.mxu0 0.0
    %1324 = vmatpush1.msra.mxu0 0.0
    %1325 = vmatprep.subr.mxu0 0.0
    %1326 = vmatpush1.msra.mxu0 0.0
    %1327 = vmatprep.subr.mxu0 0.0
    %1328 = vmatpush1.msra.mxu0 0.0
    %1329 = vmatprep.subr.mxu0 0.0
    %1330 = vmatpush1.msra.mxu0 0.0
    %1331 = vmatprep.subr.mxu0 0.0
    %1332 = vmatpush1.msra.mxu0 0.0
    %1333 = vmatprep.subr.mxu0 0.0
    %1334 = vmatpush1.msra.mxu0 0.0
    %1335 = vmatprep.subr.mxu0 0.0
    %1336 = vmatpush1.msra.mxu0 0.0
    %1337 = vmatprep.subr.mxu0 0.0
    %1338 = vmatpush1.msra.mxu0 0.0
    %1339 = vmatprep.subr.mxu0 0.0
    %1340 = vmatpush1.msra.mxu0 0.0
    %1341 = vmatprep.subr.mxu0 0.0
    %1342 = vmatpush1.msra.mxu0 0.0
    %1343 = vmatprep.subr.mxu0 0.0
    %1344 = vmatpush1.msra.mxu0 0.0
    %1345 = vmatprep.subr.mxu0 0.0
    %1346 = vmatpush1.msra.mxu0 0.0
    %1347 = vmatprep.subr.mxu0 0.0
    %1348 = vmatpush1.msra.mxu0 0.0
    %1349 = vmatprep.subr.mxu0 0.0
    %1350 = vmatpush1.msra.mxu0 0.0
    %1351 = vmatprep.mubr.f32.mxu0 0.0
    %1352 = vmatmul.mubr.f32.gmra.mrb[0].mxu0 %v1285
    %v1353 = vpop.f32.mrb[0].mxu0
    %v1354 = vadd.f32 0.0, %v1353
    %v1355 = vpop.f32.mrb[0].mxu0
    %1356 = vdwg.mxu0
    %v1358 = vsel %vm203, %v1278, 0
    %v1361 = vsel %vm203, %v1354, 0
    %1363 = vmatprep.subr.mxu0 0.0
    %1364 = vmatpush1.msra.mxu0 %v197
    %1365 = vmatprep.subr.mxu0 0.0
    %1366 = vmatpush1.msra.mxu0 0.0
    %1367 = vmatprep.subr.mxu0 0.0
    %1368 = vmatpush1.msra.mxu0 0.0
    %1369 = vmatprep.subr.mxu0 0.0
    %1370 = vmatpush1.msra.mxu0 0.0
    %1371 = vmatprep.subr.mxu0 0.0
    %1372 = vmatpush1.msra.mxu0 0.0
    %1373 = vmatprep.subr.mxu0 0.0
    %1374 = vmatpush1.msra.mxu0 0.0
    %1375 = vmatprep.subr.mxu0 0.0
    %1376 = vmatpush1.msra.mxu0 0.0
    %1377 = vmatprep.subr.mxu0 0.0
    %1378 = vmatpush1.msra.mxu0 0.0
    %1379 = vmatprep.subr.mxu0 0.0
    %1380 = vmatpush1.msra.mxu0 0.0
    %1381 = vmatprep.subr.mxu0 0.0
    %1382 = vmatpush1.msra.mxu0 0.0
    %1383 = vmatprep.subr.mxu0 0.0
    %1384 = vmatpush1.msra.mxu0 0.0
    %1385 = vmatprep.subr.mxu0 0.0
    %1386 = vmatpush1.msra.mxu0 0.0
    %1387 = vmatprep.subr.mxu0 0.0
    %1388 = vmatpush1.msra.mxu0 0.0
    %1389 = vmatprep.subr.mxu0 0.0
    %1390 = vmatpush1.msra.mxu0 0.0
    %1391 = vmatprep.subr.mxu0 0.0
    %1392 = vmatpush1.msra.mxu0 0.0
    %1393 = vmatprep.subr.mxu0 0.0
    %1394 = vmatpush1.msra.mxu0 0.0
    %1395 = vmatprep.subr.mxu0 0.0
    %1396 = vmatpush1.msra.mxu0 0.0
    %1397 = vmatprep.subr.mxu0 0.0
    %1398 = vmatpush1.msra.mxu0 0.0
    %1399 = vmatprep.subr.mxu0 0.0
    %1400 = vmatpush1.msra.mxu0 0.0
    %1401 = vmatprep.subr.mxu0 0.0
    %1402 = vmatpush1.msra.mxu0 0.0
    %1403 = vmatprep.subr.mxu0 0.0
    %1404 = vmatpush1.msra.mxu0 0.0
    %1405 = vmatprep.subr.mxu0 0.0
    %1406 = vmatpush1.msra.mxu0 0.0
    %1407 = vmatprep.subr.mxu0 0.0
    %1408 = vmatpush1.msra.mxu0 0.0
    %1409 = vmatprep.subr.mxu0 0.0
    %1410 = vmatpush1.msra.mxu0 0.0
    %1411 = vmatprep.subr.mxu0 0.0
    %1412 = vmatpush1.msra.mxu0 0.0
    %1413 = vmatprep.subr.mxu0 0.0
    %1414 = vmatpush1.msra.mxu0 0.0
    %1415 = vmatprep.subr.mxu0 0.0
    %1416 = vmatpush1.msra.mxu0 0.0
    %1417 = vmatprep.subr.mxu0 0.0
    %1418 = vmatpush1.msra.mxu0 0.0
    %1419 = vmatprep.subr.mxu0 0.0
    %1420 = vmatpush1.msra.mxu0 0.0
    %1421 = vmatprep.subr.mxu0 0.0
    %1422 = vmatpush1.msra.mxu0 0.0
    %1423 = vmatprep.subr.mxu0 0.0
    %1424 = vmatpush1.msra.mxu0 0.0
    %1425 = vmatprep.subr.mxu0 0.0
    %1426 = vmatpush1.msra.mxu0 0.0
    %1427 = vmatprep.mubr.f32.mxu0 0.0
    %1428 = vmatmul.mubr.f32.gmra.mrb[0].mxu0 %v1358
    %v1429 = vpop.f32.mrb[0].mxu0
    %v1430 = vadd.f32 0.0, %v1429
    %v1431 = vpop.f32.mrb[0].mxu0
    %1432 = vmatprep.mubr.f32.mxu0 0.0
    %1433 = vmatmul.mubr.f32.gmra.mrb[0].mxu0 %v1361
    %v1434 = vpop.f32.mrb[0].mxu0
    %v1435 = vadd.f32 0.0, %v1434
    %v1436 = vpop.f32.mrb[0].mxu0
    %1437 = vdwg.mxu0
    %v1438 = vadd.f32 %v1017, %v1430
    %v1439 = vadd.f32 %v1022, %v1435
    %1440 = vrot.lane.b32.xlu0 %v187, 104
    %v1441 = vpop.permute.xlu0 %1440
    %1442 = vrot.lane.b32.xlu0 %v187, 72
    %v1443 = vpop.permute.xlu0 %1442
    %v1444 = vsel %vm203, %v1441, 0
    %v1446 = vsel %vm203, %v1443, 0
    %1448 = vmatprep.subr.mxu0 0.0
    %1449 = vmatpush1.xpose.msra.mxu0 %v1446
    %1450 = vmatprep.subr.mxu0 0.0
    %1451 = vmatpush1.xpose.msra.mxu0 0.0
    %1452 = vmatprep.subr.mxu0 0.0
    %1453 = vmatpush1.xpose.msra.mxu0 0.0
    %1454 = vmatprep.subr.mxu0 0.0
    %1455 = vmatpush1.xpose.msra.mxu0 0.0
    %1456 = vmatprep.subr.mxu0 0.0
    %1457 = vmatpush1.xpose.msra.mxu0 0.0
    %1458 = vmatprep.subr.mxu0 0.0
    %1459 = vmatpush1.xpose.msra.mxu0 0.0
    %1460 = vmatprep.subr.mxu0 0.0
    %1461 = vmatpush1.xpose.msra.mxu0 0.0
    %1462 = vmatprep.subr.mxu0 0.0
    %1463 = vmatpush1.xpose.msra.mxu0 0.0
    %1464 = vmatprep.subr.mxu0 0.0
    %1465 = vmatpush1.xpose.msra.mxu0 0.0
    %1466 = vmatprep.subr.mxu0 0.0
    %1467 = vmatpush1.xpose.msra.mxu0 0.0
    %1468 = vmatprep.subr.mxu0 0.0
    %1469 = vmatpush1.xpose.msra.mxu0 0.0
    %1470 = vmatprep.subr.mxu0 0.0
    %1471 = vmatpush1.xpose.msra.mxu0 0.0
    %1472 = vmatprep.subr.mxu0 0.0
    %1473 = vmatpush1.xpose.msra.mxu0 0.0
    %1474 = vmatprep.subr.mxu0 0.0
    %1475 = vmatpush1.xpose.msra.mxu0 0.0
    %1476 = vmatprep.subr.mxu0 0.0
    %1477 = vmatpush1.xpose.msra.mxu0 0.0
    %1478 = vmatprep.subr.mxu0 0.0
    %1479 = vmatpush1.xpose.msra.mxu0 0.0
    %1480 = vmatprep.subr.mxu0 0.0
    %1481 = vmatpush1.xpose.msra.mxu0 0.0
    %1482 = vmatprep.subr.mxu0 0.0
    %1483 = vmatpush1.xpose.msra.mxu0 0.0
    %1484 = vmatprep.subr.mxu0 0.0
    %1485 = vmatpush1.xpose.msra.mxu0 0.0
    %1486 = vmatprep.subr.mxu0 0.0
    %1487 = vmatpush1.xpose.msra.mxu0 0.0
    %1488 = vmatprep.subr.mxu0 0.0
    %1489 = vmatpush1.xpose.msra.mxu0 0.0
    %1490 = vmatprep.subr.mxu0 0.0
    %1491 = vmatpush1.xpose.msra.mxu0 0.0
    %1492 = vmatprep.subr.mxu0 0.0
    %1493 = vmatpush1.xpose.msra.mxu0 0.0
    %1494 = vmatprep.subr.mxu0 0.0
    %1495 = vmatpush1.xpose.msra.mxu0 0.0
    %1496 = vmatprep.subr.mxu0 0.0
    %1497 = vmatpush1.xpose.msra.mxu0 0.0
    %1498 = vmatprep.subr.mxu0 0.0
    %1499 = vmatpush1.xpose.msra.mxu0 0.0
    %1500 = vmatprep.subr.mxu0 0.0
    %1501 = vmatpush1.xpose.msra.mxu0 0.0
    %1502 = vmatprep.subr.mxu0 0.0
    %1503 = vmatpush1.xpose.msra.mxu0 0.0
    %1504 = vmatprep.subr.mxu0 0.0
    %1505 = vmatpush1.xpose.msra.mxu0 0.0
    %1506 = vmatprep.subr.mxu0 0.0
    %1507 = vmatpush1.xpose.msra.mxu0 0.0
    %1508 = vmatprep.subr.mxu0 0.0
    %1509 = vmatpush1.xpose.msra.mxu0 0.0
    %1510 = vmatprep.subr.mxu0 0.0
    %1511 = vmatpush1.xpose.msra.mxu0 0.0
    %1512 = vmatprep.mubr.f32.mxu0 0.0
    %1513 = vmatmul.mubr.f32.gmra.mrb[0].mxu0 %v1444
    %v1514 = vpop.f32.mrb[0].mxu0
    %v1515 = vadd.f32 0.0, %v1514
    %v1516 = vpop.f32.mrb[0].mxu0
    %1517 = vdwg.mxu0
    %1518 = vrot.lane.b32.xlu0 %v192, 104
    %v1519 = vpop.permute.xlu0 %1518
    %1520 = vrot.lane.b32.xlu0 %v192, 72
    %v1521 = vpop.permute.xlu0 %1520
    %v1522 = vsel %vm203, %v1519, 0
    %v1524 = vsel %vm203, %v1521, 0
    %1526 = vmatprep.subr.mxu0 0.0
    %1527 = vmatpush1.xpose.msra.mxu0 %v1524
    %1528 = vmatprep.subr.mxu0 0.0
    %1529 = vmatpush1.xpose.msra.mxu0 0.0
    %1530 = vmatprep.subr.mxu0 0.0
    %1531 = vmatpush1.xpose.msra.mxu0 0.0
    %1532 = vmatprep.subr.mxu0 0.0
    %1533 = vmatpush1.xpose.msra.mxu0 0.0
    %1534 = vmatprep.subr.mxu0 0.0
    %1535 = vmatpush1.xpose.msra.mxu0 0.0
    %1536 = vmatprep.subr.mxu0 0.0
    %1537 = vmatpush1.xpose.msra.mxu0 0.0
    %1538 = vmatprep.subr.mxu0 0.0
    %1539 = vmatpush1.xpose.msra.mxu0 0.0
    %1540 = vmatprep.subr.mxu0 0.0
    %1541 = vmatpush1.xpose.msra.mxu0 0.0
    %1542 = vmatprep.subr.mxu0 0.0
    %1543 = vmatpush1.xpose.msra.mxu0 0.0
    %1544 = vmatprep.subr.mxu0 0.0
    %1545 = vmatpush1.xpose.msra.mxu0 0.0
    %1546 = vmatprep.subr.mxu0 0.0
    %1547 = vmatpush1.xpose.msra.mxu0 0.0
    %1548 = vmatprep.subr.mxu0 0.0
    %1549 = vmatpush1.xpose.msra.mxu0 0.0
    %1550 = vmatprep.subr.mxu0 0.0
    %1551 = vmatpush1.xpose.msra.mxu0 0.0
    %1552 = vmatprep.subr.mxu0 0.0
    %1553 = vmatpush1.xpose.msra.mxu0 0.0
    %1554 = vmatprep.subr.mxu0 0.0
    %1555 = vmatpush1.xpose.msra.mxu0 0.0
    %1556 = vmatprep.subr.mxu0 0.0
    %1557 = vmatpush1.xpose.msra.mxu0 0.0
    %1558 = vmatprep.subr.mxu0 0.0
    %1559 = vmatpush1.xpose.msra.mxu0 0.0
    %1560 = vmatprep.subr.mxu0 0.0
    %1561 = vmatpush1.xpose.msra.mxu0 0.0
    %1562 = vmatprep.subr.mxu0 0.0
    %1563 = vmatpush1.xpose.msra.mxu0 0.0
    %1564 = vmatprep.subr.mxu0 0.0
    %1565 = vmatpush1.xpose.msra.mxu0 0.0
    %1566 = vmatprep.subr.mxu0 0.0
    %1567 = vmatpush1.xpose.msra.mxu0 0.0
    %1568 = vmatprep.subr.mxu0 0.0
    %1569 = vmatpush1.xpose.msra.mxu0 0.0
    %1570 = vmatprep.subr.mxu0 0.0
    %1571 = vmatpush1.xpose.msra.mxu0 0.0
    %1572 = vmatprep.subr.mxu0 0.0
    %1573 = vmatpush1.xpose.msra.mxu0 0.0
    %1574 = vmatprep.subr.mxu0 0.0
    %1575 = vmatpush1.xpose.msra.mxu0 0.0
    %1576 = vmatprep.subr.mxu0 0.0
    %1577 = vmatpush1.xpose.msra.mxu0 0.0
    %1578 = vmatprep.subr.mxu0 0.0
    %1579 = vmatpush1.xpose.msra.mxu0 0.0
    %1580 = vmatprep.subr.mxu0 0.0
    %1581 = vmatpush1.xpose.msra.mxu0 0.0
    %1582 = vmatprep.subr.mxu0 0.0
    %1583 = vmatpush1.xpose.msra.mxu0 0.0
    %1584 = vmatprep.subr.mxu0 0.0
    %1585 = vmatpush1.xpose.msra.mxu0 0.0
    %1586 = vmatprep.subr.mxu0 0.0
    %1587 = vmatpush1.xpose.msra.mxu0 0.0
    %1588 = vmatprep.subr.mxu0 0.0
    %1589 = vmatpush1.xpose.msra.mxu0 0.0
    %1590 = vmatprep.mubr.f32.mxu0 0.0
    %1591 = vmatmul.mubr.f32.gmra.mrb[0].mxu0 %v1522
    %v1592 = vpop.f32.mrb[0].mxu0
    %v1593 = vadd.f32 0.0, %v1592
    %v1594 = vpop.f32.mrb[0].mxu0
    %1595 = vdwg.mxu0
    %v1596 = vmul.f32 %v1515, 0.35355338
    %v1597 = vmul.f32 %v1593, 0.35355338
    %v1598 = vsel %vm203, %v1596, -inf
    %1599 = vmax.xlane.f32.xlu0 %v1598
    %v1600 = vpop.xlane.xlu0 %1599
    %v1601 = vsel %vm203, %v1597, -inf
    %1602 = vmax.xlane.f32.xlu0 %v1601
    %v1603 = vpop.xlane.xlu0 %1602
    %v1604 = vsub.f32 %v1596, %v1600
    %v1605 = vsub.f32 %v1597, %v1603
    %v1606 = vmul.f32 %v1604, 1.442695
    %v1607 = vpow.pop %v1606
    %v1608 = vmul.f32 %v1605, 1.442695
    %v1609 = vpow.pop %v1608
    %v1610 = vsel %vm203, %v1607, 0.0
    %1611 = vadd.xlane.f32.xlu0 %v1610
    %v1612 = vpop.xlane.xlu0 %1611
    %v1613 = vsel %vm203, %v1609, 0.0
    %1614 = vadd.xlane.f32.xlu0 %v1613
    %v1615 = vpop.xlane.xlu0 %1614
    %v1616 = vrcp.pop %v1612
    %v1617 = vrcp.pop %v1615
    %v1618 = vmul.f32 %v1607, %v1616
    %v1619 = vmul.f32 %v1609, %v1617
    %1620 = vrot.lane.b32.xlu0 %v187, 40
    %v1621 = vpop.permute.xlu0 %1620
    %v1624 = vsel %vm203, %v1618, 0
    %1626 = vmatprep.subr.mxu0 0.0
    %1627 = vmatpush1.msra.mxu0 %v1621
    %1628 = vmatprep.subr.mxu0 0.0
    %1629 = vmatpush1.msra.mxu0 0.0
    %1630 = vmatprep.subr.mxu0 0.0
    %1631 = vmatpush1.msra.mxu0 0.0
    %1632 = vmatprep.subr.mxu0 0.0
    %1633 = vmatpush1.msra.mxu0 0.0
    %1634 = vmatprep.subr.mxu0 0.0
    %1635 = vmatpush1.msra.mxu0 0.0
    %1636 = vmatprep.subr.mxu0 0.0
    %1637 = vmatpush1.msra.mxu0 0.0
    %1638 = vmatprep.subr.mxu0 0.0
    %1639 = vmatpush1.msra.mxu0 0.0
    %1640 = vmatprep.subr.mxu0 0.0
    %1641 = vmatpush1.msra.mxu0 0.0
    %1642 = vmatprep.subr.mxu0 0.0
    %1643 = vmatpush1.msra.mxu0 0.0
    %1644 = vmatprep.subr.mxu0 0.0
    %1645 = vmatpush1.msra.mxu0 0.0
    %1646 = vmatprep.subr.mxu0 0.0
    %1647 = vmatpush1.msra.mxu0 0.0
    %1648 = vmatprep.subr.mxu0 0.0
    %1649 = vmatpush1.msra.mxu0 0.0
    %1650 = vmatprep.subr.mxu0 0.0
    %1651 = vmatpush1.msra.mxu0 0.0
    %1652 = vmatprep.subr.mxu0 0.0
    %1653 = vmatpush1.msra.mxu0 0.0
    %1654 = vmatprep.subr.mxu0 0.0
    %1655 = vmatpush1.msra.mxu0 0.0
    %1656 = vmatprep.subr.mxu0 0.0
    %1657 = vmatpush1.msra.mxu0 0.0
    %1658 = vmatprep.subr.mxu0 0.0
    %1659 = vmatpush1.msra.mxu0 0.0
    %1660 = vmatprep.subr.mxu0 0.0
    %1661 = vmatpush1.msra.mxu0 0.0
    %1662 = vmatprep.subr.mxu0 0.0
    %1663 = vmatpush1.msra.mxu0 0.0
    %1664 = vmatprep.subr.mxu0 0.0
    %1665 = vmatpush1.msra.mxu0 0.0
    %1666 = vmatprep.subr.mxu0 0.0
    %1667 = vmatpush1.msra.mxu0 0.0
    %1668 = vmatprep.subr.mxu0 0.0
    %1669 = vmatpush1.msra.mxu0 0.0
    %1670 = vmatprep.subr.mxu0 0.0
    %1671 = vmatpush1.msra.mxu0 0.0
    %1672 = vmatprep.subr.mxu0 0.0
    %1673 = vmatpush1.msra.mxu0 0.0
    %1674 = vmatprep.subr.mxu0 0.0
    %1675 = vmatpush1.msra.mxu0 0.0
    %1676 = vmatprep.subr.mxu0 0.0
    %1677 = vmatpush1.msra.mxu0 0.0
    %1678 = vmatprep.subr.mxu0 0.0
    %1679 = vmatpush1.msra.mxu0 0.0
    %1680 = vmatprep.subr.mxu0 0.0
    %1681 = vmatpush1.msra.mxu0 0.0
    %1682 = vmatprep.subr.mxu0 0.0
    %1683 = vmatpush1.msra.mxu0 0.0
    %1684 = vmatprep.subr.mxu0 0.0
    %1685 = vmatpush1.msra.mxu0 0.0
    %1686 = vmatprep.subr.mxu0 0.0
    %1687 = vmatpush1.msra.mxu0 0.0
    %1688 = vmatprep.subr.mxu0 0.0
    %1689 = vmatpush1.msra.mxu0 0.0
    %1690 = vmatprep.mubr.f32.mxu0 0.0
    %1691 = vmatmul.mubr.f32.gmra.mrb[0].mxu0 %v1624
    %v1692 = vpop.f32.mrb[0].mxu0
    %v1693 = vadd.f32 0.0, %v1692
    %v1694 = vpop.f32.mrb[0].mxu0
    %1695 = vdwg.mxu0
    %1696 = vrot.lane.b32.xlu0 %v192, 40
    %v1697 = vpop.permute.xlu0 %1696
    %v1700 = vsel %vm203, %v1619, 0
    %1702 = vmatprep.subr.mxu0 0.0
    %1703 = vmatpush1.msra.mxu0 %v1697
    %1704 = vmatprep.subr.mxu0 0.0
    %1705 = vmatpush1.msra.mxu0 0.0
    %1706 = vmatprep.subr.mxu0 0.0
    %1707 = vmatpush1.msra.mxu0 0.0
    %1708 = vmatprep.subr.mxu0 0.0
    %1709 = vmatpush1.msra.mxu0 0.0
    %1710 = vmatprep.subr.mxu0 0.0
    %1711 = vmatpush1.msra.mxu0 0.0
    %1712 = vmatprep.subr.mxu0 0.0
    %1713 = vmatpush1.msra.mxu0 0.0
    %1714 = vmatprep.subr.mxu0 0.0
    %1715 = vmatpush1.msra.mxu0 0.0
    %1716 = vmatprep.subr.mxu0 0.0
    %1717 = vmatpush1.msra.mxu0 0.0
    %1718 = vmatprep.subr.mxu0 0.0
    %1719 = vmatpush1.msra.mxu0 0.0
    %1720 = vmatprep.subr.mxu0 0.0
    %1721 = vmatpush1.msra.mxu0 0.0
    %1722 = vmatprep.subr.mxu0 0.0
    %1723 = vmatpush1.msra.mxu0 0.0
    %1724 = vmatprep.subr.mxu0 0.0
    %1725 = vmatpush1.msra.mxu0 0.0
    %1726 = vmatprep.subr.mxu0 0.0
    %1727 = vmatpush1.msra.mxu0 0.0
    %1728 = vmatprep.subr.mxu0 0.0
    %1729 = vmatpush1.msra.mxu0 0.0
    %1730 = vmatprep.subr.mxu0 0.0
    %1731 = vmatpush1.msra.mxu0 0.0
    %1732 = vmatprep.subr.mxu0 0.0
    %1733 = vmatpush1.msra.mxu0 0.0
    %1734 = vmatprep.subr.mxu0 0.0
    %1735 = vmatpush1.msra.mxu0 0.0
    %1736 = vmatprep.subr.mxu0 0.0
    %1737 = vmatpush1.msra.mxu0 0.0
    %1738 = vmatprep.subr.mxu0 0.0
    %1739 = vmatpush1.msra.mxu0 0.0
    %1740 = vmatprep.subr.mxu0 0.0
    %1741 = vmatpush1.msra.mxu0 0.0
    %1742 = vmatprep.subr.mxu0 0.0
    %1743 = vmatpush1.msra.mxu0 0.0
    %1744 = vmatprep.subr.mxu0 0.0
    %1745 = vmatpush1.msra.mxu0 0.0
    %1746 = vmatprep.subr.mxu0 0.0
    %1747 = vmatpush1.msra.mxu0 0.0
    %1748 = vmatprep.subr.mxu0 0.0
    %1749 = vmatpush1.msra.mxu0 0.0
    %1750 = vmatprep.subr.mxu0 0.0
    %1751 = vmatpush1.msra.mxu0 0.0
    %1752 = vmatprep.subr.mxu0 0.0
    %1753 = vmatpush1.msra.mxu0 0.0
    %1754 = vmatprep.subr.mxu0 0.0
    %1755 = vmatpush1.msra.mxu0 0.0
    %1756 = vmatprep.subr.mxu0 0.0
    %1757 = vmatpush1.msra.mxu0 0.0
    %1758 = vmatprep.subr.mxu0 0.0
    %1759 = vmatpush1.msra.mxu0 0.0
    %1760 = vmatprep.subr.mxu0 0.0
    %1761 = vmatpush1.msra.mxu0 0.0
    %1762 = vmatprep.subr.mxu0 0.0
    %1763 = vmatpush1.msra.mxu0 0.0
    %1764 = vmatprep.subr.mxu0 0.0
    %1765 = vmatpush1.msra.mxu0 0.0
    %1766 = vmatprep.mubr.f32.mxu0 0.0
    %1767 = vmatmul.mubr.f32.gmra.mrb[0].mxu0 %v1700
    %v1768 = vpop.f32.mrb[0].mxu0
    %v1769 = vadd.f32 0.0, %v1768
    %v1770 = vpop.f32.mrb[0].mxu0
    %1771 = vdwg.mxu0
    %v1773 = vsel %vm203, %v1693, 0
    %v1776 = vsel %vm203, %v1769, 0
    %1778 = vmatprep.subr.mxu0 0.0
    %1779 = vmatpush1.msra.mxu0 %v198
    %1780 = vmatprep.subr.mxu0 0.0
    %1781 = vmatpush1.msra.mxu0 0.0
    %1782 = vmatprep.subr.mxu0 0.0
    %1783 = vmatpush1.msra.mxu0 0.0
    %1784 = vmatprep.subr.mxu0 0.0
    %1785 = vmatpush1.msra.mxu0 0.0
    %1786 = vmatprep.subr.mxu0 0.0
    %1787 = vmatpush1.msra.mxu0 0.0
    %1788 = vmatprep.subr.mxu0 0.0
    %1789 = vmatpush1.msra.mxu0 0.0
    %1790 = vmatprep.subr.mxu0 0.0
    %1791 = vmatpush1.msra.mxu0 0.0
    %1792 = vmatprep.subr.mxu0 0.0
    %1793 = vmatpush1.msra.mxu0 0.0
    %1794 = vmatprep.subr.mxu0 0.0
    %1795 = vmatpush1.msra.mxu0 0.0
    %1796 = vmatprep.subr.mxu0 0.0
    %1797 = vmatpush1.msra.mxu0 0.0
    %1798 = vmatprep.subr.mxu0 0.0
    %1799 = vmatpush1.msra.mxu0 0.0
    %1800 = vmatprep.subr.mxu0 0.0
    %1801 = vmatpush1.msra.mxu0 0.0
    %1802 = vmatprep.subr.mxu0 0.0
    %1803 = vmatpush1.msra.mxu0 0.0
    %1804 = vmatprep.subr.mxu0 0.0
    %1805 = vmatpush1.msra.mxu0 0.0
    %1806 = vmatprep.subr.mxu0 0.0
    %1807 = vmatpush1.msra.mxu0 0.0
    %1808 = vmatprep.subr.mxu0 0.0
    %1809 = vmatpush1.msra.mxu0 0.0
    %1810 = vmatprep.subr.mxu0 0.0
    %1811 = vmatpush1.msra.mxu0 0.0
    %1812 = vmatprep.subr.mxu0 0.0
    %1813 = vmatpush1.msra.mxu0 0.0
    %1814 = vmatprep.subr.mxu0 0.0
    %1815 = vmatpush1.msra.mxu0 0.0
    %1816 = vmatprep.subr.mxu0 0.0
    %1817 = vmatpush1.msra.mxu0 0.0
    %1818 = vmatprep.subr.mxu0 0.0
    %1819 = vmatpush1.msra.mxu0 0.0
    %1820 = vmatprep.subr.mxu0 0.0
    %1821 = vmatpush1.msra.mxu0 0.0
    %1822 = vmatprep.subr.mxu0 0.0
    %1823 = vmatpush1.msra.mxu0 0.0
    %1824 = vmatprep.subr.mxu0 0.0
    %1825 = vmatpush1.msra.mxu0 0.0
    %1826 = vmatprep.subr.mxu0 0.0
    %1827 = vmatpush1.msra.mxu0 0.0
    %1828 = vmatprep.subr.mxu0 0.0
    %1829 = vmatpush1.msra.mxu0 0.0
    %1830 = vmatprep.subr.mxu0 0.0
    %1831 = vmatpush1.msra.mxu0 0.0
    %1832 = vmatprep.subr.mxu0 0.0
    %1833 = vmatpush1.msra.mxu0 0.0
    %1834 = vmatprep.subr.mxu0 0.0
    %1835 = vmatpush1.msra.mxu0 0.0
    %1836 = vmatprep.subr.mxu0 0.0
    %1837 = vmatpush1.msra.mxu0 0.0
    %1838 = vmatprep.subr.mxu0 0.0
    %1839 = vmatpush1.msra.mxu0 0.0
    %1840 = vmatprep.subr.mxu0 0.0
    %1841 = vmatpush1.msra.mxu0 0.0
    %1842 = vmatprep.mubr.f32.mxu0 0.0
    %1843 = vmatmul.mubr.f32.gmra.mrb[0].mxu0 %v1773
    %v1844 = vpop.f32.mrb[0].mxu0
    %v1845 = vadd.f32 0.0, %v1844
    %v1846 = vpop.f32.mrb[0].mxu0
    %1847 = vmatprep.mubr.f32.mxu0 0.0
    %1848 = vmatmul.mubr.f32.gmra.mrb[0].mxu0 %v1776
    %v1849 = vpop.f32.mrb[0].mxu0
    %v1850 = vadd.f32 0.0, %v1849
    %v1851 = vpop.f32.mrb[0].mxu0
    %1852 = vdwg.mxu0
    %v1853 = vadd.f32 %v1438, %v1845
    %v1854 = vadd.f32 %v1439, %v1850
    %v1856 = vlaneseq
    %v1857 = vshrl.u32 %v1856, 7
    %v1858 = vsub.s32 0, %v1857
    %v1859 = vrot.slane %v199, %v1858
    %v1861 = vadd.f32 %v1853, %v1859
    %v1862 = vadd.f32 %v1854, %v1859
    %v1863 = vadd.f32 %v98, %v1861
    %v1864 = vadd.f32 %v99, %v1862
    %v1865 = vld [vmem:[%s12] sm:$0x1]
    %v1866 = vld [vmem:[%s12 + $0x1] sm:$0x1]
    %v1867 = vsel %vm113, %v1863, 0.0
    %1868 = vadd.xlane.f32.xlu0 %v1867
    %v1869 = vpop.xlane.xlu0 %1868
    %v1870 = vsel %vm113, %v1864, 0.0
    %1871 = vadd.xlane.f32.xlu0 %v1870
    %v1872 = vpop.xlane.xlu0 %1871
    %v1873 = vrcp.pop 32.0
    %v1874 = vmul.f32 %v1869, %v1873
    %v1875 = vmul.f32 %v1872, %v1873
    %v1876 = vsub.f32 %v1863, %v1874
    %v1877 = vsub.f32 %v1864, %v1875
    %v1878 = vmul.f32 %v1876, %v1876
    %v1879 = vmul.f32 %v1877, %v1877
    %v1880 = vsel %vm113, %v1878, 0.0
    %1881 = vadd.xlane.f32.xlu0 %v1880
    %v1882 = vpop.xlane.xlu0 %1881
    %v1883 = vsel %vm113, %v1879, 0.0
    %1884 = vadd.xlane.f32.xlu0 %v1883
    %v1885 = vpop.xlane.xlu0 %1884
    %v1886 = vmul.f32 %v1882, %v1873
    %v1887 = vmul.f32 %v1885, %v1873
    %v1888 = vadd.f32 %v1886, 1e-12
    %v1889 = vadd.f32 %v1887, 1e-12
    %v1890 = vrsqrt.pop %v1888
    %v1891 = vrsqrt.pop %v1889
    %v1892 = vmul.f32 %v1876, %v1890
    %v1893 = vmul.f32 %v1877, %v1891
    %v1894 = vlaneseq
    %v1895 = vshrl.u32 %v1894, 7
    %v1896 = vsub.s32 0, %v1895
    %v1897 = vrot.slane %v1865, %v1896
    %v1898 = vmul.f32 %v1892, %v1897
    %v1899 = vmul.f32 %v1893, %v1897
    %v1900 = vlaneseq
    %v1901 = vshrl.u32 %v1900, 7
    %v1902 = vsub.s32 0, %v1901
    %v1903 = vrot.slane %v1866, %v1902
    %v1904 = vadd.f32 %v1898, %v1903
    %v1905 = vadd.f32 %v1899, %v1903
    %v1906 = vld [vmem:[%s6] sm:$0xff]
    %v1907 = vld [vmem:[%s6 + $0x8] sm:$0xff]
    %v1908 = vld [vmem:[%s6 + $0x10] sm:$0xff]
    %v1909 = vld [vmem:[%s6 + $0x18] sm:$0xff]
    %v1910 = vld [vmem:[%s7] sm:$0x1]
    %v1912 = vlaneseq
    %v1913 = vshrl.u32 %v1912, 7
    %v1914 = vsub.s32 0, %v1913
    %v1915 = vrot.slane %v1910, %v1914
    %v1918 = vsel %vm113, %v1904, 0
    %v1921 = vsel %vm113, %v1905, 0
    %1923 = vmatprep.subr.mxu0 0.0
    %1924 = vmatpush1.msra.mxu0 %v1906
    %1925 = vmatprep.subr.mxu0 0.0
    %1926 = vmatpush1.msra.mxu0 %v1907
    %1927 = vmatprep.subr.mxu0 0.0
    %1928 = vmatpush1.msra.mxu0 %v1908
    %1929 = vmatprep.subr.mxu0 0.0
    %1930 = vmatpush1.msra.mxu0 %v1909
    %1931 = vmatprep.subr.mxu0 0.0
    %1932 = vmatpush1.msra.mxu0 0.0
    %1933 = vmatprep.subr.mxu0 0.0
    %1934 = vmatpush1.msra.mxu0 0.0
    %1935 = vmatprep.subr.mxu0 0.0
    %1936 = vmatpush1.msra.mxu0 0.0
    %1937 = vmatprep.subr.mxu0 0.0
    %1938 = vmatpush1.msra.mxu0 0.0
    %1939 = vmatprep.subr.mxu0 0.0
    %1940 = vmatpush1.msra.mxu0 0.0
    %1941 = vmatprep.subr.mxu0 0.0
    %1942 = vmatpush1.msra.mxu0 0.0
    %1943 = vmatprep.subr.mxu0 0.0
    %1944 = vmatpush1.msra.mxu0 0.0
    %1945 = vmatprep.subr.mxu0 0.0
    %1946 = vmatpush1.msra.mxu0 0.0
    %1947 = vmatprep.subr.mxu0 0.0
    %1948 = vmatpush1.msra.mxu0 0.0
    %1949 = vmatprep.subr.mxu0 0.0
    %1950 = vmatpush1.msra.mxu0 0.0
    %1951 = vmatprep.subr.mxu0 0.0
    %1952 = vmatpush1.msra.mxu0 0.0
    %1953 = vmatprep.subr.mxu0 0.0
    %1954 = vmatpush1.msra.mxu0 0.0
    %1955 = vmatprep.subr.mxu0 0.0
    %1956 = vmatpush1.msra.mxu0 0.0
    %1957 = vmatprep.subr.mxu0 0.0
    %1958 = vmatpush1.msra.mxu0 0.0
    %1959 = vmatprep.subr.mxu0 0.0
    %1960 = vmatpush1.msra.mxu0 0.0
    %1961 = vmatprep.subr.mxu0 0.0
    %1962 = vmatpush1.msra.mxu0 0.0
    %1963 = vmatprep.subr.mxu0 0.0
    %1964 = vmatpush1.msra.mxu0 0.0
    %1965 = vmatprep.subr.mxu0 0.0
    %1966 = vmatpush1.msra.mxu0 0.0
    %1967 = vmatprep.subr.mxu0 0.0
    %1968 = vmatpush1.msra.mxu0 0.0
    %1969 = vmatprep.subr.mxu0 0.0
    %1970 = vmatpush1.msra.mxu0 0.0
    %1971 = vmatprep.subr.mxu0 0.0
    %1972 = vmatpush1.msra.mxu0 0.0
    %1973 = vmatprep.subr.mxu0 0.0
    %1974 = vmatpush1.msra.mxu0 0.0
    %1975 = vmatprep.subr.mxu0 0.0
    %1976 = vmatpush1.msra.mxu0 0.0
    %1977 = vmatprep.subr.mxu0 0.0
    %1978 = vmatpush1.msra.mxu0 0.0
    %1979 = vmatprep.subr.mxu0 0.0
    %1980 = vmatpush1.msra.mxu0 0.0
    %1981 = vmatprep.subr.mxu0 0.0
    %1982 = vmatpush1.msra.mxu0 0.0
    %1983 = vmatprep.subr.mxu0 0.0
    %1984 = vmatpush1.msra.mxu0 0.0
    %1985 = vmatprep.subr.mxu0 0.0
    %1986 = vmatpush1.msra.mxu0 0.0
    %1987 = vmatprep.mubr.f32.mxu0 0.0
    %1988 = vmatmul.mubr.f32.gmra.mrb[0].mxu0 %v1918
    %v1989 = vpop.f32.mrb[0].mxu0
    %v1990 = vadd.f32 %v1915, %v1989
    %v1991 = vpop.f32.mrb[0].mxu0
    %1992 = vmatprep.mubr.f32.mxu0 0.0
    %1993 = vmatmul.mubr.f32.gmra.mrb[0].mxu0 %v1921
    %v1994 = vpop.f32.mrb[0].mxu0
    %v1995 = vadd.f32 %v1915, %v1994
    %v1996 = vpop.f32.mrb[0].mxu0
    %1997 = vdwg.mxu0
    %v1998 = vld [vmem:[%s8] sm:$0xff]
    %v1999 = vld [vmem:[%s8 + $0x8] sm:$0xff]
    %v2000 = vld [vmem:[%s8 + $0x10] sm:$0xff]
    %v2001 = vld [vmem:[%s8 + $0x18] sm:$0xff]
    %v2002 = vld [vmem:[%s9] sm:$0x1]
    %v2004 = vlaneseq
    %v2005 = vshrl.u32 %v2004, 7
    %v2006 = vsub.s32 0, %v2005
    %v2007 = vrot.slane %v2002, %v2006
    %v2010 = vsel %vm113, %v100, 0
    %v2013 = vsel %vm113, %v101, 0
    %2015 = vmatprep.subr.mxu0 0.0
    %2016 = vmatpush1.msra.mxu0 %v1998
    %2017 = vmatprep.subr.mxu0 0.0
    %2018 = vmatpush1.msra.mxu0 %v1999
    %2019 = vmatprep.subr.mxu0 0.0
    %2020 = vmatpush1.msra.mxu0 %v2000
    %2021 = vmatprep.subr.mxu0 0.0
    %2022 = vmatpush1.msra.mxu0 %v2001
    %2023 = vmatprep.subr.mxu0 0.0
    %2024 = vmatpush1.msra.mxu0 0.0
    %2025 = vmatprep.subr.mxu0 0.0
    %2026 = vmatpush1.msra.mxu0 0.0
    %2027 = vmatprep.subr.mxu0 0.0
    %2028 = vmatpush1.msra.mxu0 0.0
    %2029 = vmatprep.subr.mxu0 0.0
    %2030 = vmatpush1.msra.mxu0 0.0
    %2031 = vmatprep.subr.mxu0 0.0
    %2032 = vmatpush1.msra.mxu0 0.0
    %2033 = vmatprep.subr.mxu0 0.0
    %2034 = vmatpush1.msra.mxu0 0.0
    %2035 = vmatprep.subr.mxu0 0.0
    %2036 = vmatpush1.msra.mxu0 0.0
    %2037 = vmatprep.subr.mxu0 0.0
    %2038 = vmatpush1.msra.mxu0 0.0
    %2039 = vmatprep.subr.mxu0 0.0
    %2040 = vmatpush1.msra.mxu0 0.0
    %2041 = vmatprep.subr.mxu0 0.0
    %2042 = vmatpush1.msra.mxu0 0.0
    %2043 = vmatprep.subr.mxu0 0.0
    %2044 = vmatpush1.msra.mxu0 0.0
    %2045 = vmatprep.subr.mxu0 0.0
    %2046 = vmatpush1.msra.mxu0 0.0
    %2047 = vmatprep.subr.mxu0 0.0
    %2048 = vmatpush1.msra.mxu0 0.0
    %2049 = vmatprep.subr.mxu0 0.0
    %2050 = vmatpush1.msra.mxu0 0.0
    %2051 = vmatprep.subr.mxu0 0.0
    %2052 = vmatpush1.msra.mxu0 0.0
    %2053 = vmatprep.subr.mxu0 0.0
    %2054 = vmatpush1.msra.mxu0 0.0
    %2055 = vmatprep.subr.mxu0 0.0
    %2056 = vmatpush1.msra.mxu0 0.0
    %2057 = vmatprep.subr.mxu0 0.0
    %2058 = vmatpush1.msra.mxu0 0.0
    %2059 = vmatprep.subr.mxu0 0.0
    %2060 = vmatpush1.msra.mxu0 0.0
    %2061 = vmatprep.subr.mxu0 0.0
    %2062 = vmatpush1.msra.mxu0 0.0
    %2063 = vmatprep.subr.mxu0 0.0
    %2064 = vmatpush1.msra.mxu0 0.0
    %2065 = vmatprep.subr.mxu0 0.0
    %2066 = vmatpush1.msra.mxu0 0.0
    %2067 = vmatprep.subr.mxu0 0.0
    %2068 = vmatpush1.msra.mxu0 0.0
    %2069 = vmatprep.subr.mxu0 0.0
    %2070 = vmatpush1.msra.mxu0 0.0
    %2071 = vmatprep.subr.mxu0 0.0
    %2072 = vmatpush1.msra.mxu0 0.0
    %2073 = vmatprep.subr.mxu0 0.0
    %2074 = vmatpush1.msra.mxu0 0.0
    %2075 = vmatprep.subr.mxu0 0.0
    %2076 = vmatpush1.msra.mxu0 0.0
    %2077 = vmatprep.subr.mxu0 0.0
    %2078 = vmatpush1.msra.mxu0 0.0
    %2079 = vmatprep.mubr.f32.mxu0 0.0
    %2080 = vmatmul.mubr.f32.gmra.mrb[0].mxu0 %v2010
    %v2081 = vpop.f32.mrb[0].mxu0
    %v2082 = vadd.f32 %v2007, %v2081
    %v2083 = vpop.f32.mrb[0].mxu0
    %2084 = vmatprep.mubr.f32.mxu0 0.0
    %2085 = vmatmul.mubr.f32.gmra.mrb[0].mxu0 %v2013
    %v2086 = vpop.f32.mrb[0].mxu0
    %v2087 = vadd.f32 %v2007, %v2086
    %v2088 = vpop.f32.mrb[0].mxu0
    %2089 = vdwg.mxu0
    %v2090 = vld [vmem:[%s10] sm:$0xff]
    %v2091 = vld [vmem:[%s10 + $0x8] sm:$0xff]
    %v2092 = vld [vmem:[%s10 + $0x10] sm:$0xff]
    %v2093 = vld [vmem:[%s10 + $0x18] sm:$0xff]
    %v2094 = vld [vmem:[%s11] sm:$0x1]
    %v2096 = vsel %vm203, %v1990, 0
    %v2099 = vsel %vm203, %v2082, 0
    %2101 = vmatprep.subr.mxu0 0.0
    %2102 = vmatpush1.xpose.msra.mxu0 %v2099
    %2103 = vmatprep.subr.mxu0 0.0
    %2104 = vmatpush1.xpose.msra.mxu0 0.0
    %2105 = vmatprep.subr.mxu0 0.0
    %2106 = vmatpush1.xpose.msra.mxu0 0.0
    %2107 = vmatprep.subr.mxu0 0.0
    %2108 = vmatpush1.xpose.msra.mxu0 0.0
    %2109 = vmatprep.subr.mxu0 0.0
    %2110 = vmatpush1.xpose.msra.mxu0 0.0
    %2111 = vmatprep.subr.mxu0 0.0
    %2112 = vmatpush1.xpose.msra.mxu0 0.0
    %2113 = vmatprep.subr.mxu0 0.0
    %2114 = vmatpush1.xpose.msra.mxu0 0.0
    %2115 = vmatprep.subr.mxu0 0.0
    %2116 = vmatpush1.xpose.msra.mxu0 0.0
    %2117 = vmatprep.subr.mxu0 0.0
    %2118 = vmatpush1.xpose.msra.mxu0 0.0
    %2119 = vmatprep.subr.mxu0 0.0
    %2120 = vmatpush1.xpose.msra.mxu0 0.0
    %2121 = vmatprep.subr.mxu0 0.0
    %2122 = vmatpush1.xpose.msra.mxu0 0.0
    %2123 = vmatprep.subr.mxu0 0.0
    %2124 = vmatpush1.xpose.msra.mxu0 0.0
    %2125 = vmatprep.subr.mxu0 0.0
    %2126 = vmatpush1.xpose.msra.mxu0 0.0
    %2127 = vmatprep.subr.mxu0 0.0
    %2128 = vmatpush1.xpose.msra.mxu0 0.0
    %2129 = vmatprep.subr.mxu0 0.0
    %2130 = vmatpush1.xpose.msra.mxu0 0.0
    %2131 = vmatprep.subr.mxu0 0.0
    %2132 = vmatpush1.xpose.msra.mxu0 0.0
    %2133 = vmatprep.subr.mxu0 0.0
    %2134 = vmatpush1.xpose.msra.mxu0 0.0
    %2135 = vmatprep.subr.mxu0 0.0
    %2136 = vmatpush1.xpose.msra.mxu0 0.0
    %2137 = vmatprep.subr.mxu0 0.0
    %2138 = vmatpush1.xpose.msra.mxu0 0.0
    %2139 = vmatprep.subr.mxu0 0.0
    %2140 = vmatpush1.xpose.msra.mxu0 0.0
    %2141 = vmatprep.subr.mxu0 0.0
    %2142 = vmatpush1.xpose.msra.mxu0 0.0
    %2143 = vmatprep.subr.mxu0 0.0
    %2144 = vmatpush1.xpose.msra.mxu0 0.0
    %2145 = vmatprep.subr.mxu0 0.0
    %2146 = vmatpush1.xpose.msra.mxu0 0.0
    %2147 = vmatprep.subr.mxu0 0.0
    %2148 = vmatpush1.xpose.msra.mxu0 0.0
    %2149 = vmatprep.subr.mxu0 0.0
    %2150 = vmatpush1.xpose.msra.mxu0 0.0
    %2151 = vmatprep.subr.mxu0 0.0
    %2152 = vmatpush1.xpose.msra.mxu0 0.0
    %2153 = vmatprep.subr.mxu0 0.0
    %2154 = vmatpush1.xpose.msra.mxu0 0.0
    %2155 = vmatprep.subr.mxu0 0.0
    %2156 = vmatpush1.xpose.msra.mxu0 0.0
    %2157 = vmatprep.subr.mxu0 0.0
    %2158 = vmatpush1.xpose.msra.mxu0 0.0
    %2159 = vmatprep.subr.mxu0 0.0
    %2160 = vmatpush1.xpose.msra.mxu0 0.0
    %2161 = vmatprep.subr.mxu0 0.0
    %2162 = vmatpush1.xpose.msra.mxu0 0.0
    %2163 = vmatprep.subr.mxu0 0.0
    %2164 = vmatpush1.xpose.msra.mxu0 0.0
    %2165 = vmatprep.mubr.f32.mxu0 0.0
    %2166 = vmatmul.mubr.f32.gmra.mrb[0].mxu0 %v2096
    %v2167 = vpop.f32.mrb[0].mxu0
    %v2168 = vadd.f32 0.0, %v2167
    %v2169 = vpop.f32.mrb[0].mxu0
    %2170 = vdwg.mxu0
    %v2172 = vsel %vm203, %v1995, 0
    %v2175 = vsel %vm203, %v2087, 0
    %2177 = vmatprep.subr.mxu0 0.0
    %2178 = vmatpush1.xpose.msra.mxu0 %v2175
    %2179 = vmatprep.subr.mxu0 0.0
    %2180 = vmatpush1.xpose.msra.mxu0 0.0
    %2181 = vmatprep.subr.mxu0 0.0
    %2182 = vmatpush1.xpose.msra.mxu0 0.0
    %2183 = vmatprep.subr.mxu0 0.0
    %2184 = vmatpush1.xpose.msra.mxu0 0.0
    %2185 = vmatprep.subr.mxu0 0.0
    %2186 = vmatpush1.xpose.msra.mxu0 0.0
    %2187 = vmatprep.subr.mxu0 0.0
    %2188 = vmatpush1.xpose.msra.mxu0 0.0
    %2189 = vmatprep.subr.mxu0 0.0
    %2190 = vmatpush1.xpose.msra.mxu0 0.0
    %2191 = vmatprep.subr.mxu0 0.0
    %2192 = vmatpush1.xpose.msra.mxu0 0.0
    %2193 = vmatprep.subr.mxu0 0.0
    %2194 = vmatpush1.xpose.msra.mxu0 0.0
    %2195 = vmatprep.subr.mxu0 0.0
    %2196 = vmatpush1.xpose.msra.mxu0 0.0
    %2197 = vmatprep.subr.mxu0 0.0
    %2198 = vmatpush1.xpose.msra.mxu0 0.0
    %2199 = vmatprep.subr.mxu0 0.0
    %2200 = vmatpush1.xpose.msra.mxu0 0.0
    %2201 = vmatprep.subr.mxu0 0.0
    %2202 = vmatpush1.xpose.msra.mxu0 0.0
    %2203 = vmatprep.subr.mxu0 0.0
    %2204 = vmatpush1.xpose.msra.mxu0 0.0
    %2205 = vmatprep.subr.mxu0 0.0
    %2206 = vmatpush1.xpose.msra.mxu0 0.0
    %2207 = vmatprep.subr.mxu0 0.0
    %2208 = vmatpush1.xpose.msra.mxu0 0.0
    %2209 = vmatprep.subr.mxu0 0.0
    %2210 = vmatpush1.xpose.msra.mxu0 0.0
    %2211 = vmatprep.subr.mxu0 0.0
    %2212 = vmatpush1.xpose.msra.mxu0 0.0
    %2213 = vmatprep.subr.mxu0 0.0
    %2214 = vmatpush1.xpose.msra.mxu0 0.0
    %2215 = vmatprep.subr.mxu0 0.0
    %2216 = vmatpush1.xpose.msra.mxu0 0.0
    %2217 = vmatprep.subr.mxu0 0.0
    %2218 = vmatpush1.xpose.msra.mxu0 0.0
    %2219 = vmatprep.subr.mxu0 0.0
    %2220 = vmatpush1.xpose.msra.mxu0 0.0
    %2221 = vmatprep.subr.mxu0 0.0
    %2222 = vmatpush1.xpose.msra.mxu0 0.0
    %2223 = vmatprep.subr.mxu0 0.0
    %2224 = vmatpush1.xpose.msra.mxu0 0.0
    %2225 = vmatprep.subr.mxu0 0.0
    %2226 = vmatpush1.xpose.msra.mxu0 0.0
    %2227 = vmatprep.subr.mxu0 0.0
    %2228 = vmatpush1.xpose.msra.mxu0 0.0
    %2229 = vmatprep.subr.mxu0 0.0
    %2230 = vmatpush1.xpose.msra.mxu0 0.0
    %2231 = vmatprep.subr.mxu0 0.0
    %2232 = vmatpush1.xpose.msra.mxu0 0.0
    %2233 = vmatprep.subr.mxu0 0.0
    %2234 = vmatpush1.xpose.msra.mxu0 0.0
    %2235 = vmatprep.subr.mxu0 0.0
    %2236 = vmatpush1.xpose.msra.mxu0 0.0
    %2237 = vmatprep.subr.mxu0 0.0
    %2238 = vmatpush1.xpose.msra.mxu0 0.0
    %2239 = vmatprep.subr.mxu0 0.0
    %2240 = vmatpush1.xpose.msra.mxu0 0.0
    %2241 = vmatprep.mubr.f32.mxu0 0.0
    %2242 = vmatmul.mubr.f32.gmra.mrb[0].mxu0 %v2172
    %v2243 = vpop.f32.mrb[0].mxu0
    %v2244 = vadd.f32 0.0, %v2243
    %v2245 = vpop.f32.mrb[0].mxu0
    %2246 = vdwg.mxu0
    %v2247 = vmul.f32 %v2168, 0.35355338
    %v2248 = vmul.f32 %v2244, 0.35355338
    %v2249 = vsel %vm203, %v2247, -inf
    %2250 = vmax.xlane.f32.xlu0 %v2249
    %v2251 = vpop.xlane.xlu0 %2250
    %v2252 = vsel %vm203, %v2248, -inf
    %2253 = vmax.xlane.f32.xlu0 %v2252
    %v2254 = vpop.xlane.xlu0 %2253
    %v2255 = vsub.f32 %v2247, %v2251
    %v2256 = vsub.f32 %v2248, %v2254
    %v2257 = vmul.f32 %v2255, 1.442695
    %v2258 = vpow.pop %v2257
    %v2259 = vmul.f32 %v2256, 1.442695
    %v2260 = vpow.pop %v2259
    %v2261 = vsel %vm203, %v2258, 0.0
    %2262 = vadd.xlane.f32.xlu0 %v2261
    %v2263 = vpop.xlane.xlu0 %2262
    %v2264 = vsel %vm203, %v2260, 0.0
    %2265 = vadd.xlane.f32.xlu0 %v2264
    %v2266 = vpop.xlane.xlu0 %2265
    %v2267 = vrcp.pop %v2263
    %v2268 = vrcp.pop %v2266
    %v2269 = vmul.f32 %v2258, %v2267
    %v2270 = vmul.f32 %v2260, %v2268
    %2271 = vrot.lane.b32.xlu0 %v2082, 96
    %v2272 = vpop.permute.xlu0 %2271
    %v2275 = vsel %vm203, %v2269, 0
    %2277 = vmatprep.subr.mxu0 0.0
    %2278 = vmatpush1.msra.mxu0 %v2272
    %2279 = vmatprep.subr.mxu0 0.0
    %2280 = vmatpush1.msra.mxu0 0.0
    %2281 = vmatprep.subr.mxu0 0.0
    %2282 = vmatpush1.msra.mxu0 0.0
    %2283 = vmatprep.subr.mxu0 0.0
    %2284 = vmatpush1.msra.mxu0 0.0
    %2285 = vmatprep.subr.mxu0 0.0
    %2286 = vmatpush1.msra.mxu0 0.0
    %2287 = vmatprep.subr.mxu0 0.0
    %2288 = vmatpush1.msra.mxu0 0.0
    %2289 = vmatprep.subr.mxu0 0.0
    %2290 = vmatpush1.msra.mxu0 0.0
    %2291 = vmatprep.subr.mxu0 0.0
    %2292 = vmatpush1.msra.mxu0 0.0
    %2293 = vmatprep.subr.mxu0 0.0
    %2294 = vmatpush1.msra.mxu0 0.0
    %2295 = vmatprep.subr.mxu0 0.0
    %2296 = vmatpush1.msra.mxu0 0.0
    %2297 = vmatprep.subr.mxu0 0.0
    %2298 = vmatpush1.msra.mxu0 0.0
    %2299 = vmatprep.subr.mxu0 0.0
    %2300 = vmatpush1.msra.mxu0 0.0
    %2301 = vmatprep.subr.mxu0 0.0
    %2302 = vmatpush1.msra.mxu0 0.0
    %2303 = vmatprep.subr.mxu0 0.0
    %2304 = vmatpush1.msra.mxu0 0.0
    %2305 = vmatprep.subr.mxu0 0.0
    %2306 = vmatpush1.msra.mxu0 0.0
    %2307 = vmatprep.subr.mxu0 0.0
    %2308 = vmatpush1.msra.mxu0 0.0
    %2309 = vmatprep.subr.mxu0 0.0
    %2310 = vmatpush1.msra.mxu0 0.0
    %2311 = vmatprep.subr.mxu0 0.0
    %2312 = vmatpush1.msra.mxu0 0.0
    %2313 = vmatprep.subr.mxu0 0.0
    %2314 = vmatpush1.msra.mxu0 0.0
    %2315 = vmatprep.subr.mxu0 0.0
    %2316 = vmatpush1.msra.mxu0 0.0
    %2317 = vmatprep.subr.mxu0 0.0
    %2318 = vmatpush1.msra.mxu0 0.0
    %2319 = vmatprep.subr.mxu0 0.0
    %2320 = vmatpush1.msra.mxu0 0.0
    %2321 = vmatprep.subr.mxu0 0.0
    %2322 = vmatpush1.msra.mxu0 0.0
    %2323 = vmatprep.subr.mxu0 0.0
    %2324 = vmatpush1.msra.mxu0 0.0
    %2325 = vmatprep.subr.mxu0 0.0
    %2326 = vmatpush1.msra.mxu0 0.0
    %2327 = vmatprep.subr.mxu0 0.0
    %2328 = vmatpush1.msra.mxu0 0.0
    %2329 = vmatprep.subr.mxu0 0.0
    %2330 = vmatpush1.msra.mxu0 0.0
    %2331 = vmatprep.subr.mxu0 0.0
    %2332 = vmatpush1.msra.mxu0 0.0
    %2333 = vmatprep.subr.mxu0 0.0
    %2334 = vmatpush1.msra.mxu0 0.0
    %2335 = vmatprep.subr.mxu0 0.0
    %2336 = vmatpush1.msra.mxu0 0.0
    %2337 = vmatprep.subr.mxu0 0.0
    %2338 = vmatpush1.msra.mxu0 0.0
    %2339 = vmatprep.subr.mxu0 0.0
    %2340 = vmatpush1.msra.mxu0 0.0
    %2341 = vmatprep.mubr.f32.mxu0 0.0
    %2342 = vmatmul.mubr.f32.gmra.mrb[0].mxu0 %v2275
    %v2343 = vpop.f32.mrb[0].mxu0
    %v2344 = vadd.f32 0.0, %v2343
    %v2345 = vpop.f32.mrb[0].mxu0
    %2346 = vdwg.mxu0
    %2347 = vrot.lane.b32.xlu0 %v2087, 96
    %v2348 = vpop.permute.xlu0 %2347
    %v2351 = vsel %vm203, %v2270, 0
    %2353 = vmatprep.subr.mxu0 0.0
    %2354 = vmatpush1.msra.mxu0 %v2348
    %2355 = vmatprep.subr.mxu0 0.0
    %2356 = vmatpush1.msra.mxu0 0.0
    %2357 = vmatprep.subr.mxu0 0.0
    %2358 = vmatpush1.msra.mxu0 0.0
    %2359 = vmatprep.subr.mxu0 0.0
    %2360 = vmatpush1.msra.mxu0 0.0
    %2361 = vmatprep.subr.mxu0 0.0
    %2362 = vmatpush1.msra.mxu0 0.0
    %2363 = vmatprep.subr.mxu0 0.0
    %2364 = vmatpush1.msra.mxu0 0.0
    %2365 = vmatprep.subr.mxu0 0.0
    %2366 = vmatpush1.msra.mxu0 0.0
    %2367 = vmatprep.subr.mxu0 0.0
    %2368 = vmatpush1.msra.mxu0 0.0
    %2369 = vmatprep.subr.mxu0 0.0
    %2370 = vmatpush1.msra.mxu0 0.0
    %2371 = vmatprep.subr.mxu0 0.0
    %2372 = vmatpush1.msra.mxu0 0.0
    %2373 = vmatprep.subr.mxu0 0.0
    %2374 = vmatpush1.msra.mxu0 0.0
    %2375 = vmatprep.subr.mxu0 0.0
    %2376 = vmatpush1.msra.mxu0 0.0
    %2377 = vmatprep.subr.mxu0 0.0
    %2378 = vmatpush1.msra.mxu0 0.0
    %2379 = vmatprep.subr.mxu0 0.0
    %2380 = vmatpush1.msra.mxu0 0.0
    %2381 = vmatprep.subr.mxu0 0.0
    %2382 = vmatpush1.msra.mxu0 0.0
    %2383 = vmatprep.subr.mxu0 0.0
    %2384 = vmatpush1.msra.mxu0 0.0
    %2385 = vmatprep.subr.mxu0 0.0
    %2386 = vmatpush1.msra.mxu0 0.0
    %2387 = vmatprep.subr.mxu0 0.0
    %2388 = vmatpush1.msra.mxu0 0.0
    %2389 = vmatprep.subr.mxu0 0.0
    %2390 = vmatpush1.msra.mxu0 0.0
    %2391 = vmatprep.subr.mxu0 0.0
    %2392 = vmatpush1.msra.mxu0 0.0
    %2393 = vmatprep.subr.mxu0 0.0
    %2394 = vmatpush1.msra.mxu0 0.0
    %2395 = vmatprep.subr.mxu0 0.0
    %2396 = vmatpush1.msra.mxu0 0.0
    %2397 = vmatprep.subr.mxu0 0.0
    %2398 = vmatpush1.msra.mxu0 0.0
    %2399 = vmatprep.subr.mxu0 0.0
    %2400 = vmatpush1.msra.mxu0 0.0
    %2401 = vmatprep.subr.mxu0 0.0
    %2402 = vmatpush1.msra.mxu0 0.0
    %2403 = vmatprep.subr.mxu0 0.0
    %2404 = vmatpush1.msra.mxu0 0.0
    %2405 = vmatprep.subr.mxu0 0.0
    %2406 = vmatpush1.msra.mxu0 0.0
    %2407 = vmatprep.subr.mxu0 0.0
    %2408 = vmatpush1.msra.mxu0 0.0
    %2409 = vmatprep.subr.mxu0 0.0
    %2410 = vmatpush1.msra.mxu0 0.0
    %2411 = vmatprep.subr.mxu0 0.0
    %2412 = vmatpush1.msra.mxu0 0.0
    %2413 = vmatprep.subr.mxu0 0.0
    %2414 = vmatpush1.msra.mxu0 0.0
    %2415 = vmatprep.subr.mxu0 0.0
    %2416 = vmatpush1.msra.mxu0 0.0
    %2417 = vmatprep.mubr.f32.mxu0 0.0
    %2418 = vmatmul.mubr.f32.gmra.mrb[0].mxu0 %v2351
    %v2419 = vpop.f32.mrb[0].mxu0
    %v2420 = vadd.f32 0.0, %v2419
    %v2421 = vpop.f32.mrb[0].mxu0
    %2422 = vdwg.mxu0
    %2423 = vrot.lane.b32.xlu0 %v1990, 120
    %v2424 = vpop.permute.xlu0 %2423
    %2425 = vrot.lane.b32.xlu0 %v2082, 120
    %v2426 = vpop.permute.xlu0 %2425
    %v2427 = vsel %vm203, %v2424, 0
    %v2429 = vsel %vm203, %v2426, 0
    %2431 = vmatprep.subr.mxu0 0.0
    %2432 = vmatpush1.xpose.msra.mxu0 %v2429
    %2433 = vmatprep.subr.mxu0 0.0
    %2434 = vmatpush1.xpose.msra.mxu0 0.0
    %2435 = vmatprep.subr.mxu0 0.0
    %2436 = vmatpush1.xpose.msra.mxu0 0.0
    %2437 = vmatprep.subr.mxu0 0.0
    %2438 = vmatpush1.xpose.msra.mxu0 0.0
    %2439 = vmatprep.subr.mxu0 0.0
    %2440 = vmatpush1.xpose.msra.mxu0 0.0
    %2441 = vmatprep.subr.mxu0 0.0
    %2442 = vmatpush1.xpose.msra.mxu0 0.0
    %2443 = vmatprep.subr.mxu0 0.0
    %2444 = vmatpush1.xpose.msra.mxu0 0.0
    %2445 = vmatprep.subr.mxu0 0.0
    %2446 = vmatpush1.xpose.msra.mxu0 0.0
    %2447 = vmatprep.subr.mxu0 0.0
    %2448 = vmatpush1.xpose.msra.mxu0 0.0
    %2449 = vmatprep.subr.mxu0 0.0
    %2450 = vmatpush1.xpose.msra.mxu0 0.0
    %2451 = vmatprep.subr.mxu0 0.0
    %2452 = vmatpush1.xpose.msra.mxu0 0.0
    %2453 = vmatprep.subr.mxu0 0.0
    %2454 = vmatpush1.xpose.msra.mxu0 0.0
    %2455 = vmatprep.subr.mxu0 0.0
    %2456 = vmatpush1.xpose.msra.mxu0 0.0
    %2457 = vmatprep.subr.mxu0 0.0
    %2458 = vmatpush1.xpose.msra.mxu0 0.0
    %2459 = vmatprep.subr.mxu0 0.0
    %2460 = vmatpush1.xpose.msra.mxu0 0.0
    %2461 = vmatprep.subr.mxu0 0.0
    %2462 = vmatpush1.xpose.msra.mxu0 0.0
    %2463 = vmatprep.subr.mxu0 0.0
    %2464 = vmatpush1.xpose.msra.mxu0 0.0
    %2465 = vmatprep.subr.mxu0 0.0
    %2466 = vmatpush1.xpose.msra.mxu0 0.0
    %2467 = vmatprep.subr.mxu0 0.0
    %2468 = vmatpush1.xpose.msra.mxu0 0.0
    %2469 = vmatprep.subr.mxu0 0.0
    %2470 = vmatpush1.xpose.msra.mxu0 0.0
    %2471 = vmatprep.subr.mxu0 0.0
    %2472 = vmatpush1.xpose.msra.mxu0 0.0
    %2473 = vmatprep.subr.mxu0 0.0
    %2474 = vmatpush1.xpose.msra.mxu0 0.0
    %2475 = vmatprep.subr.mxu0 0.0
    %2476 = vmatpush1.xpose.msra.mxu0 0.0
    %2477 = vmatprep.subr.mxu0 0.0
    %2478 = vmatpush1.xpose.msra.mxu0 0.0
    %2479 = vmatprep.subr.mxu0 0.0
    %2480 = vmatpush1.xpose.msra.mxu0 0.0
    %2481 = vmatprep.subr.mxu0 0.0
    %2482 = vmatpush1.xpose.msra.mxu0 0.0
    %2483 = vmatprep.subr.mxu0 0.0
    %2484 = vmatpush1.xpose.msra.mxu0 0.0
    %2485 = vmatprep.subr.mxu0 0.0
    %2486 = vmatpush1.xpose.msra.mxu0 0.0
    %2487 = vmatprep.subr.mxu0 0.0
    %2488 = vmatpush1.xpose.msra.mxu0 0.0
    %2489 = vmatprep.subr.mxu0 0.0
    %2490 = vmatpush1.xpose.msra.mxu0 0.0
    %2491 = vmatprep.subr.mxu0 0.0
    %2492 = vmatpush1.xpose.msra.mxu0 0.0
    %2493 = vmatprep.subr.mxu0 0.0
    %2494 = vmatpush1.xpose.msra.mxu0 0.0
    %2495 = vmatprep.mubr.f32.mxu0 0.0
    %2496 = vmatmul.mubr.f32.gmra.mrb[0].mxu0 %v2427
    %v2497 = vpop.f32.mrb[0].mxu0
    %v2498 = vadd.f32 0.0, %v2497
    %v2499 = vpop.f32.mrb[0].mxu0
    %2500 = vdwg.mxu0
    %2501 = vrot.lane.b32.xlu0 %v1995, 120
    %v2502 = vpop.permute.xlu0 %2501
    %2503 = vrot.lane.b32.xlu0 %v2087, 120
    %v2504 = vpop.permute.xlu0 %2503
    %v2505 = vsel %vm203, %v2502, 0
    %v2507 = vsel %vm203, %v2504, 0
    %2509 = vmatprep.subr.mxu0 0.0
    %2510 = vmatpush1.xpose.msra.mxu0 %v2507
    %2511 = vmatprep.subr.mxu0 0.0
    %2512 = vmatpush1.xpose.msra.mxu0 0.0
    %2513 = vmatprep.subr.mxu0 0.0
    %2514 = vmatpush1.xpose.msra.mxu0 0.0
    %2515 = vmatprep.subr.mxu0 0.0
    %2516 = vmatpush1.xpose.msra.mxu0 0.0
    %2517 = vmatprep.subr.mxu0 0.0
    %2518 = vmatpush1.xpose.msra.mxu0 0.0
    %2519 = vmatprep.subr.mxu0 0.0
    %2520 = vmatpush1.xpose.msra.mxu0 0.0
    %2521 = vmatprep.subr.mxu0 0.0
    %2522 = vmatpush1.xpose.msra.mxu0 0.0
    %2523 = vmatprep.subr.mxu0 0.0
    %2524 = vmatpush1.xpose.msra.mxu0 0.0
    %2525 = vmatprep.subr.mxu0 0.0
    %2526 = vmatpush1.xpose.msra.mxu0 0.0
    %2527 = vmatprep.subr.mxu0 0.0
    %2528 = vmatpush1.xpose.msra.mxu0 0.0
    %2529 = vmatprep.subr.mxu0 0.0
    %2530 = vmatpush1.xpose.msra.mxu0 0.0
    %2531 = vmatprep.subr.mxu0 0.0
    %2532 = vmatpush1.xpose.msra.mxu0 0.0
    %2533 = vmatprep.subr.mxu0 0.0
    %2534 = vmatpush1.xpose.msra.mxu0 0.0
    %2535 = vmatprep.subr.mxu0 0.0
    %2536 = vmatpush1.xpose.msra.mxu0 0.0
    %2537 = vmatprep.subr.mxu0 0.0
    %2538 = vmatpush1.xpose.msra.mxu0 0.0
    %2539 = vmatprep.subr.mxu0 0.0
    %2540 = vmatpush1.xpose.msra.mxu0 0.0
    %2541 = vmatprep.subr.mxu0 0.0
    %2542 = vmatpush1.xpose.msra.mxu0 0.0
    %2543 = vmatprep.subr.mxu0 0.0
    %2544 = vmatpush1.xpose.msra.mxu0 0.0
    %2545 = vmatprep.subr.mxu0 0.0
    %2546 = vmatpush1.xpose.msra.mxu0 0.0
    %2547 = vmatprep.subr.mxu0 0.0
    %2548 = vmatpush1.xpose.msra.mxu0 0.0
    %2549 = vmatprep.subr.mxu0 0.0
    %2550 = vmatpush1.xpose.msra.mxu0 0.0
    %2551 = vmatprep.subr.mxu0 0.0
    %2552 = vmatpush1.xpose.msra.mxu0 0.0
    %2553 = vmatprep.subr.mxu0 0.0
    %2554 = vmatpush1.xpose.msra.mxu0 0.0
    %2555 = vmatprep.subr.mxu0 0.0
    %2556 = vmatpush1.xpose.msra.mxu0 0.0
    %2557 = vmatprep.subr.mxu0 0.0
    %2558 = vmatpush1.xpose.msra.mxu0 0.0
    %2559 = vmatprep.subr.mxu0 0.0
    %2560 = vmatpush1.xpose.msra.mxu0 0.0
    %2561 = vmatprep.subr.mxu0 0.0
    %2562 = vmatpush1.xpose.msra.mxu0 0.0
    %2563 = vmatprep.subr.mxu0 0.0
    %2564 = vmatpush1.xpose.msra.mxu0 0.0
    %2565 = vmatprep.subr.mxu0 0.0
    %2566 = vmatpush1.xpose.msra.mxu0 0.0
    %2567 = vmatprep.subr.mxu0 0.0
    %2568 = vmatpush1.xpose.msra.mxu0 0.0
    %2569 = vmatprep.subr.mxu0 0.0
    %2570 = vmatpush1.xpose.msra.mxu0 0.0
    %2571 = vmatprep.subr.mxu0 0.0
    %2572 = vmatpush1.xpose.msra.mxu0 0.0
    %2573 = vmatprep.mubr.f32.mxu0 0.0
    %2574 = vmatmul.mubr.f32.gmra.mrb[0].mxu0 %v2505
    %v2575 = vpop.f32.mrb[0].mxu0
    %v2576 = vadd.f32 0.0, %v2575
    %v2577 = vpop.f32.mrb[0].mxu0
    %2578 = vdwg.mxu0
    %v2579 = vmul.f32 %v2498, 0.35355338
    %v2580 = vmul.f32 %v2576, 0.35355338
    %v2581 = vsel %vm203, %v2579, -inf
    %2582 = vmax.xlane.f32.xlu0 %v2581
    %v2583 = vpop.xlane.xlu0 %2582
    %v2584 = vsel %vm203, %v2580, -inf
    %2585 = vmax.xlane.f32.xlu0 %v2584
    %v2586 = vpop.xlane.xlu0 %2585
    %v2587 = vsub.f32 %v2579, %v2583
    %v2588 = vsub.f32 %v2580, %v2586
    %v2589 = vmul.f32 %v2587, 1.442695
    %v2590 = vpow.pop %v2589
    %v2591 = vmul.f32 %v2588, 1.442695
    %v2592 = vpow.pop %v2591
    %v2593 = vsel %vm203, %v2590, 0.0
    %2594 = vadd.xlane.f32.xlu0 %v2593
    %v2595 = vpop.xlane.xlu0 %2594
    %v2596 = vsel %vm203, %v2592, 0.0
    %2597 = vadd.xlane.f32.xlu0 %v2596
    %v2598 = vpop.xlane.xlu0 %2597
    %v2599 = vrcp.pop %v2595
    %v2600 = vrcp.pop %v2598
    %v2601 = vmul.f32 %v2590, %v2599
    %v2602 = vmul.f32 %v2592, %v2600
    %2603 = vrot.lane.b32.xlu0 %v2082, 88
    %v2604 = vpop.permute.xlu0 %2603
    %v2607 = vsel %vm203, %v2601, 0
    %2609 = vmatprep.subr.mxu0 0.0
    %2610 = vmatpush1.msra.mxu0 %v2604
    %2611 = vmatprep.subr.mxu0 0.0
    %2612 = vmatpush1.msra.mxu0 0.0
    %2613 = vmatprep.subr.mxu0 0.0
    %2614 = vmatpush1.msra.mxu0 0.0
    %2615 = vmatprep.subr.mxu0 0.0
    %2616 = vmatpush1.msra.mxu0 0.0
    %2617 = vmatprep.subr.mxu0 0.0
    %2618 = vmatpush1.msra.mxu0 0.0
    %2619 = vmatprep.subr.mxu0 0.0
    %2620 = vmatpush1.msra.mxu0 0.0
    %2621 = vmatprep.subr.mxu0 0.0
    %2622 = vmatpush1.msra.mxu0 0.0
    %2623 = vmatprep.subr.mxu0 0.0
    %2624 = vmatpush1.msra.mxu0 0.0
    %2625 = vmatprep.subr.mxu0 0.0
    %2626 = vmatpush1.msra.mxu0 0.0
    %2627 = vmatprep.subr.mxu0 0.0
    %2628 = vmatpush1.msra.mxu0 0.0
    %2629 = vmatprep.subr.mxu0 0.0
    %2630 = vmatpush1.msra.mxu0 0.0
    %2631 = vmatprep.subr.mxu0 0.0
    %2632 = vmatpush1.msra.mxu0 0.0
    %2633 = vmatprep.subr.mxu0 0.0
    %2634 = vmatpush1.msra.mxu0 0.0
    %2635 = vmatprep.subr.mxu0 0.0
    %2636 = vmatpush1.msra.mxu0 0.0
    %2637 = vmatprep.subr.mxu0 0.0
    %2638 = vmatpush1.msra.mxu0 0.0
    %2639 = vmatprep.subr.mxu0 0.0
    %2640 = vmatpush1.msra.mxu0 0.0
    %2641 = vmatprep.subr.mxu0 0.0
    %2642 = vmatpush1.msra.mxu0 0.0
    %2643 = vmatprep.subr.mxu0 0.0
    %2644 = vmatpush1.msra.mxu0 0.0
    %2645 = vmatprep.subr.mxu0 0.0
    %2646 = vmatpush1.msra.mxu0 0.0
    %2647 = vmatprep.subr.mxu0 0.0
    %2648 = vmatpush1.msra.mxu0 0.0
    %2649 = vmatprep.subr.mxu0 0.0
    %2650 = vmatpush1.msra.mxu0 0.0
    %2651 = vmatprep.subr.mxu0 0.0
    %2652 = vmatpush1.msra.mxu0 0.0
    %2653 = vmatprep.subr.mxu0 0.0
    %2654 = vmatpush1.msra.mxu0 0.0
    %2655 = vmatprep.subr.mxu0 0.0
    %2656 = vmatpush1.msra.mxu0 0.0
    %2657 = vmatprep.subr.mxu0 0.0
    %2658 = vmatpush1.msra.mxu0 0.0
    %2659 = vmatprep.subr.mxu0 0.0
    %2660 = vmatpush1.msra.mxu0 0.0
    %2661 = vmatprep.subr.mxu0 0.0
    %2662 = vmatpush1.msra.mxu0 0.0
    %2663 = vmatprep.subr.mxu0 0.0
    %2664 = vmatpush1.msra.mxu0 0.0
    %2665 = vmatprep.subr.mxu0 0.0
    %2666 = vmatpush1.msra.mxu0 0.0
    %2667 = vmatprep.subr.mxu0 0.0
    %2668 = vmatpush1.msra.mxu0 0.0
    %2669 = vmatprep.subr.mxu0 0.0
    %2670 = vmatpush1.msra.mxu0 0.0
    %2671 = vmatprep.subr.mxu0 0.0
    %2672 = vmatpush1.msra.mxu0 0.0
    %2673 = vmatprep.mubr.f32.mxu0 0.0
    %2674 = vmatmul.mubr.f32.gmra.mrb[0].mxu0 %v2607
    %v2675 = vpop.f32.mrb[0].mxu0
    %v2676 = vadd.f32 0.0, %v2675
    %v2677 = vpop.f32.mrb[0].mxu0
    %2678 = vdwg.mxu0
    %2679 = vrot.lane.b32.xlu0 %v2087, 88
    %v2680 = vpop.permute.xlu0 %2679
    %v2683 = vsel %vm203, %v2602, 0
    %2685 = vmatprep.subr.mxu0 0.0
    %2686 = vmatpush1.msra.mxu0 %v2680
    %2687 = vmatprep.subr.mxu0 0.0
    %2688 = vmatpush1.msra.mxu0 0.0
    %2689 = vmatprep.subr.mxu0 0.0
    %2690 = vmatpush1.msra.mxu0 0.0
    %2691 = vmatprep.subr.mxu0 0.0
    %2692 = vmatpush1.msra.mxu0 0.0
    %2693 = vmatprep.subr.mxu0 0.0
    %2694 = vmatpush1.msra.mxu0 0.0
    %2695 = vmatprep.subr.mxu0 0.0
    %2696 = vmatpush1.msra.mxu0 0.0
    %2697 = vmatprep.subr.mxu0 0.0
    %2698 = vmatpush1.msra.mxu0 0.0
    %2699 = vmatprep.subr.mxu0 0.0
    %2700 = vmatpush1.msra.mxu0 0.0
    %2701 = vmatprep.subr.mxu0 0.0
    %2702 = vmatpush1.msra.mxu0 0.0
    %2703 = vmatprep.subr.mxu0 0.0
    %2704 = vmatpush1.msra.mxu0 0.0
    %2705 = vmatprep.subr.mxu0 0.0
    %2706 = vmatpush1.msra.mxu0 0.0
    %2707 = vmatprep.subr.mxu0 0.0
    %2708 = vmatpush1.msra.mxu0 0.0
    %2709 = vmatprep.subr.mxu0 0.0
    %2710 = vmatpush1.msra.mxu0 0.0
    %2711 = vmatprep.subr.mxu0 0.0
    %2712 = vmatpush1.msra.mxu0 0.0
    %2713 = vmatprep.subr.mxu0 0.0
    %2714 = vmatpush1.msra.mxu0 0.0
    %2715 = vmatprep.subr.mxu0 0.0
    %2716 = vmatpush1.msra.mxu0 0.0
    %2717 = vmatprep.subr.mxu0 0.0
    %2718 = vmatpush1.msra.mxu0 0.0
    %2719 = vmatprep.subr.mxu0 0.0
    %2720 = vmatpush1.msra.mxu0 0.0
    %2721 = vmatprep.subr.mxu0 0.0
    %2722 = vmatpush1.msra.mxu0 0.0
    %2723 = vmatprep.subr.mxu0 0.0
    %2724 = vmatpush1.msra.mxu0 0.0
    %2725 = vmatprep.subr.mxu0 0.0
    %2726 = vmatpush1.msra.mxu0 0.0
    %2727 = vmatprep.subr.mxu0 0.0
    %2728 = vmatpush1.msra.mxu0 0.0
    %2729 = vmatprep.subr.mxu0 0.0
    %2730 = vmatpush1.msra.mxu0 0.0
    %2731 = vmatprep.subr.mxu0 0.0
    %2732 = vmatpush1.msra.mxu0 0.0
    %2733 = vmatprep.subr.mxu0 0.0
    %2734 = vmatpush1.msra.mxu0 0.0
    %2735 = vmatprep.subr.mxu0 0.0
    %2736 = vmatpush1.msra.mxu0 0.0
    %2737 = vmatprep.subr.mxu0 0.0
    %2738 = vmatpush1.msra.mxu0 0.0
    %2739 = vmatprep.subr.mxu0 0.0
    %2740 = vmatpush1.msra.mxu0 0.0
    %2741 = vmatprep.subr.mxu0 0.0
    %2742 = vmatpush1.msra.mxu0 0.0
    %2743 = vmatprep.subr.mxu0 0.0
    %2744 = vmatpush1.msra.mxu0 0.0
    %2745 = vmatprep.subr.mxu0 0.0
    %2746 = vmatpush1.msra.mxu0 0.0
    %2747 = vmatprep.subr.mxu0 0.0
    %2748 = vmatpush1.msra.mxu0 0.0
    %2749 = vmatprep.mubr.f32.mxu0 0.0
    %2750 = vmatmul.mubr.f32.gmra.mrb[0].mxu0 %v2683
    %v2751 = vpop.f32.mrb[0].mxu0
    %v2752 = vadd.f32 0.0, %v2751
    %v2753 = vpop.f32.mrb[0].mxu0
    %2754 = vdwg.mxu0
    %v2756 = vsel %vm203, %v2676, 0
    %v2759 = vsel %vm203, %v2752, 0
    %2761 = vmatprep.subr.mxu0 0.0
    %2762 = vmatpush1.msra.mxu0 %v2091
    %2763 = vmatprep.subr.mxu0 0.0
    %2764 = vmatpush1.msra.mxu0 0.0
    %2765 = vmatprep.subr.mxu0 0.0
    %2766 = vmatpush1.msra.mxu0 0.0
    %2767 = vmatprep.subr.mxu0 0.0
    %2768 = vmatpush1.msra.mxu0 0.0
    %2769 = vmatprep.subr.mxu0 0.0
    %2770 = vmatpush1.msra.mxu0 0.0
    %2771 = vmatprep.subr.mxu0 0.0
    %2772 = vmatpush1.msra.mxu0 0.0
    %2773 = vmatprep.subr.mxu0 0.0
    %2774 = vmatpush1.msra.mxu0 0.0
    %2775 = vmatprep.subr.mxu0 0.0
    %2776 = vmatpush1.msra.mxu0 0.0
    %2777 = vmatprep.subr.mxu0 0.0
    %2778 = vmatpush1.msra.mxu0 0.0
    %2779 = vmatprep.subr.mxu0 0.0
    %2780 = vmatpush1.msra.mxu0 0.0
    %2781 = vmatprep.subr.mxu0 0.0
    %2782 = vmatpush1.msra.mxu0 0.0
    %2783 = vmatprep.subr.mxu0 0.0
    %2784 = vmatpush1.msra.mxu0 0.0
    %2785 = vmatprep.subr.mxu0 0.0
    %2786 = vmatpush1.msra.mxu0 0.0
    %2787 = vmatprep.subr.mxu0 0.0
    %2788 = vmatpush1.msra.mxu0 0.0
    %2789 = vmatprep.subr.mxu0 0.0
    %2790 = vmatpush1.msra.mxu0 0.0
    %2791 = vmatprep.subr.mxu0 0.0
    %2792 = vmatpush1.msra.mxu0 0.0
    %2793 = vmatprep.subr.mxu0 0.0
    %2794 = vmatpush1.msra.mxu0 0.0
    %2795 = vmatprep.subr.mxu0 0.0
    %2796 = vmatpush1.msra.mxu0 0.0
    %2797 = vmatprep.subr.mxu0 0.0
    %2798 = vmatpush1.msra.mxu0 0.0
    %2799 = vmatprep.subr.mxu0 0.0
    %2800 = vmatpush1.msra.mxu0 0.0
    %2801 = vmatprep.subr.mxu0 0.0
    %2802 = vmatpush1.msra.mxu0 0.0
    %2803 = vmatprep.subr.mxu0 0.0
    %2804 = vmatpush1.msra.mxu0 0.0
    %2805 = vmatprep.subr.mxu0 0.0
    %2806 = vmatpush1.msra.mxu0 0.0
    %2807 = vmatprep.subr.mxu0 0.0
    %2808 = vmatpush1.msra.mxu0 0.0
    %2809 = vmatprep.subr.mxu0 0.0
    %2810 = vmatpush1.msra.mxu0 0.0
    %2811 = vmatprep.subr.mxu0 0.0
    %2812 = vmatpush1.msra.mxu0 0.0
    %2813 = vmatprep.subr.mxu0 0.0
    %2814 = vmatpush1.msra.mxu0 0.0
    %2815 = vmatprep.subr.mxu0 0.0
    %2816 = vmatpush1.msra.mxu0 0.0
    %2817 = vmatprep.subr.mxu0 0.0
    %2818 = vmatpush1.msra.mxu0 0.0
    %2819 = vmatprep.subr.mxu0 0.0
    %2820 = vmatpush1.msra.mxu0 0.0
    %2821 = vmatprep.subr.mxu0 0.0
    %2822 = vmatpush1.msra.mxu0 0.0
    %2823 = vmatprep.subr.mxu0 0.0
    %2824 = vmatpush1.msra.mxu0 0.0
    %2825 = vmatprep.mubr.f32.mxu0 0.0
    %2826 = vmatmul.mubr.f32.gmra.mrb[0].mxu0 %v2756
    %v2827 = vpop.f32.mrb[0].mxu0
    %v2828 = vadd.f32 0.0, %v2827
    %v2829 = vpop.f32.mrb[0].mxu0
    %2830 = vmatprep.mubr.f32.mxu0 0.0
    %2831 = vmatmul.mubr.f32.gmra.mrb[0].mxu0 %v2759
    %v2832 = vpop.f32.mrb[0].mxu0
    %v2833 = vadd.f32 0.0, %v2832
    %v2834 = vpop.f32.mrb[0].mxu0
    %2835 = vdwg.mxu0
    %v2837 = vsel %vm203, %v2344, 0
    %v2840 = vsel %vm203, %v2420, 0
    %2842 = vmatprep.subr.mxu0 0.0
    %2843 = vmatpush1.msra.mxu0 %v2090
    %2844 = vmatprep.subr.mxu0 0.0
    %2845 = vmatpush1.msra.mxu0 0.0
    %2846 = vmatprep.subr.mxu0 0.0
    %2847 = vmatpush1.msra.mxu0 0.0
    %2848 = vmatprep.subr.mxu0 0.0
    %2849 = vmatpush1.msra.mxu0 0.0
    %2850 = vmatprep.subr.mxu0 0.0
    %2851 = vmatpush1.msra.mxu0 0.0
    %2852 = vmatprep.subr.mxu0 0.0
    %2853 = vmatpush1.msra.mxu0 0.0
    %2854 = vmatprep.subr.mxu0 0.0
    %2855 = vmatpush1.msra.mxu0 0.0
    %2856 = vmatprep.subr.mxu0 0.0
    %2857 = vmatpush1.msra.mxu0 0.0
    %2858 = vmatprep.subr.mxu0 0.0
    %2859 = vmatpush1.msra.mxu0 0.0
    %2860 = vmatprep.subr.mxu0 0.0
    %2861 = vmatpush1.msra.mxu0 0.0
    %2862 = vmatprep.subr.mxu0 0.0
    %2863 = vmatpush1.msra.mxu0 0.0
    %2864 = vmatprep.subr.mxu0 0.0
    %2865 = vmatpush1.msra.mxu0 0.0
    %2866 = vmatprep.subr.mxu0 0.0
    %2867 = vmatpush1.msra.mxu0 0.0
    %2868 = vmatprep.subr.mxu0 0.0
    %2869 = vmatpush1.msra.mxu0 0.0
    %2870 = vmatprep.subr.mxu0 0.0
    %2871 = vmatpush1.msra.mxu0 0.0
    %2872 = vmatprep.subr.mxu0 0.0
    %2873 = vmatpush1.msra.mxu0 0.0
    %2874 = vmatprep.subr.mxu0 0.0
    %2875 = vmatpush1.msra.mxu0 0.0
    %2876 = vmatprep.subr.mxu0 0.0
    %2877 = vmatpush1.msra.mxu0 0.0
    %2878 = vmatprep.subr.mxu0 0.0
    %2879 = vmatpush1.msra.mxu0 0.0
    %2880 = vmatprep.subr.mxu0 0.0
    %2881 = vmatpush1.msra.mxu0 0.0
    %2882 = vmatprep.subr.mxu0 0.0
    %2883 = vmatpush1.msra.mxu0 0.0
    %2884 = vmatprep.subr.mxu0 0.0
    %2885 = vmatpush1.msra.mxu0 0.0
    %2886 = vmatprep.subr.mxu0 0.0
    %2887 = vmatpush1.msra.mxu0 0.0
    %2888 = vmatprep.subr.mxu0 0.0
    %2889 = vmatpush1.msra.mxu0 0.0
    %2890 = vmatprep.subr.mxu0 0.0
    %2891 = vmatpush1.msra.mxu0 0.0
    %2892 = vmatprep.subr.mxu0 0.0
    %2893 = vmatpush1.msra.mxu0 0.0
    %2894 = vmatprep.subr.mxu0 0.0
    %2895 = vmatpush1.msra.mxu0 0.0
    %2896 = vmatprep.subr.mxu0 0.0
    %2897 = vmatpush1.msra.mxu0 0.0
    %2898 = vmatprep.subr.mxu0 0.0
    %2899 = vmatpush1.msra.mxu0 0.0
    %2900 = vmatprep.subr.mxu0 0.0
    %2901 = vmatpush1.msra.mxu0 0.0
    %2902 = vmatprep.subr.mxu0 0.0
    %2903 = vmatpush1.msra.mxu0 0.0
    %2904 = vmatprep.subr.mxu0 0.0
    %2905 = vmatpush1.msra.mxu0 0.0
    %2906 = vmatprep.mubr.f32.mxu0 0.0
    %2907 = vmatmul.mubr.f32.gmra.mrb[0].mxu0 %v2837
    %v2908 = vpop.f32.mrb[0].mxu0
    %v2909 = vadd.f32 %v2828, %v2908
    %v2910 = vpop.f32.mrb[0].mxu0
    %2911 = vmatprep.mubr.f32.mxu0 0.0
    %2912 = vmatmul.mubr.f32.gmra.mrb[0].mxu0 %v2840
    %v2913 = vpop.f32.mrb[0].mxu0
    %v2914 = vadd.f32 %v2833, %v2913
    %v2915 = vpop.f32.mrb[0].mxu0
    %2916 = vdwg.mxu0
    %2917 = vrot.lane.b32.xlu0 %v1990, 112
    %v2918 = vpop.permute.xlu0 %2917
    %2919 = vrot.lane.b32.xlu0 %v2082, 112
    %v2920 = vpop.permute.xlu0 %2919
    %v2921 = vsel %vm203, %v2918, 0
    %v2923 = vsel %vm203, %v2920, 0
    %2925 = vmatprep.subr.mxu0 0.0
    %2926 = vmatpush1.xpose.msra.mxu0 %v2923
    %2927 = vmatprep.subr.mxu0 0.0
    %2928 = vmatpush1.xpose.msra.mxu0 0.0
    %2929 = vmatprep.subr.mxu0 0.0
    %2930 = vmatpush1.xpose.msra.mxu0 0.0
    %2931 = vmatprep.subr.mxu0 0.0
    %2932 = vmatpush1.xpose.msra.mxu0 0.0
    %2933 = vmatprep.subr.mxu0 0.0
    %2934 = vmatpush1.xpose.msra.mxu0 0.0
    %2935 = vmatprep.subr.mxu0 0.0
    %2936 = vmatpush1.xpose.msra.mxu0 0.0
    %2937 = vmatprep.subr.mxu0 0.0
    %2938 = vmatpush1.xpose.msra.mxu0 0.0
    %2939 = vmatprep.subr.mxu0 0.0
    %2940 = vmatpush1.xpose.msra.mxu0 0.0
    %2941 = vmatprep.subr.mxu0 0.0
    %2942 = vmatpush1.xpose.msra.mxu0 0.0
    %2943 = vmatprep.subr.mxu0 0.0
    %2944 = vmatpush1.xpose.msra.mxu0 0.0
    %2945 = vmatprep.subr.mxu0 0.0
    %2946 = vmatpush1.xpose.msra.mxu0 0.0
    %2947 = vmatprep.subr.mxu0 0.0
    %2948 = vmatpush1.xpose.msra.mxu0 0.0
    %2949 = vmatprep.subr.mxu0 0.0
    %2950 = vmatpush1.xpose.msra.mxu0 0.0
    %2951 = vmatprep.subr.mxu0 0.0
    %2952 = vmatpush1.xpose.msra.mxu0 0.0
    %2953 = vmatprep.subr.mxu0 0.0
    %2954 = vmatpush1.xpose.msra.mxu0 0.0
    %2955 = vmatprep.subr.mxu0 0.0
    %2956 = vmatpush1.xpose.msra.mxu0 0.0
    %2957 = vmatprep.subr.mxu0 0.0
    %2958 = vmatpush1.xpose.msra.mxu0 0.0
    %2959 = vmatprep.subr.mxu0 0.0
    %2960 = vmatpush1.xpose.msra.mxu0 0.0
    %2961 = vmatprep.subr.mxu0 0.0
    %2962 = vmatpush1.xpose.msra.mxu0 0.0
    %2963 = vmatprep.subr.mxu0 0.0
    %2964 = vmatpush1.xpose.msra.mxu0 0.0
    %2965 = vmatprep.subr.mxu0 0.0
    %2966 = vmatpush1.xpose.msra.mxu0 0.0
    %2967 = vmatprep.subr.mxu0 0.0
    %2968 = vmatpush1.xpose.msra.mxu0 0.0
    %2969 = vmatprep.subr.mxu0 0.0
    %2970 = vmatpush1.xpose.msra.mxu0 0.0
    %2971 = vmatprep.subr.mxu0 0.0
    %2972 = vmatpush1.xpose.msra.mxu0 0.0
    %2973 = vmatprep.subr.mxu0 0.0
    %2974 = vmatpush1.xpose.msra.mxu0 0.0
    %2975 = vmatprep.subr.mxu0 0.0
    %2976 = vmatpush1.xpose.msra.mxu0 0.0
    %2977 = vmatprep.subr.mxu0 0.0
    %2978 = vmatpush1.xpose.msra.mxu0 0.0
    %2979 = vmatprep.subr.mxu0 0.0
    %2980 = vmatpush1.xpose.msra.mxu0 0.0
    %2981 = vmatprep.subr.mxu0 0.0
    %2982 = vmatpush1.xpose.msra.mxu0 0.0
    %2983 = vmatprep.subr.mxu0 0.0
    %2984 = vmatpush1.xpose.msra.mxu0 0.0
    %2985 = vmatprep.subr.mxu0 0.0
    %2986 = vmatpush1.xpose.msra.mxu0 0.0
    %2987 = vmatprep.subr.mxu0 0.0
    %2988 = vmatpush1.xpose.msra.mxu0 0.0
    %2989 = vmatprep.mubr.f32.mxu0 0.0
    %2990 = vmatmul.mubr.f32.gmra.mrb[0].mxu0 %v2921
    %v2991 = vpop.f32.mrb[0].mxu0
    %v2992 = vadd.f32 0.0, %v2991
    %v2993 = vpop.f32.mrb[0].mxu0
    %2994 = vdwg.mxu0
    %2995 = vrot.lane.b32.xlu0 %v1995, 112
    %v2996 = vpop.permute.xlu0 %2995
    %2997 = vrot.lane.b32.xlu0 %v2087, 112
    %v2998 = vpop.permute.xlu0 %2997
    %v2999 = vsel %vm203, %v2996, 0
    %v3001 = vsel %vm203, %v2998, 0
    %3003 = vmatprep.subr.mxu0 0.0
    %3004 = vmatpush1.xpose.msra.mxu0 %v3001
    %3005 = vmatprep.subr.mxu0 0.0
    %3006 = vmatpush1.xpose.msra.mxu0 0.0
    %3007 = vmatprep.subr.mxu0 0.0
    %3008 = vmatpush1.xpose.msra.mxu0 0.0
    %3009 = vmatprep.subr.mxu0 0.0
    %3010 = vmatpush1.xpose.msra.mxu0 0.0
    %3011 = vmatprep.subr.mxu0 0.0
    %3012 = vmatpush1.xpose.msra.mxu0 0.0
    %3013 = vmatprep.subr.mxu0 0.0
    %3014 = vmatpush1.xpose.msra.mxu0 0.0
    %3015 = vmatprep.subr.mxu0 0.0
    %3016 = vmatpush1.xpose.msra.mxu0 0.0
    %3017 = vmatprep.subr.mxu0 0.0
    %3018 = vmatpush1.xpose.msra.mxu0 0.0
    %3019 = vmatprep.subr.mxu0 0.0
    %3020 = vmatpush1.xpose.msra.mxu0 0.0
    %3021 = vmatprep.subr.mxu0 0.0
    %3022 = vmatpush1.xpose.msra.mxu0 0.0
    %3023 = vmatprep.subr.mxu0 0.0
    %3024 = vmatpush1.xpose.msra.mxu0 0.0
    %3025 = vmatprep.subr.mxu0 0.0
    %3026 = vmatpush1.xpose.msra.mxu0 0.0
    %3027 = vmatprep.subr.mxu0 0.0
    %3028 = vmatpush1.xpose.msra.mxu0 0.0
    %3029 = vmatprep.subr.mxu0 0.0
    %3030 = vmatpush1.xpose.msra.mxu0 0.0
    %3031 = vmatprep.subr.mxu0 0.0
    %3032 = vmatpush1.xpose.msra.mxu0 0.0
    %3033 = vmatprep.subr.mxu0 0.0
    %3034 = vmatpush1.xpose.msra.mxu0 0.0
    %3035 = vmatprep.subr.mxu0 0.0
    %3036 = vmatpush1.xpose.msra.mxu0 0.0
    %3037 = vmatprep.subr.mxu0 0.0
    %3038 = vmatpush1.xpose.msra.mxu0 0.0
    %3039 = vmatprep.subr.mxu0 0.0
    %3040 = vmatpush1.xpose.msra.mxu0 0.0
    %3041 = vmatprep.subr.mxu0 0.0
    %3042 = vmatpush1.xpose.msra.mxu0 0.0
    %3043 = vmatprep.subr.mxu0 0.0
    %3044 = vmatpush1.xpose.msra.mxu0 0.0
    %3045 = vmatprep.subr.mxu0 0.0
    %3046 = vmatpush1.xpose.msra.mxu0 0.0
    %3047 = vmatprep.subr.mxu0 0.0
    %3048 = vmatpush1.xpose.msra.mxu0 0.0
    %3049 = vmatprep.subr.mxu0 0.0
    %3050 = vmatpush1.xpose.msra.mxu0 0.0
    %3051 = vmatprep.subr.mxu0 0.0
    %3052 = vmatpush1.xpose.msra.mxu0 0.0
    %3053 = vmatprep.subr.mxu0 0.0
    %3054 = vmatpush1.xpose.msra.mxu0 0.0
    %3055 = vmatprep.subr.mxu0 0.0
    %3056 = vmatpush1.xpose.msra.mxu0 0.0
    %3057 = vmatprep.subr.mxu0 0.0
    %3058 = vmatpush1.xpose.msra.mxu0 0.0
    %3059 = vmatprep.subr.mxu0 0.0
    %3060 = vmatpush1.xpose.msra.mxu0 0.0
    %3061 = vmatprep.subr.mxu0 0.0
    %3062 = vmatpush1.xpose.msra.mxu0 0.0
    %3063 = vmatprep.subr.mxu0 0.0
    %3064 = vmatpush1.xpose.msra.mxu0 0.0
    %3065 = vmatprep.subr.mxu0 0.0
    %3066 = vmatpush1.xpose.msra.mxu0 0.0
    %3067 = vmatprep.mubr.f32.mxu0 0.0
    %3068 = vmatmul.mubr.f32.gmra.mrb[0].mxu0 %v2999
    %v3069 = vpop.f32.mrb[0].mxu0
    %v3070 = vadd.f32 0.0, %v3069
    %v3071 = vpop.f32.mrb[0].mxu0
    %3072 = vdwg.mxu0
    %v3073 = vmul.f32 %v2992, 0.35355338
    %v3074 = vmul.f32 %v3070, 0.35355338
    %v3075 = vsel %vm203, %v3073, -inf
    %3076 = vmax.xlane.f32.xlu0 %v3075
    %v3077 = vpop.xlane.xlu0 %3076
    %v3078 = vsel %vm203, %v3074, -inf
    %3079 = vmax.xlane.f32.xlu0 %v3078
    %v3080 = vpop.xlane.xlu0 %3079
    %v3081 = vsub.f32 %v3073, %v3077
    %v3082 = vsub.f32 %v3074, %v3080
    %v3083 = vmul.f32 %v3081, 1.442695
    %v3084 = vpow.pop %v3083
    %v3085 = vmul.f32 %v3082, 1.442695
    %v3086 = vpow.pop %v3085
    %v3087 = vsel %vm203, %v3084, 0.0
    %3088 = vadd.xlane.f32.xlu0 %v3087
    %v3089 = vpop.xlane.xlu0 %3088
    %v3090 = vsel %vm203, %v3086, 0.0
    %3091 = vadd.xlane.f32.xlu0 %v3090
    %v3092 = vpop.xlane.xlu0 %3091
    %v3093 = vrcp.pop %v3089
    %v3094 = vrcp.pop %v3092
    %v3095 = vmul.f32 %v3084, %v3093
    %v3096 = vmul.f32 %v3086, %v3094
    %3097 = vrot.lane.b32.xlu0 %v2082, 80
    %v3098 = vpop.permute.xlu0 %3097
    %v3101 = vsel %vm203, %v3095, 0
    %3103 = vmatprep.subr.mxu0 0.0
    %3104 = vmatpush1.msra.mxu0 %v3098
    %3105 = vmatprep.subr.mxu0 0.0
    %3106 = vmatpush1.msra.mxu0 0.0
    %3107 = vmatprep.subr.mxu0 0.0
    %3108 = vmatpush1.msra.mxu0 0.0
    %3109 = vmatprep.subr.mxu0 0.0
    %3110 = vmatpush1.msra.mxu0 0.0
    %3111 = vmatprep.subr.mxu0 0.0
    %3112 = vmatpush1.msra.mxu0 0.0
    %3113 = vmatprep.subr.mxu0 0.0
    %3114 = vmatpush1.msra.mxu0 0.0
    %3115 = vmatprep.subr.mxu0 0.0
    %3116 = vmatpush1.msra.mxu0 0.0
    %3117 = vmatprep.subr.mxu0 0.0
    %3118 = vmatpush1.msra.mxu0 0.0
    %3119 = vmatprep.subr.mxu0 0.0
    %3120 = vmatpush1.msra.mxu0 0.0
    %3121 = vmatprep.subr.mxu0 0.0
    %3122 = vmatpush1.msra.mxu0 0.0
    %3123 = vmatprep.subr.mxu0 0.0
    %3124 = vmatpush1.msra.mxu0 0.0
    %3125 = vmatprep.subr.mxu0 0.0
    %3126 = vmatpush1.msra.mxu0 0.0
    %3127 = vmatprep.subr.mxu0 0.0
    %3128 = vmatpush1.msra.mxu0 0.0
    %3129 = vmatprep.subr.mxu0 0.0
    %3130 = vmatpush1.msra.mxu0 0.0
    %3131 = vmatprep.subr.mxu0 0.0
    %3132 = vmatpush1.msra.mxu0 0.0
    %3133 = vmatprep.subr.mxu0 0.0
    %3134 = vmatpush1.msra.mxu0 0.0
    %3135 = vmatprep.subr.mxu0 0.0
    %3136 = vmatpush1.msra.mxu0 0.0
    %3137 = vmatprep.subr.mxu0 0.0
    %3138 = vmatpush1.msra.mxu0 0.0
    %3139 = vmatprep.subr.mxu0 0.0
    %3140 = vmatpush1.msra.mxu0 0.0
    %3141 = vmatprep.subr.mxu0 0.0
    %3142 = vmatpush1.msra.mxu0 0.0
    %3143 = vmatprep.subr.mxu0 0.0
    %3144 = vmatpush1.msra.mxu0 0.0
    %3145 = vmatprep.subr.mxu0 0.0
    %3146 = vmatpush1.msra.mxu0 0.0
    %3147 = vmatprep.subr.mxu0 0.0
    %3148 = vmatpush1.msra.mxu0 0.0
    %3149 = vmatprep.subr.mxu0 0.0
    %3150 = vmatpush1.msra.mxu0 0.0
    %3151 = vmatprep.subr.mxu0 0.0
    %3152 = vmatpush1.msra.mxu0 0.0
    %3153 = vmatprep.subr.mxu0 0.0
    %3154 = vmatpush1.msra.mxu0 0.0
    %3155 = vmatprep.subr.mxu0 0.0
    %3156 = vmatpush1.msra.mxu0 0.0
    %3157 = vmatprep.subr.mxu0 0.0
    %3158 = vmatpush1.msra.mxu0 0.0
    %3159 = vmatprep.subr.mxu0 0.0
    %3160 = vmatpush1.msra.mxu0 0.0
    %3161 = vmatprep.subr.mxu0 0.0
    %3162 = vmatpush1.msra.mxu0 0.0
    %3163 = vmatprep.subr.mxu0 0.0
    %3164 = vmatpush1.msra.mxu0 0.0
    %3165 = vmatprep.subr.mxu0 0.0
    %3166 = vmatpush1.msra.mxu0 0.0
    %3167 = vmatprep.mubr.f32.mxu0 0.0
    %3168 = vmatmul.mubr.f32.gmra.mrb[0].mxu0 %v3101
    %v3169 = vpop.f32.mrb[0].mxu0
    %v3170 = vadd.f32 0.0, %v3169
    %v3171 = vpop.f32.mrb[0].mxu0
    %3172 = vdwg.mxu0
    %3173 = vrot.lane.b32.xlu0 %v2087, 80
    %v3174 = vpop.permute.xlu0 %3173
    %v3177 = vsel %vm203, %v3096, 0
    %3179 = vmatprep.subr.mxu0 0.0
    %3180 = vmatpush1.msra.mxu0 %v3174
    %3181 = vmatprep.subr.mxu0 0.0
    %3182 = vmatpush1.msra.mxu0 0.0
    %3183 = vmatprep.subr.mxu0 0.0
    %3184 = vmatpush1.msra.mxu0 0.0
    %3185 = vmatprep.subr.mxu0 0.0
    %3186 = vmatpush1.msra.mxu0 0.0
    %3187 = vmatprep.subr.mxu0 0.0
    %3188 = vmatpush1.msra.mxu0 0.0
    %3189 = vmatprep.subr.mxu0 0.0
    %3190 = vmatpush1.msra.mxu0 0.0
    %3191 = vmatprep.subr.mxu0 0.0
    %3192 = vmatpush1.msra.mxu0 0.0
    %3193 = vmatprep.subr.mxu0 0.0
    %3194 = vmatpush1.msra.mxu0 0.0
    %3195 = vmatprep.subr.mxu0 0.0
    %3196 = vmatpush1.msra.mxu0 0.0
    %3197 = vmatprep.subr.mxu0 0.0
    %3198 = vmatpush1.msra.mxu0 0.0
    %3199 = vmatprep.subr.mxu0 0.0
    %3200 = vmatpush1.msra.mxu0 0.0
    %3201 = vmatprep.subr.mxu0 0.0
    %3202 = vmatpush1.msra.mxu0 0.0
    %3203 = vmatprep.subr.mxu0 0.0
    %3204 = vmatpush1.msra.mxu0 0.0
    %3205 = vmatprep.subr.mxu0 0.0
    %3206 = vmatpush1.msra.mxu0 0.0
    %3207 = vmatprep.subr.mxu0 0.0
    %3208 = vmatpush1.msra.mxu0 0.0
    %3209 = vmatprep.subr.mxu0 0.0
    %3210 = vmatpush1.msra.mxu0 0.0
    %3211 = vmatprep.subr.mxu0 0.0
    %3212 = vmatpush1.msra.mxu0 0.0
    %3213 = vmatprep.subr.mxu0 0.0
    %3214 = vmatpush1.msra.mxu0 0.0
    %3215 = vmatprep.subr.mxu0 0.0
    %3216 = vmatpush1.msra.mxu0 0.0
    %3217 = vmatprep.subr.mxu0 0.0
    %3218 = vmatpush1.msra.mxu0 0.0
    %3219 = vmatprep.subr.mxu0 0.0
    %3220 = vmatpush1.msra.mxu0 0.0
    %3221 = vmatprep.subr.mxu0 0.0
    %3222 = vmatpush1.msra.mxu0 0.0
    %3223 = vmatprep.subr.mxu0 0.0
    %3224 = vmatpush1.msra.mxu0 0.0
    %3225 = vmatprep.subr.mxu0 0.0
    %3226 = vmatpush1.msra.mxu0 0.0
    %3227 = vmatprep.subr.mxu0 0.0
    %3228 = vmatpush1.msra.mxu0 0.0
    %3229 = vmatprep.subr.mxu0 0.0
    %3230 = vmatpush1.msra.mxu0 0.0
    %3231 = vmatprep.subr.mxu0 0.0
    %3232 = vmatpush1.msra.mxu0 0.0
    %3233 = vmatprep.subr.mxu0 0.0
    %3234 = vmatpush1.msra.mxu0 0.0
    %3235 = vmatprep.subr.mxu0 0.0
    %3236 = vmatpush1.msra.mxu0 0.0
    %3237 = vmatprep.subr.mxu0 0.0
    %3238 = vmatpush1.msra.mxu0 0.0
    %3239 = vmatprep.subr.mxu0 0.0
    %3240 = vmatpush1.msra.mxu0 0.0
    %3241 = vmatprep.subr.mxu0 0.0
    %3242 = vmatpush1.msra.mxu0 0.0
    %3243 = vmatprep.mubr.f32.mxu0 0.0
    %3244 = vmatmul.mubr.f32.gmra.mrb[0].mxu0 %v3177
    %v3245 = vpop.f32.mrb[0].mxu0
    %v3246 = vadd.f32 0.0, %v3245
    %v3247 = vpop.f32.mrb[0].mxu0
    %3248 = vdwg.mxu0
    %v3250 = vsel %vm203, %v3170, 0
    %v3253 = vsel %vm203, %v3246, 0
    %3255 = vmatprep.subr.mxu0 0.0
    %3256 = vmatpush1.msra.mxu0 %v2092
    %3257 = vmatprep.subr.mxu0 0.0
    %3258 = vmatpush1.msra.mxu0 0.0
    %3259 = vmatprep.subr.mxu0 0.0
    %3260 = vmatpush1.msra.mxu0 0.0
    %3261 = vmatprep.subr.mxu0 0.0
    %3262 = vmatpush1.msra.mxu0 0.0
    %3263 = vmatprep.subr.mxu0 0.0
    %3264 = vmatpush1.msra.mxu0 0.0
    %3265 = vmatprep.subr.mxu0 0.0
    %3266 = vmatpush1.msra.mxu0 0.0
    %3267 = vmatprep.subr.mxu0 0.0
    %3268 = vmatpush1.msra.mxu0 0.0
    %3269 = vmatprep.subr.mxu0 0.0
    %3270 = vmatpush1.msra.mxu0 0.0
    %3271 = vmatprep.subr.mxu0 0.0
    %3272 = vmatpush1.msra.mxu0 0.0
    %3273 = vmatprep.subr.mxu0 0.0
    %3274 = vmatpush1.msra.mxu0 0.0
    %3275 = vmatprep.subr.mxu0 0.0
    %3276 = vmatpush1.msra.mxu0 0.0
    %3277 = vmatprep.subr.mxu0 0.0
    %3278 = vmatpush1.msra.mxu0 0.0
    %3279 = vmatprep.subr.mxu0 0.0
    %3280 = vmatpush1.msra.mxu0 0.0
    %3281 = vmatprep.subr.mxu0 0.0
    %3282 = vmatpush1.msra.mxu0 0.0
    %3283 = vmatprep.subr.mxu0 0.0
    %3284 = vmatpush1.msra.mxu0 0.0
    %3285 = vmatprep.subr.mxu0 0.0
    %3286 = vmatpush1.msra.mxu0 0.0
    %3287 = vmatprep.subr.mxu0 0.0
    %3288 = vmatpush1.msra.mxu0 0.0
    %3289 = vmatprep.subr.mxu0 0.0
    %3290 = vmatpush1.msra.mxu0 0.0
    %3291 = vmatprep.subr.mxu0 0.0
    %3292 = vmatpush1.msra.mxu0 0.0
    %3293 = vmatprep.subr.mxu0 0.0
    %3294 = vmatpush1.msra.mxu0 0.0
    %3295 = vmatprep.subr.mxu0 0.0
    %3296 = vmatpush1.msra.mxu0 0.0
    %3297 = vmatprep.subr.mxu0 0.0
    %3298 = vmatpush1.msra.mxu0 0.0
    %3299 = vmatprep.subr.mxu0 0.0
    %3300 = vmatpush1.msra.mxu0 0.0
    %3301 = vmatprep.subr.mxu0 0.0
    %3302 = vmatpush1.msra.mxu0 0.0
    %3303 = vmatprep.subr.mxu0 0.0
    %3304 = vmatpush1.msra.mxu0 0.0
    %3305 = vmatprep.subr.mxu0 0.0
    %3306 = vmatpush1.msra.mxu0 0.0
    %3307 = vmatprep.subr.mxu0 0.0
    %3308 = vmatpush1.msra.mxu0 0.0
    %3309 = vmatprep.subr.mxu0 0.0
    %3310 = vmatpush1.msra.mxu0 0.0
    %3311 = vmatprep.subr.mxu0 0.0
    %3312 = vmatpush1.msra.mxu0 0.0
    %3313 = vmatprep.subr.mxu0 0.0
    %3314 = vmatpush1.msra.mxu0 0.0
    %3315 = vmatprep.subr.mxu0 0.0
    %3316 = vmatpush1.msra.mxu0 0.0
    %3317 = vmatprep.subr.mxu0 0.0
    %3318 = vmatpush1.msra.mxu0 0.0
    %3319 = vmatprep.mubr.f32.mxu0 0.0
    %3320 = vmatmul.mubr.f32.gmra.mrb[0].mxu0 %v3250
    %v3321 = vpop.f32.mrb[0].mxu0
    %v3322 = vadd.f32 0.0, %v3321
    %v3323 = vpop.f32.mrb[0].mxu0
    %3324 = vmatprep.mubr.f32.mxu0 0.0
    %3325 = vmatmul.mubr.f32.gmra.mrb[0].mxu0 %v3253
    %v3326 = vpop.f32.mrb[0].mxu0
    %v3327 = vadd.f32 0.0, %v3326
    %v3328 = vpop.f32.mrb[0].mxu0
    %3329 = vdwg.mxu0
    %v3330 = vadd.f32 %v2909, %v3322
    %v3331 = vadd.f32 %v2914, %v3327
    %3332 = vrot.lane.b32.xlu0 %v1990, 104
    %v3333 = vpop.permute.xlu0 %3332
    %3334 = vrot.lane.b32.xlu0 %v2082, 104
    %v3335 = vpop.permute.xlu0 %3334
    %v3336 = vsel %vm203, %v3333, 0
    %v3338 = vsel %vm203, %v3335, 0
    %3340 = vmatprep.subr.mxu0 0.0
    %3341 = vmatpush1.xpose.msra.mxu0 %v3338
    %3342 = vmatprep.subr.mxu0 0.0
    %3343 = vmatpush1.xpose.msra.mxu0 0.0
    %3344 = vmatprep.subr.mxu0 0.0
    %3345 = vmatpush1.xpose.msra.mxu0 0.0
    %3346 = vmatprep.subr.mxu0 0.0
    %3347 = vmatpush1.xpose.msra.mxu0 0.0
    %3348 = vmatprep.subr.mxu0 0.0
    %3349 = vmatpush1.xpose.msra.mxu0 0.0
    %3350 = vmatprep.subr.mxu0 0.0
    %3351 = vmatpush1.xpose.msra.mxu0 0.0
    %3352 = vmatprep.subr.mxu0 0.0
    %3353 = vmatpush1.xpose.msra.mxu0 0.0
    %3354 = vmatprep.subr.mxu0 0.0
    %3355 = vmatpush1.xpose.msra.mxu0 0.0
    %3356 = vmatprep.subr.mxu0 0.0
    %3357 = vmatpush1.xpose.msra.mxu0 0.0
    %3358 = vmatprep.subr.mxu0 0.0
    %3359 = vmatpush1.xpose.msra.mxu0 0.0
    %3360 = vmatprep.subr.mxu0 0.0
    %3361 = vmatpush1.xpose.msra.mxu0 0.0
    %3362 = vmatprep.subr.mxu0 0.0
    %3363 = vmatpush1.xpose.msra.mxu0 0.0
    %3364 = vmatprep.subr.mxu0 0.0
    %3365 = vmatpush1.xpose.msra.mxu0 0.0
    %3366 = vmatprep.subr.mxu0 0.0
    %3367 = vmatpush1.xpose.msra.mxu0 0.0
    %3368 = vmatprep.subr.mxu0 0.0
    %3369 = vmatpush1.xpose.msra.mxu0 0.0
    %3370 = vmatprep.subr.mxu0 0.0
    %3371 = vmatpush1.xpose.msra.mxu0 0.0
    %3372 = vmatprep.subr.mxu0 0.0
    %3373 = vmatpush1.xpose.msra.mxu0 0.0
    %3374 = vmatprep.subr.mxu0 0.0
    %3375 = vmatpush1.xpose.msra.mxu0 0.0
    %3376 = vmatprep.subr.mxu0 0.0
    %3377 = vmatpush1.xpose.msra.mxu0 0.0
    %3378 = vmatprep.subr.mxu0 0.0
    %3379 = vmatpush1.xpose.msra.mxu0 0.0
    %3380 = vmatprep.subr.mxu0 0.0
    %3381 = vmatpush1.xpose.msra.mxu0 0.0
    %3382 = vmatprep.subr.mxu0 0.0
    %3383 = vmatpush1.xpose.msra.mxu0 0.0
    %3384 = vmatprep.subr.mxu0 0.0
    %3385 = vmatpush1.xpose.msra.mxu0 0.0
    %3386 = vmatprep.subr.mxu0 0.0
    %3387 = vmatpush1.xpose.msra.mxu0 0.0
    %3388 = vmatprep.subr.mxu0 0.0
    %3389 = vmatpush1.xpose.msra.mxu0 0.0
    %3390 = vmatprep.subr.mxu0 0.0
    %3391 = vmatpush1.xpose.msra.mxu0 0.0
    %3392 = vmatprep.subr.mxu0 0.0
    %3393 = vmatpush1.xpose.msra.mxu0 0.0
    %3394 = vmatprep.subr.mxu0 0.0
    %3395 = vmatpush1.xpose.msra.mxu0 0.0
    %3396 = vmatprep.subr.mxu0 0.0
    %3397 = vmatpush1.xpose.msra.mxu0 0.0
    %3398 = vmatprep.subr.mxu0 0.0
    %3399 = vmatpush1.xpose.msra.mxu0 0.0
    %3400 = vmatprep.subr.mxu0 0.0
    %3401 = vmatpush1.xpose.msra.mxu0 0.0
    %3402 = vmatprep.subr.mxu0 0.0
    %3403 = vmatpush1.xpose.msra.mxu0 0.0
    %3404 = vmatprep.mubr.f32.mxu0 0.0
    %3405 = vmatmul.mubr.f32.gmra.mrb[0].mxu0 %v3336
    %v3406 = vpop.f32.mrb[0].mxu0
    %v3407 = vadd.f32 0.0, %v3406
    %v3408 = vpop.f32.mrb[0].mxu0
    %3409 = vdwg.mxu0
    %3410 = vrot.lane.b32.xlu0 %v1995, 104
    %v3411 = vpop.permute.xlu0 %3410
    %3412 = vrot.lane.b32.xlu0 %v2087, 104
    %v3413 = vpop.permute.xlu0 %3412
    %v3414 = vsel %vm203, %v3411, 0
    %v3416 = vsel %vm203, %v3413, 0
    %3418 = vmatprep.subr.mxu0 0.0
    %3419 = vmatpush1.xpose.msra.mxu0 %v3416
    %3420 = vmatprep.subr.mxu0 0.0
    %3421 = vmatpush1.xpose.msra.mxu0 0.0
    %3422 = vmatprep.subr.mxu0 0.0
    %3423 = vmatpush1.xpose.msra.mxu0 0.0
    %3424 = vmatprep.subr.mxu0 0.0
    %3425 = vmatpush1.xpose.msra.mxu0 0.0
    %3426 = vmatprep.subr.mxu0 0.0
    %3427 = vmatpush1.xpose.msra.mxu0 0.0
    %3428 = vmatprep.subr.mxu0 0.0
    %3429 = vmatpush1.xpose.msra.mxu0 0.0
    %3430 = vmatprep.subr.mxu0 0.0
    %3431 = vmatpush1.xpose.msra.mxu0 0.0
    %3432 = vmatprep.subr.mxu0 0.0
    %3433 = vmatpush1.xpose.msra.mxu0 0.0
    %3434 = vmatprep.subr.mxu0 0.0
    %3435 = vmatpush1.xpose.msra.mxu0 0.0
    %3436 = vmatprep.subr.mxu0 0.0
    %3437 = vmatpush1.xpose.msra.mxu0 0.0
    %3438 = vmatprep.subr.mxu0 0.0
    %3439 = vmatpush1.xpose.msra.mxu0 0.0
    %3440 = vmatprep.subr.mxu0 0.0
    %3441 = vmatpush1.xpose.msra.mxu0 0.0
    %3442 = vmatprep.subr.mxu0 0.0
    %3443 = vmatpush1.xpose.msra.mxu0 0.0
    %3444 = vmatprep.subr.mxu0 0.0
    %3445 = vmatpush1.xpose.msra.mxu0 0.0
    %3446 = vmatprep.subr.mxu0 0.0
    %3447 = vmatpush1.xpose.msra.mxu0 0.0
    %3448 = vmatprep.subr.mxu0 0.0
    %3449 = vmatpush1.xpose.msra.mxu0 0.0
    %3450 = vmatprep.subr.mxu0 0.0
    %3451 = vmatpush1.xpose.msra.mxu0 0.0
    %3452 = vmatprep.subr.mxu0 0.0
    %3453 = vmatpush1.xpose.msra.mxu0 0.0
    %3454 = vmatprep.subr.mxu0 0.0
    %3455 = vmatpush1.xpose.msra.mxu0 0.0
    %3456 = vmatprep.subr.mxu0 0.0
    %3457 = vmatpush1.xpose.msra.mxu0 0.0
    %3458 = vmatprep.subr.mxu0 0.0
    %3459 = vmatpush1.xpose.msra.mxu0 0.0
    %3460 = vmatprep.subr.mxu0 0.0
    %3461 = vmatpush1.xpose.msra.mxu0 0.0
    %3462 = vmatprep.subr.mxu0 0.0
    %3463 = vmatpush1.xpose.msra.mxu0 0.0
    %3464 = vmatprep.subr.mxu0 0.0
    %3465 = vmatpush1.xpose.msra.mxu0 0.0
    %3466 = vmatprep.subr.mxu0 0.0
    %3467 = vmatpush1.xpose.msra.mxu0 0.0
    %3468 = vmatprep.subr.mxu0 0.0
    %3469 = vmatpush1.xpose.msra.mxu0 0.0
    %3470 = vmatprep.subr.mxu0 0.0
    %3471 = vmatpush1.xpose.msra.mxu0 0.0
    %3472 = vmatprep.subr.mxu0 0.0
    %3473 = vmatpush1.xpose.msra.mxu0 0.0
    %3474 = vmatprep.subr.mxu0 0.0
    %3475 = vmatpush1.xpose.msra.mxu0 0.0
    %3476 = vmatprep.subr.mxu0 0.0
    %3477 = vmatpush1.xpose.msra.mxu0 0.0
    %3478 = vmatprep.subr.mxu0 0.0
    %3479 = vmatpush1.xpose.msra.mxu0 0.0
    %3480 = vmatprep.subr.mxu0 0.0
    %3481 = vmatpush1.xpose.msra.mxu0 0.0
    %3482 = vmatprep.mubr.f32.mxu0 0.0
    %3483 = vmatmul.mubr.f32.gmra.mrb[0].mxu0 %v3414
    %v3484 = vpop.f32.mrb[0].mxu0
    %v3485 = vadd.f32 0.0, %v3484
    %v3486 = vpop.f32.mrb[0].mxu0
    %3487 = vdwg.mxu0
    %v3488 = vmul.f32 %v3407, 0.35355338
    %v3489 = vmul.f32 %v3485, 0.35355338
    %v3490 = vsel %vm203, %v3488, -inf
    %3491 = vmax.xlane.f32.xlu0 %v3490
    %v3492 = vpop.xlane.xlu0 %3491
    %v3493 = vsel %vm203, %v3489, -inf
    %3494 = vmax.xlane.f32.xlu0 %v3493
    %v3495 = vpop.xlane.xlu0 %3494
    %v3496 = vsub.f32 %v3488, %v3492
    %v3497 = vsub.f32 %v3489, %v3495
    %v3498 = vmul.f32 %v3496, 1.442695
    %v3499 = vpow.pop %v3498
    %v3500 = vmul.f32 %v3497, 1.442695
    %v3501 = vpow.pop %v3500
    %v3502 = vsel %vm203, %v3499, 0.0
    %3503 = vadd.xlane.f32.xlu0 %v3502
    %v3504 = vpop.xlane.xlu0 %3503
    %v3505 = vsel %vm203, %v3501, 0.0
    %3506 = vadd.xlane.f32.xlu0 %v3505
    %v3507 = vpop.xlane.xlu0 %3506
    %v3508 = vrcp.pop %v3504
    %v3509 = vrcp.pop %v3507
    %v3510 = vmul.f32 %v3499, %v3508
    %v3511 = vmul.f32 %v3501, %v3509
    %3512 = vrot.lane.b32.xlu0 %v2082, 72
    %v3513 = vpop.permute.xlu0 %3512
    %v3516 = vsel %vm203, %v3510, 0
    %3518 = vmatprep.subr.mxu0 0.0
    %3519 = vmatpush1.msra.mxu0 %v3513
    %3520 = vmatprep.subr.mxu0 0.0
    %3521 = vmatpush1.msra.mxu0 0.0
    %3522 = vmatprep.subr.mxu0 0.0
    %3523 = vmatpush1.msra.mxu0 0.0
    %3524 = vmatprep.subr.mxu0 0.0
    %3525 = vmatpush1.msra.mxu0 0.0
    %3526 = vmatprep.subr.mxu0 0.0
    %3527 = vmatpush1.msra.mxu0 0.0
    %3528 = vmatprep.subr.mxu0 0.0
    %3529 = vmatpush1.msra.mxu0 0.0
    %3530 = vmatprep.subr.mxu0 0.0
    %3531 = vmatpush1.msra.mxu0 0.0
    %3532 = vmatprep.subr.mxu0 0.0
    %3533 = vmatpush1.msra.mxu0 0.0
    %3534 = vmatprep.subr.mxu0 0.0
    %3535 = vmatpush1.msra.mxu0 0.0
    %3536 = vmatprep.subr.mxu0 0.0
    %3537 = vmatpush1.msra.mxu0 0.0
    %3538 = vmatprep.subr.mxu0 0.0
    %3539 = vmatpush1.msra.mxu0 0.0
    %3540 = vmatprep.subr.mxu0 0.0
    %3541 = vmatpush1.msra.mxu0 0.0
    %3542 = vmatprep.subr.mxu0 0.0
    %3543 = vmatpush1.msra.mxu0 0.0
    %3544 = vmatprep.subr.mxu0 0.0
    %3545 = vmatpush1.msra.mxu0 0.0
    %3546 = vmatprep.subr.mxu0 0.0
    %3547 = vmatpush1.msra.mxu0 0.0
    %3548 = vmatprep.subr.mxu0 0.0
    %3549 = vmatpush1.msra.mxu0 0.0
    %3550 = vmatprep.subr.mxu0 0.0
    %3551 = vmatpush1.msra.mxu0 0.0
    %3552 = vmatprep.subr.mxu0 0.0
    %3553 = vmatpush1.msra.mxu0 0.0
    %3554 = vmatprep.subr.mxu0 0.0
    %3555 = vmatpush1.msra.mxu0 0.0
    %3556 = vmatprep.subr.mxu0 0.0
    %3557 = vmatpush1.msra.mxu0 0.0
    %3558 = vmatprep.subr.mxu0 0.0
    %3559 = vmatpush1.msra.mxu0 0.0
    %3560 = vmatprep.subr.mxu0 0.0
    %3561 = vmatpush1.msra.mxu0 0.0
    %3562 = vmatprep.subr.mxu0 0.0
    %3563 = vmatpush1.msra.mxu0 0.0
    %3564 = vmatprep.subr.mxu0 0.0
    %3565 = vmatpush1.msra.mxu0 0.0
    %3566 = vmatprep.subr.mxu0 0.0
    %3567 = vmatpush1.msra.mxu0 0.0
    %3568 = vmatprep.subr.mxu0 0.0
    %3569 = vmatpush1.msra.mxu0 0.0
    %3570 = vmatprep.subr.mxu0 0.0
    %3571 = vmatpush1.msra.mxu0 0.0
    %3572 = vmatprep.subr.mxu0 0.0
    %3573 = vmatpush1.msra.mxu0 0.0
    %3574 = vmatprep.subr.mxu0 0.0
    %3575 = vmatpush1.msra.mxu0 0.0
    %3576 = vmatprep.subr.mxu0 0.0
    %3577 = vmatpush1.msra.mxu0 0.0
    %3578 = vmatprep.subr.mxu0 0.0
    %3579 = vmatpush1.msra.mxu0 0.0
    %3580 = vmatprep.subr.mxu0 0.0
    %3581 = vmatpush1.msra.mxu0 0.0
    %3582 = vmatprep.mubr.f32.mxu0 0.0
    %3583 = vmatmul.mubr.f32.gmra.mrb[0].mxu0 %v3516
    %v3584 = vpop.f32.mrb[0].mxu0
    %v3585 = vadd.f32 0.0, %v3584
    %v3586 = vpop.f32.mrb[0].mxu0
    %3587 = vdwg.mxu0
    %3588 = vrot.lane.b32.xlu0 %v2087, 72
    %v3589 = vpop.permute.xlu0 %3588
    %v3592 = vsel %vm203, %v3511, 0
    %3594 = vmatprep.subr.mxu0 0.0
    %3595 = vmatpush1.msra.mxu0 %v3589
    %3596 = vmatprep.subr.mxu0 0.0
    %3597 = vmatpush1.msra.mxu0 0.0
    %3598 = vmatprep.subr.mxu0 0.0
    %3599 = vmatpush1.msra.mxu0 0.0
    %3600 = vmatprep.subr.mxu0 0.0
    %3601 = vmatpush1.msra.mxu0 0.0
    %3602 = vmatprep.subr.mxu0 0.0
    %3603 = vmatpush1.msra.mxu0 0.0
    %3604 = vmatprep.subr.mxu0 0.0
    %3605 = vmatpush1.msra.mxu0 0.0
    %3606 = vmatprep.subr.mxu0 0.0
    %3607 = vmatpush1.msra.mxu0 0.0
    %3608 = vmatprep.subr.mxu0 0.0
    %3609 = vmatpush1.msra.mxu0 0.0
    %3610 = vmatprep.subr.mxu0 0.0
    %3611 = vmatpush1.msra.mxu0 0.0
    %3612 = vmatprep.subr.mxu0 0.0
    %3613 = vmatpush1.msra.mxu0 0.0
    %3614 = vmatprep.subr.mxu0 0.0
    %3615 = vmatpush1.msra.mxu0 0.0
    %3616 = vmatprep.subr.mxu0 0.0
    %3617 = vmatpush1.msra.mxu0 0.0
    %3618 = vmatprep.subr.mxu0 0.0
    %3619 = vmatpush1.msra.mxu0 0.0
    %3620 = vmatprep.subr.mxu0 0.0
    %3621 = vmatpush1.msra.mxu0 0.0
    %3622 = vmatprep.subr.mxu0 0.0
    %3623 = vmatpush1.msra.mxu0 0.0
    %3624 = vmatprep.subr.mxu0 0.0
    %3625 = vmatpush1.msra.mxu0 0.0
    %3626 = vmatprep.subr.mxu0 0.0
    %3627 = vmatpush1.msra.mxu0 0.0
    %3628 = vmatprep.subr.mxu0 0.0
    %3629 = vmatpush1.msra.mxu0 0.0
    %3630 = vmatprep.subr.mxu0 0.0
    %3631 = vmatpush1.msra.mxu0 0.0
    %3632 = vmatprep.subr.mxu0 0.0
    %3633 = vmatpush1.msra.mxu0 0.0
    %3634 = vmatprep.subr.mxu0 0.0
    %3635 = vmatpush1.msra.mxu0 0.0
    %3636 = vmatprep.subr.mxu0 0.0
    %3637 = vmatpush1.msra.mxu0 0.0
    %3638 = vmatprep.subr.mxu0 0.0
    %3639 = vmatpush1.msra.mxu0 0.0
    %3640 = vmatprep.subr.mxu0 0.0
    %3641 = vmatpush1.msra.mxu0 0.0
    %3642 = vmatprep.subr.mxu0 0.0
    %3643 = vmatpush1.msra.mxu0 0.0
    %3644 = vmatprep.subr.mxu0 0.0
    %3645 = vmatpush1.msra.mxu0 0.0
    %3646 = vmatprep.subr.mxu0 0.0
    %3647 = vmatpush1.msra.mxu0 0.0
    %3648 = vmatprep.subr.mxu0 0.0
    %3649 = vmatpush1.msra.mxu0 0.0
    %3650 = vmatprep.subr.mxu0 0.0
    %3651 = vmatpush1.msra.mxu0 0.0
    %3652 = vmatprep.subr.mxu0 0.0
    %3653 = vmatpush1.msra.mxu0 0.0
    %3654 = vmatprep.subr.mxu0 0.0
    %3655 = vmatpush1.msra.mxu0 0.0
    %3656 = vmatprep.subr.mxu0 0.0
    %3657 = vmatpush1.msra.mxu0 0.0
    %3658 = vmatprep.mubr.f32.mxu0 0.0
    %3659 = vmatmul.mubr.f32.gmra.mrb[0].mxu0 %v3592
    %v3660 = vpop.f32.mrb[0].mxu0
    %v3661 = vadd.f32 0.0, %v3660
    %v3662 = vpop.f32.mrb[0].mxu0
    %3663 = vdwg.mxu0
    %v3665 = vsel %vm203, %v3585, 0
    %v3668 = vsel %vm203, %v3661, 0
    %3670 = vmatprep.subr.mxu0 0.0
    %3671 = vmatpush1.msra.mxu0 %v2093
    %3672 = vmatprep.subr.mxu0 0.0
    %3673 = vmatpush1.msra.mxu0 0.0
    %3674 = vmatprep.subr.mxu0 0.0
    %3675 = vmatpush1.msra.mxu0 0.0
    %3676 = vmatprep.subr.mxu0 0.0
    %3677 = vmatpush1.msra.mxu0 0.0
    %3678 = vmatprep.subr.mxu0 0.0
    %3679 = vmatpush1.msra.mxu0 0.0
    %3680 = vmatprep.subr.mxu0 0.0
    %3681 = vmatpush1.msra.mxu0 0.0
    %3682 = vmatprep.subr.mxu0 0.0
    %3683 = vmatpush1.msra.mxu0 0.0
    %3684 = vmatprep.subr.mxu0 0.0
    %3685 = vmatpush1.msra.mxu0 0.0
    %3686 = vmatprep.subr.mxu0 0.0
    %3687 = vmatpush1.msra.mxu0 0.0
    %3688 = vmatprep.subr.mxu0 0.0
    %3689 = vmatpush1.msra.mxu0 0.0
    %3690 = vmatprep.subr.mxu0 0.0
    %3691 = vmatpush1.msra.mxu0 0.0
    %3692 = vmatprep.subr.mxu0 0.0
    %3693 = vmatpush1.msra.mxu0 0.0
    %3694 = vmatprep.subr.mxu0 0.0
    %3695 = vmatpush1.msra.mxu0 0.0
    %3696 = vmatprep.subr.mxu0 0.0
    %3697 = vmatpush1.msra.mxu0 0.0
    %3698 = vmatprep.subr.mxu0 0.0
    %3699 = vmatpush1.msra.mxu0 0.0
    %3700 = vmatprep.subr.mxu0 0.0
    %3701 = vmatpush1.msra.mxu0 0.0
    %3702 = vmatprep.subr.mxu0 0.0
    %3703 = vmatpush1.msra.mxu0 0.0
    %3704 = vmatprep.subr.mxu0 0.0
    %3705 = vmatpush1.msra.mxu0 0.0
    %3706 = vmatprep.subr.mxu0 0.0
    %3707 = vmatpush1.msra.mxu0 0.0
    %3708 = vmatprep.subr.mxu0 0.0
    %3709 = vmatpush1.msra.mxu0 0.0
    %3710 = vmatprep.subr.mxu0 0.0
    %3711 = vmatpush1.msra.mxu0 0.0
    %3712 = vmatprep.subr.mxu0 0.0
    %3713 = vmatpush1.msra.mxu0 0.0
    %3714 = vmatprep.subr.mxu0 0.0
    %3715 = vmatpush1.msra.mxu0 0.0
    %3716 = vmatprep.subr.mxu0 0.0
    %3717 = vmatpush1.msra.mxu0 0.0
    %3718 = vmatprep.subr.mxu0 0.0
    %3719 = vmatpush1.msra.mxu0 0.0
    %3720 = vmatprep.subr.mxu0 0.0
    %3721 = vmatpush1.msra.mxu0 0.0
    %3722 = vmatprep.subr.mxu0 0.0
    %3723 = vmatpush1.msra.mxu0 0.0
    %3724 = vmatprep.subr.mxu0 0.0
    %3725 = vmatpush1.msra.mxu0 0.0
    %3726 = vmatprep.subr.mxu0 0.0
    %3727 = vmatpush1.msra.mxu0 0.0
    %3728 = vmatprep.subr.mxu0 0.0
    %3729 = vmatpush1.msra.mxu0 0.0
    %3730 = vmatprep.subr.mxu0 0.0
    %3731 = vmatpush1.msra.mxu0 0.0
    %3732 = vmatprep.subr.mxu0 0.0
    %3733 = vmatpush1.msra.mxu0 0.0
    %3734 = vmatprep.mubr.f32.mxu0 0.0
    %3735 = vmatmul.mubr.f32.gmra.mrb[0].mxu0 %v3665
    %v3736 = vpop.f32.mrb[0].mxu0
    %v3737 = vadd.f32 0.0, %v3736
    %v3738 = vpop.f32.mrb[0].mxu0
    %3739 = vmatprep.mubr.f32.mxu0 0.0
    %3740 = vmatmul.mubr.f32.gmra.mrb[0].mxu0 %v3668
    %v3741 = vpop.f32.mrb[0].mxu0
    %v3742 = vadd.f32 0.0, %v3741
    %v3743 = vpop.f32.mrb[0].mxu0
    %3744 = vdwg.mxu0
    %v3745 = vadd.f32 %v3330, %v3737
    %v3746 = vadd.f32 %v3331, %v3742
    %v3748 = vlaneseq
    %v3749 = vshrl.u32 %v3748, 7
    %v3750 = vsub.s32 0, %v3749
    %v3751 = vrot.slane %v2094, %v3750
    %v3753 = vadd.f32 %v3745, %v3751
    %v3754 = vadd.f32 %v3746, %v3751
    %v3755 = vadd.f32 %v1904, %v3753
    %v3756 = vadd.f32 %v1905, %v3754
    %v3757 = vld [vmem:[%s12 + $0x2] sm:$0x1]
    %v3758 = vld [vmem:[%s12 + $0x3] sm:$0x1]
    %v3759 = vsel %vm113, %v3755, 0.0
    %3760 = vadd.xlane.f32.xlu0 %v3759
    %v3761 = vpop.xlane.xlu0 %3760
    %v3762 = vsel %vm113, %v3756, 0.0
    %3763 = vadd.xlane.f32.xlu0 %v3762
    %v3764 = vpop.xlane.xlu0 %3763
    %v3765 = vmul.f32 %v3761, %v1873
    %v3766 = vmul.f32 %v3764, %v1873
    %v3767 = vsub.f32 %v3755, %v3765
    %v3768 = vsub.f32 %v3756, %v3766
    %v3769 = vmul.f32 %v3767, %v3767
    %v3770 = vmul.f32 %v3768, %v3768
    %v3771 = vsel %vm113, %v3769, 0.0
    %3772 = vadd.xlane.f32.xlu0 %v3771
    %v3773 = vpop.xlane.xlu0 %3772
    %v3774 = vsel %vm113, %v3770, 0.0
    %3775 = vadd.xlane.f32.xlu0 %v3774
    %v3776 = vpop.xlane.xlu0 %3775
    %v3777 = vmul.f32 %v3773, %v1873
    %v3778 = vmul.f32 %v3776, %v1873
    %v3779 = vadd.f32 %v3777, 1e-12
    %v3780 = vadd.f32 %v3778, 1e-12
    %v3781 = vrsqrt.pop %v3779
    %v3782 = vrsqrt.pop %v3780
    %v3783 = vmul.f32 %v3767, %v3781
    %v3784 = vmul.f32 %v3768, %v3782
    %v3785 = vlaneseq
    %v3786 = vshrl.u32 %v3785, 7
    %v3787 = vsub.s32 0, %v3786
    %v3788 = vrot.slane %v3757, %v3787
    %v3789 = vmul.f32 %v3783, %v3788
    %v3790 = vmul.f32 %v3784, %v3788
    %v3791 = vlaneseq
    %v3792 = vshrl.u32 %v3791, 7
    %v3793 = vsub.s32 0, %v3792
    %v3794 = vrot.slane %v3758, %v3793
    %v3795 = vadd.f32 %v3789, %v3794
    %v3796 = vadd.f32 %v3790, %v3794
    %v3797 = vld [vmem:[#allocation7] sm:$0xff]
    %v3798 = vld [vmem:[#allocation7 + $0x8] sm:$0xff]
    %v3799 = vld [vmem:[#allocation7 + $0x10] sm:$0xff]
    %v3800 = vld [vmem:[#allocation7 + $0x18] sm:$0xff]
    %v3801 = vld [vmem:[%s14] sm:$0x1]
    %v3803 = vlaneseq
    %v3804 = vshrl.u32 %v3803, 7
    %v3805 = vsub.s32 0, %v3804
    %v3806 = vrot.slane %v3801, %v3805
    %v3809 = vsel %vm113, %v3795, 0
    %v3812 = vsel %vm113, %v3796, 0
    %3814 = vmatprep.subr.mxu0 0.0
    %3815 = vmatpush1.msra.mxu0 %v3797
    %3816 = vmatprep.subr.mxu0 0.0
    %3817 = vmatpush1.msra.mxu0 %v3798
    %3818 = vmatprep.subr.mxu0 0.0
    %3819 = vmatpush1.msra.mxu0 %v3799
    %3820 = vmatprep.subr.mxu0 0.0
    %3821 = vmatpush1.msra.mxu0 %v3800
    %3822 = vmatprep.subr.mxu0 0.0
    %3823 = vmatpush1.msra.mxu0 0.0
    %3824 = vmatprep.subr.mxu0 0.0
    %3825 = vmatpush1.msra.mxu0 0.0
    %3826 = vmatprep.subr.mxu0 0.0
    %3827 = vmatpush1.msra.mxu0 0.0
    %3828 = vmatprep.subr.mxu0 0.0
    %3829 = vmatpush1.msra.mxu0 0.0
    %3830 = vmatprep.subr.mxu0 0.0
    %3831 = vmatpush1.msra.mxu0 0.0
    %3832 = vmatprep.subr.mxu0 0.0
    %3833 = vmatpush1.msra.mxu0 0.0
    %3834 = vmatprep.subr.mxu0 0.0
    %3835 = vmatpush1.msra.mxu0 0.0
    %3836 = vmatprep.subr.mxu0 0.0
    %3837 = vmatpush1.msra.mxu0 0.0
    %3838 = vmatprep.subr.mxu0 0.0
    %3839 = vmatpush1.msra.mxu0 0.0
    %3840 = vmatprep.subr.mxu0 0.0
    %3841 = vmatpush1.msra.mxu0 0.0
    %3842 = vmatprep.subr.mxu0 0.0
    %3843 = vmatpush1.msra.mxu0 0.0
    %3844 = vmatprep.subr.mxu0 0.0
    %3845 = vmatpush1.msra.mxu0 0.0
    %3846 = vmatprep.subr.mxu0 0.0
    %3847 = vmatpush1.msra.mxu0 0.0
    %3848 = vmatprep.subr.mxu0 0.0
    %3849 = vmatpush1.msra.mxu0 0.0
    %3850 = vmatprep.subr.mxu0 0.0
    %3851 = vmatpush1.msra.mxu0 0.0
    %3852 = vmatprep.subr.mxu0 0.0
    %3853 = vmatpush1.msra.mxu0 0.0
    %3854 = vmatprep.subr.mxu0 0.0
    %3855 = vmatpush1.msra.mxu0 0.0
    %3856 = vmatprep.subr.mxu0 0.0
    %3857 = vmatpush1.msra.mxu0 0.0
    %3858 = vmatprep.subr.mxu0 0.0
    %3859 = vmatpush1.msra.mxu0 0.0
    %3860 = vmatprep.subr.mxu0 0.0
    %3861 = vmatpush1.msra.mxu0 0.0
    %3862 = vmatprep.subr.mxu0 0.0
    %3863 = vmatpush1.msra.mxu0 0.0
    %3864 = vmatprep.subr.mxu0 0.0
    %3865 = vmatpush1.msra.mxu0 0.0
    %3866 = vmatprep.subr.mxu0 0.0
    %3867 = vmatpush1.msra.mxu0 0.0
    %3868 = vmatprep.subr.mxu0 0.0
    %3869 = vmatpush1.msra.mxu0 0.0
    %3870 = vmatprep.subr.mxu0 0.0
    %3871 = vmatpush1.msra.mxu0 0.0
    %3872 = vmatprep.subr.mxu0 0.0
    %3873 = vmatpush1.msra.mxu0 0.0
    %3874 = vmatprep.subr.mxu0 0.0
    %3875 = vmatpush1.msra.mxu0 0.0
    %3876 = vmatprep.subr.mxu0 0.0
    %3877 = vmatpush1.msra.mxu0 0.0
    %3878 = vmatprep.mubr.f32.mxu0 0.0
    %3879 = vmatmul.mubr.f32.gmra.mrb[0].mxu0 %v3809
    %v3880 = vpop.f32.mrb[0].mxu0
    %v3881 = vadd.f32 %v3806, %v3880
    %v3882 = vpop.f32.mrb[0].mxu0
    %3883 = vmatprep.mubr.f32.mxu0 0.0
    %3884 = vmatmul.mubr.f32.gmra.mrb[0].mxu0 %v3812
    %v3885 = vpop.f32.mrb[0].mxu0
    %v3886 = vadd.f32 %v3806, %v3885
    %v3887 = vpop.f32.mrb[0].mxu0
    %3888 = vdwg.mxu0
    %v3889 = vmul.f32 %v3881, 0.5
    %v3890 = vmul.f32 %v3886, 0.5
    %v3891 = vmul.f32 %v3881, 0.70710677
    %v3892 = vmul.f32 %v3886, 0.70710677
    %v3893 = verf.f32.pop %v3891
    %v3894 = verf.f32.pop %v3892
    %v3895 = vadd.f32 %v3893, 1.0
    %v3896 = vadd.f32 %v3894, 1.0
    %v3897 = vmul.f32 %v3889, %v3895
    %v3898 = vmul.f32 %v3890, %v3896
    %v3899 = vld [vmem:[%s15] sm:$0xff]
    %v3900 = vld [vmem:[%s15 + $0x8] sm:$0xff]
    %v3901 = vld [vmem:[%s15 + $0x10] sm:$0xff]
    %v3902 = vld [vmem:[%s15 + $0x18] sm:$0xff]
    %v3903 = vld [vmem:[%s15 + $0x20] sm:$0xff]
    %v3904 = vld [vmem:[%s15 + $0x28] sm:$0xff]
    %v3905 = vld [vmem:[%s15 + $0x30] sm:$0xff]
    %v3906 = vld [vmem:[%s15 + $0x38] sm:$0xff]
    %v3907 = vld [vmem:[%s15 + $0x40] sm:$0xff]
    %v3908 = vld [vmem:[%s15 + $0x48] sm:$0xff]
    %v3909 = vld [vmem:[%s15 + $0x50] sm:$0xff]
    %v3910 = vld [vmem:[%s15 + $0x58] sm:$0xff]
    %v3911 = vld [vmem:[%s15 + $0x60] sm:$0xff]
    %v3912 = vld [vmem:[%s15 + $0x68] sm:$0xff]
    %v3913 = vld [vmem:[%s15 + $0x70] sm:$0xff]
    %v3914 = vld [vmem:[%s15 + $0x78] sm:$0xff]
    %v3915 = vld [vmem:[%s16] sm:$0x1]
    %v3917 = vlaneseq
    %v3918 = vshrl.u32 %v3917, 7
    %v3919 = vsub.s32 0, %v3918
    %v3920 = vrot.slane %v3915, %v3919
    %3922 = vmatprep.subr.mxu0 0.0
    %3923 = vmatpush1.msra.mxu0 %v3899
    %3924 = vmatprep.subr.mxu0 0.0
    %3925 = vmatpush1.msra.mxu0 %v3900
    %3926 = vmatprep.subr.mxu0 0.0
    %3927 = vmatpush1.msra.mxu0 %v3901
    %3928 = vmatprep.subr.mxu0 0.0
    %3929 = vmatpush1.msra.mxu0 %v3902
    %3930 = vmatprep.subr.mxu0 0.0
    %3931 = vmatpush1.msra.mxu0 %v3903
    %3932 = vmatprep.subr.mxu0 0.0
    %3933 = vmatpush1.msra.mxu0 %v3904
    %3934 = vmatprep.subr.mxu0 0.0
    %3935 = vmatpush1.msra.mxu0 %v3905
    %3936 = vmatprep.subr.mxu0 0.0
    %3937 = vmatpush1.msra.mxu0 %v3906
    %3938 = vmatprep.subr.mxu0 0.0
    %3939 = vmatpush1.msra.mxu0 %v3907
    %3940 = vmatprep.subr.mxu0 0.0
    %3941 = vmatpush1.msra.mxu0 %v3908
    %3942 = vmatprep.subr.mxu0 0.0
    %3943 = vmatpush1.msra.mxu0 %v3909
    %3944 = vmatprep.subr.mxu0 0.0
    %3945 = vmatpush1.msra.mxu0 %v3910
    %3946 = vmatprep.subr.mxu0 0.0
    %3947 = vmatpush1.msra.mxu0 %v3911
    %3948 = vmatprep.subr.mxu0 0.0
    %3949 = vmatpush1.msra.mxu0 %v3912
    %3950 = vmatprep.subr.mxu0 0.0
    %3951 = vmatpush1.msra.mxu0 %v3913
    %3952 = vmatprep.subr.mxu0 0.0
    %3953 = vmatpush1.msra.mxu0 %v3914
    %3954 = vmatprep.subr.mxu0 0.0
    %3955 = vmatpush1.msra.mxu0 0.0
    %3956 = vmatprep.subr.mxu0 0.0
    %3957 = vmatpush1.msra.mxu0 0.0
    %3958 = vmatprep.subr.mxu0 0.0
    %3959 = vmatpush1.msra.mxu0 0.0
    %3960 = vmatprep.subr.mxu0 0.0
    %3961 = vmatpush1.msra.mxu0 0.0
    %3962 = vmatprep.subr.mxu0 0.0
    %3963 = vmatpush1.msra.mxu0 0.0
    %3964 = vmatprep.subr.mxu0 0.0
    %3965 = vmatpush1.msra.mxu0 0.0
    %3966 = vmatprep.subr.mxu0 0.0
    %3967 = vmatpush1.msra.mxu0 0.0
    %3968 = vmatprep.subr.mxu0 0.0
    %3969 = vmatpush1.msra.mxu0 0.0
    %3970 = vmatprep.subr.mxu0 0.0
    %3971 = vmatpush1.msra.mxu0 0.0
    %3972 = vmatprep.subr.mxu0 0.0
    %3973 = vmatpush1.msra.mxu0 0.0
    %3974 = vmatprep.subr.mxu0 0.0
    %3975 = vmatpush1.msra.mxu0 0.0
    %3976 = vmatprep.subr.mxu0 0.0
    %3977 = vmatpush1.msra.mxu0 0.0
    %3978 = vmatprep.subr.mxu0 0.0
    %3979 = vmatpush1.msra.mxu0 0.0
    %3980 = vmatprep.subr.mxu0 0.0
    %3981 = vmatpush1.msra.mxu0 0.0
    %3982 = vmatprep.subr.mxu0 0.0
    %3983 = vmatpush1.msra.mxu0 0.0
    %3984 = vmatprep.subr.mxu0 0.0
    %3985 = vmatpush1.msra.mxu0 0.0
    %3986 = vmatprep.mubr.f32.mxu0 0.0
    %3987 = vmatmul.mubr.f32.gmra.mrb[0].mxu0 %v3897
    %v3988 = vpop.f32.mrb[0].mxu0
    %v3989 = vadd.f32 %v3920, %v3988
    %v3990 = vpop.f32.mrb[0].mxu0
    %3991 = vmatprep.mubr.f32.mxu0 0.0
    %3992 = vmatmul.mubr.f32.gmra.mrb[0].mxu0 %v3898
    %v3993 = vpop.f32.mrb[0].mxu0
    %v3994 = vadd.f32 %v3920, %v3993
    %v3995 = vpop.f32.mrb[0].mxu0
    %3996 = vdwg.mxu0
    %v3997 = vadd.f32 %v3795, %v3989
    %v3998 = vadd.f32 %v3796, %v3994
    %v3999 = vld [vmem:[%s12 + $0x4] sm:$0x1]
    %v4000 = vld [vmem:[%s12 + $0x5] sm:$0x1]
    %v4001 = vsel %vm113, %v3997, 0.0
    %4002 = vadd.xlane.f32.xlu0 %v4001
    %v4003 = vpop.xlane.xlu0 %4002
    %v4004 = vsel %vm113, %v3998, 0.0
    %4005 = vadd.xlane.f32.xlu0 %v4004
    %v4006 = vpop.xlane.xlu0 %4005
    %v4007 = vmul.f32 %v4003, %v1873
    %v4008 = vmul.f32 %v4006, %v1873
    %v4009 = vsub.f32 %v3997, %v4007
    %v4010 = vsub.f32 %v3998, %v4008
    %v4011 = vmul.f32 %v4009, %v4009
    %v4012 = vmul.f32 %v4010, %v4010
    %v4013 = vsel %vm113, %v4011, 0.0
    %4014 = vadd.xlane.f32.xlu0 %v4013
    %v4015 = vpop.xlane.xlu0 %4014
    %v4016 = vsel %vm113, %v4012, 0.0
    %4017 = vadd.xlane.f32.xlu0 %v4016
    %v4018 = vpop.xlane.xlu0 %4017
    %v4019 = vmul.f32 %v4015, %v1873
    %v4020 = vmul.f32 %v4018, %v1873
    %v4021 = vadd.f32 %v4019, 1e-12
    %v4022 = vadd.f32 %v4020, 1e-12
    %v4023 = vrsqrt.pop %v4021
    %v4024 = vrsqrt.pop %v4022
    %v4025 = vmul.f32 %v4009, %v4023
    %v4026 = vmul.f32 %v4010, %v4024
    %v4027 = vlaneseq
    %v4028 = vshrl.u32 %v4027, 7
    %v4029 = vsub.s32 0, %v4028
    %v4030 = vrot.slane %v3999, %v4029
    %v4031 = vmul.f32 %v4025, %v4030
    %v4032 = vmul.f32 %v4026, %v4030
    %v4033 = vlaneseq
    %v4034 = vshrl.u32 %v4033, 7
    %v4035 = vsub.s32 0, %v4034
    %v4036 = vrot.slane %v4000, %v4035
    %v4037 = vadd.f32 %v4031, %v4036
    %v4038 = vadd.f32 %v4032, %v4036
    %4039 = vst.msk [vmem:[#allocation8] sm:$0xff] %vm113, %v4037
    %4040 = vst.msk [vmem:[#allocation8 + $0x8] sm:$0xff] %vm113, %v4038
    // Predicated region
    $region82: #{tpu_custom_call.1} parent=1 // pred_check
      _
    $region83: #{tpu_custom_call.1} parent=1 // pred_check_branch
      %4042 = sbr.rel (0) target = $region85
    $region84: #{tpu_custom_call.1} parent=1 // pred_region
      %s4044 = ssub.s32 256, 256
      %4045 = vsyncadd [#allocation4], %s4044
      %s4046 = sshll.u32 [#allocation8], 4
      %s4047 = int_to_ptr.vmem [resolvable:$true] %s4046
      %4052 = dma.vmem_to_hbm [thread:$0]  %s4047, 256, %s17, [#allocation4], 128, 128, 8
    $region85: #{tpu_custom_call.1} parent=1 // pred_fallthru
      _
    // Predicated region
    $region86: #{tpu_custom_call.1} parent=1 // pred_check
      _
    $region87: #{tpu_custom_call.1} parent=1 // pred_check_branch
      %4054 = sbr.rel (0) target = $region89
    $region88: #{tpu_custom_call.1} parent=1 // pred_region
      %4055 = dma.done [#allocation4], 256
    $region89: #{tpu_custom_call.1} parent=1 // pred_fallthru
      _
    %4056 = vsyncpa [#allocation3], 1
    %4057 = vsyncpa [#allocation6], 1
    %4058 = vsyncpa [#allocation4], 1

</llo_original>
